<compile_context>
chip_gen: v7x
topology: tpu7x:2x2x1
jax: 0.10.0
libtpu: 0.0.40
codegen_flags: <defaults>
</compile_context>

<pallas_src>
import functools

import jax
import jax.numpy as jnp
from jax.experimental import pallas as pl
from jax.experimental.pallas import tpu as pltpu

LATENT = 128
H1 = 256
H2 = 512
OUT = 784
OUT_PAD = 896  # 7 * 128 -> lane-dense output tile


def _leaky_relu(x, slope=0.2):
    return jnp.where(x > 0, x, slope * x)


def generator_kernel(x_ref, w1_ref, b1_ref, w2_ref, b2_ref, w3_ref, b3_ref,
                     o_ref):
    # bf16 operands into the MXU, f32 accumulation; epilogues in f32 on VPU/EUP.
    x = x_ref[...]                                                 # (TM, 128) bf16

    h1 = jnp.dot(x, w1_ref[...], preferred_element_type=jnp.float32)
    h1 = _leaky_relu(h1 + b1_ref[...])                             # (TM, 256) f32

    h2 = jnp.dot(h1.astype(jnp.bfloat16), w2_ref[...],
                 preferred_element_type=jnp.float32)
    h2 = _leaky_relu(h2 + b2_ref[...])                             # (TM, 512) f32

    h3 = jnp.dot(h2.astype(jnp.bfloat16), w3_ref[...],
                 preferred_element_type=jnp.float32)
    o_ref[...] = jnp.tanh(h3 + b3_ref[...]).astype(o_ref.dtype)    # (TM, 896)


@functools.partial(jax.jit, static_argnames=("block_m",))
def generator_forward(x, params, *, block_m=256):
    """x: (B, 128) float32 -> (B, 784) float32."""
    w1, b1, w2, b2, w3, b3 = params
    B = x.shape[0]

    # bf16 storage for MXU inputs; biases stay f32 for the f32 epilogue.
    x_bf = x.astype(jnp.bfloat16)
    w1_bf = w1.astype(jnp.bfloat16)
    w2_bf = w2.astype(jnp.bfloat16)

    # Pad fc3 columns 784 -> 896 with zeros (lane-dense output, unmasked vst).
    w3_p = jnp.pad(w3, ((0, 0), (0, OUT_PAD - OUT))).astype(jnp.bfloat16)
    b3_p = jnp.pad(b3, ((0, 0), (0, OUT_PAD - OUT)))

    # Pad batch up to a multiple of the batch tile.
    tm = block_m
    n_tiles = pl.cdiv(B, tm)
    Bp = n_tiles * tm
    if Bp != B:
        x_bf = jnp.pad(x_bf, ((0, Bp - B), (0, 0)))

    resident = lambda i: (0, 0)  # weights/biases: same block for every tile

    out = pl.pallas_call(
        generator_kernel,
        out_shape=jax.ShapeDtypeStruct((Bp, OUT_PAD), jnp.float32),
        grid=(n_tiles,),
        in_specs=[
            pl.BlockSpec((tm, LATENT), lambda i: (i, 0)),   # x tile
            pl.BlockSpec((LATENT, H1), resident),           # w1
            pl.BlockSpec((1, H1), resident),                # b1
            pl.BlockSpec((H1, H2), resident),               # w2
            pl.BlockSpec((1, H2), resident),                # b2
            pl.BlockSpec((H2, OUT_PAD), resident),          # w3 (padded)
            pl.BlockSpec((1, OUT_PAD), resident),           # b3 (padded)
        ],
        out_specs=pl.BlockSpec((tm, OUT_PAD), lambda i: (i, 0)),
        compiler_params=pltpu.CompilerParams(
            dimension_semantics=("parallel",)),
    )(x_bf, w1_bf, b1, w2_bf, b2, w3_p, b3_p)

    return out[:B, :OUT]


def init_params(key):
    """Deterministic synthetic params (shapes match the nn.Linear layers)."""
    k1, k2, k3, k4, k5, k6 = jax.random.split(key, 6)

    def uniform(k, shape, fan_in):
        bound = 1.0 / jnp.sqrt(fan_in)
        return jax.random.uniform(k, shape, jnp.float32, -bound, bound)

    # Weights stored (in, out) so y = x @ W + b; biases (1, out) for TPU layout.
    w1 = uniform(k1, (LATENT, H1), LATENT)
    b1 = uniform(k2, (1, H1), LATENT)
    w2 = uniform(k3, (H1, H2), H1)
    b2 = uniform(k4, (1, H2), H1)
    w3 = uniform(k5, (H2, OUT), H2)
    b3 = uniform(k6, (1, OUT), H2)
    return (w1, b1, w2, b2, w3, b3)


def reference_forward(x, params):
    """Pure-JAX f32 reference of the PyTorch forward."""
    hi = jax.lax.Precision.HIGHEST
    w1, b1, w2, b2, w3, b3 = params
    h = _leaky_relu(jnp.dot(x, w1, precision=hi) + b1)
    h = _leaky_relu(jnp.dot(h, w2, precision=hi) + b2)
    return jnp.tanh(jnp.dot(h, w3, precision=hi) + b3)


if __name__ == "__main__":
    key = jax.random.PRNGKey(0)
    kx, kp = jax.random.split(key)

    # Small demo batch; not a multiple of the 256-row tile to exercise the
    # batch-padding path and a 2-step grid.
    B = 300
    x = jax.random.normal(kx, (B, LATENT), dtype=jnp.float32)
    params = init_params(kp)

    out = generator_forward(x, params)
    out = jax.block_until_ready(out)

    ref = reference_forward(x, params)
    assert out.shape == (B, OUT), out.shape
    # bf16 inputs to the MXU (f32 accumulation) vs f32 reference -> loose tol.
    assert jnp.allclose(out, ref, atol=3e-2, rtol=3e-2), (
        "mismatch vs reference: max abs err = "
        f"{float(jnp.max(jnp.abs(out - ref)))}")

    print("KERNEL_OK")
</pallas_src>

<mosaic_0001>
module attributes {stable_mosaic.version = 11 : i64} {
  func.func @generator_kernel(%arg0: i32, %arg1: memref<256x128xbf16, #tpu.memory_space<vmem>>, %arg2: memref<128x256xbf16, #tpu.memory_space<vmem>>, %arg3: memref<1x256xf32, #tpu.memory_space<vmem>>, %arg4: memref<256x512xbf16, #tpu.memory_space<vmem>>, %arg5: memref<1x512xf32, #tpu.memory_space<vmem>>, %arg6: memref<512x896xbf16, #tpu.memory_space<vmem>>, %arg7: memref<1x896xf32, #tpu.memory_space<vmem>>, %arg8: memref<256x896xf32, #tpu.memory_space<vmem>>) attributes {dimension_semantics = [#tpu.dimension_semantics<parallel>], iteration_bounds = array<i64: 2>, scalar_prefetch = 0 : i64, scratch_operands = 0 : i64, tpu.core_type = #tpu.core_type<tc>, window_params = [{transform_indices = @transform_0, window_bounds = array<i64: 256, 128>}, {pipeline_mode = #tpu.pipeline_mode<synchronous>, transform_indices = @transform_1, window_bounds = array<i64: 128, 256>}, {pipeline_mode = #tpu.pipeline_mode<synchronous>, transform_indices = @transform_2, window_bounds = array<i64: 1, 256>}, {pipeline_mode = #tpu.pipeline_mode<synchronous>, transform_indices = @transform_3, window_bounds = array<i64: 256, 512>}, {pipeline_mode = #tpu.pipeline_mode<synchronous>, transform_indices = @transform_4, window_bounds = array<i64: 1, 512>}, {pipeline_mode = #tpu.pipeline_mode<synchronous>, transform_indices = @transform_5, window_bounds = array<i64: 512, 896>}, {pipeline_mode = #tpu.pipeline_mode<synchronous>, transform_indices = @transform_6, window_bounds = array<i64: 1, 896>}, {transform_indices = @transform_7, window_bounds = array<i64: 256, 896>}]} {
    %c0 = arith.constant 0 : index
    %c0_0 = arith.constant 0 : index
    %0 = vector.load %arg1[%c0, %c0_0] : memref<256x128xbf16, #tpu.memory_space<vmem>>, vector<256x128xbf16>
    %c0_1 = arith.constant 0 : index
    %c0_2 = arith.constant 0 : index
    %1 = vector.load %arg2[%c0_1, %c0_2] : memref<128x256xbf16, #tpu.memory_space<vmem>>, vector<128x256xbf16>
    %cst = arith.constant dense<0.000000e+00> : vector<256x256xf32>
    %2 = tpu.matmul %0, %1, %cst {dimension_numbers = #tpu.dot_dimension_numbers<[1], [0], [0], [1], [0, 0, 1, 1], [], []>} : vector<256x128xbf16>, vector<128x256xbf16>, vector<256x256xf32> -> vector<256x256xf32>
    %c0_3 = arith.constant 0 : index
    %c0_4 = arith.constant 0 : index
    %3 = vector.load %arg3[%c0_3, %c0_4] : memref<1x256xf32, #tpu.memory_space<vmem>>, vector<1x256xf32>
    %4 = vector.broadcast %3 : vector<1x256xf32> to vector<256x256xf32>
    %5 = arith.addf %2, %4 : vector<256x256xf32>
    %cst_5 = arith.constant 0.000000e+00 : f32
    %6 = vector.broadcast %cst_5 : f32 to vector<256x256xf32>
    %7 = arith.cmpf ogt, %5, %6 : vector<256x256xf32>
    %cst_6 = arith.constant 2.000000e-01 : f32
    %8 = vector.broadcast %cst_6 : f32 to vector<256x256xf32>
    %9 = arith.mulf %8, %5 : vector<256x256xf32>
    %10 = arith.select %7, %5, %9 : vector<256x256xi1>, vector<256x256xf32>
    %11 = arith.truncf %10 : vector<256x256xf32> to vector<256x256xbf16>
    %c0_7 = arith.constant 0 : index
    %c0_8 = arith.constant 0 : index
    %12 = vector.load %arg4[%c0_7, %c0_8] : memref<256x512xbf16, #tpu.memory_space<vmem>>, vector<256x512xbf16>
    %cst_9 = arith.constant dense<0.000000e+00> : vector<256x512xf32>
    %13 = tpu.matmul %11, %12, %cst_9 {dimension_numbers = #tpu.dot_dimension_numbers<[1], [0], [0], [1], [0, 0, 1, 1], [], []>} : vector<256x256xbf16>, vector<256x512xbf16>, vector<256x512xf32> -> vector<256x512xf32>
    %c0_10 = arith.constant 0 : index
    %c0_11 = arith.constant 0 : index
    %14 = vector.load %arg5[%c0_10, %c0_11] : memref<1x512xf32, #tpu.memory_space<vmem>>, vector<1x512xf32>
    %15 = vector.broadcast %14 : vector<1x512xf32> to vector<256x512xf32>
    %16 = arith.addf %13, %15 : vector<256x512xf32>
    %cst_12 = arith.constant 0.000000e+00 : f32
    %17 = vector.broadcast %cst_12 : f32 to vector<256x512xf32>
    %18 = arith.cmpf ogt, %16, %17 : vector<256x512xf32>
    %cst_13 = arith.constant 2.000000e-01 : f32
    %19 = vector.broadcast %cst_13 : f32 to vector<256x512xf32>
    %20 = arith.mulf %19, %16 : vector<256x512xf32>
    %21 = arith.select %18, %16, %20 : vector<256x512xi1>, vector<256x512xf32>
    %22 = arith.truncf %21 : vector<256x512xf32> to vector<256x512xbf16>
    %c0_14 = arith.constant 0 : index
    %c0_15 = arith.constant 0 : index
    %23 = vector.load %arg6[%c0_14, %c0_15] : memref<512x896xbf16, #tpu.memory_space<vmem>>, vector<512x896xbf16>
    %cst_16 = arith.constant dense<0.000000e+00> : vector<256x896xf32>
    %24 = tpu.matmul %22, %23, %cst_16 {dimension_numbers = #tpu.dot_dimension_numbers<[1], [0], [0], [1], [0, 0, 1, 1], [], []>} : vector<256x512xbf16>, vector<512x896xbf16>, vector<256x896xf32> -> vector<256x896xf32>
    %c0_17 = arith.constant 0 : index
    %c0_18 = arith.constant 0 : index
    %25 = vector.load %arg7[%c0_17, %c0_18] : memref<1x896xf32, #tpu.memory_space<vmem>>, vector<1x896xf32>
    %26 = vector.broadcast %25 : vector<1x896xf32> to vector<256x896xf32>
    %27 = arith.addf %24, %26 : vector<256x896xf32>
    %28 = math.tanh %27 : vector<256x896xf32>
    %c0_19 = arith.constant 0 : index
    %c0_20 = arith.constant 0 : index
    %29 = vector.load %arg8[%c0_19, %c0_20] : memref<256x896xf32, #tpu.memory_space<vmem>>, vector<256x896xf32>
    tpu.vector_store %arg8[%c0_19, %c0_20], %28 {strides = array<i32>} : memref<256x896xf32, #tpu.memory_space<vmem>>, vector<256x896xf32>,
    return
  }
  func.func @transform_0(%arg0: i32) -> (i32, i32) {
    %c0_i32 = arith.constant 0 : i32
    %c0_i32_0 = arith.constant 0 : i32
    return %arg0, %c0_i32 : i32, i32
  }
  func.func @transform_1(%arg0: i32) -> (i32, i32) {
    %c0_i32 = arith.constant 0 : i32
    %c0_i32_0 = arith.constant 0 : i32
    %c0_i32_1 = arith.constant 0 : i32
    return %c0_i32, %c0_i32_0 : i32, i32
  }
  func.func @transform_2(%arg0: i32) -> (i32, i32) {
    %c0_i32 = arith.constant 0 : i32
    %c0_i32_0 = arith.constant 0 : i32
    %c0_i32_1 = arith.constant 0 : i32
    return %c0_i32, %c0_i32_0 : i32, i32
  }
  func.func @transform_3(%arg0: i32) -> (i32, i32) {
    %c0_i32 = arith.constant 0 : i32
    %c0_i32_0 = arith.constant 0 : i32
    %c0_i32_1 = arith.constant 0 : i32
    return %c0_i32, %c0_i32_0 : i32, i32
  }
  func.func @transform_4(%arg0: i32) -> (i32, i32) {
    %c0_i32 = arith.constant 0 : i32
    %c0_i32_0 = arith.constant 0 : i32
    %c0_i32_1 = arith.constant 0 : i32
    return %c0_i32, %c0_i32_0 : i32, i32
  }
  func.func @transform_5(%arg0: i32) -> (i32, i32) {
    %c0_i32 = arith.constant 0 : i32
    %c0_i32_0 = arith.constant 0 : i32
    %c0_i32_1 = arith.constant 0 : i32
    return %c0_i32, %c0_i32_0 : i32, i32
  }
  func.func @transform_6(%arg0: i32) -> (i32, i32) {
    %c0_i32 = arith.constant 0 : i32
    %c0_i32_0 = arith.constant 0 : i32
    %c0_i32_1 = arith.constant 0 : i32
    return %c0_i32, %c0_i32_0 : i32, i32
  }
  func.func @transform_7(%arg0: i32) -> (i32, i32) {
    %c0_i32 = arith.constant 0 : i32
    %c0_i32_0 = arith.constant 0 : i32
    return %arg0, %c0_i32 : i32, i32
  }
}

</mosaic_0001>

<llo_original>
// kernel: generator_forward.1
$region0: #{generator_forward.1}
  #allocation0 [shape = 'u32[]', space=smem, size = 0x4, offset = 0x4, fixed_abs, tag = 'smem constant byte address 0x4 - core index']
  #allocation1 [shape = 'u32[144,128]{1,0:T(1,128)}', space=vmem, size = 0x12000, scoped, tag = 'internal scratch']
  %s0 = inlined_call_operand.vmem [shape: bf16[512,128], index: 0, kind: input, shape index: {}]
  %s1 = inlined_call_operand.vmem [shape: bf16[128,256], index: 1, kind: input, shape index: {}]
  %s2 = inlined_call_operand.vmem [shape: f32[1,256], index: 2, kind: input, shape index: {}]
  %s3 = inlined_call_operand.vmem [shape: bf16[256,512], index: 3, kind: input, shape index: {}]
  %s4 = inlined_call_operand.vmem [shape: f32[1,512], index: 4, kind: input, shape index: {}]
  %s5 = inlined_call_operand.vmem [shape: bf16[512,896], index: 5, kind: input, shape index: {}]
  %s6 = inlined_call_operand.vmem [shape: f32[1,896], index: 6, kind: input, shape index: {}]
  %s7 = inlined_call_operand.vmem [shape: f32[512,896], index: 7, kind: output, shape index: {}]
  %s8 = sld [smem:[#allocation0]]
  $region61: #{generator_forward.1} parent=0
    _
  %s10 = ssub.s32 1, %s8
  %s11 = scalar_select 0, %s10, %s8
  loop: start=0, step=1, limit=4
  $region2: #{generator_forward.1} parent=0 // loop_pre_header
    _
  $region3: #{generator_forward.1} parent=0 // loop_header
    %s13 = sphi 0, %s17
    %p14 = scmp.ge.s32.totalorder %s13, 4
    %s23 = sphi 0, %s25
    %s26 = sphi 0, %s23
    %s27 = sphi 0, %s26
    %s43 = sphi 0, %s27
    %s47 = sphi 0, %s47
    %s49 = sphi 0, %s47
    %s50 = sphi 0, %s49
    %s64 = sphi 0, %s50
    %s68 = sphi 0, %s68
    %s70 = sphi 0, %s68
    %s71 = sphi 0, %s70
    %s85 = sphi 0, %s71
    %s89 = sphi 0, %s89
    %s91 = sphi 0, %s89
    %s92 = sphi 0, %s91
    %s106 = sphi 0, %s92
    %s110 = sphi 0, %s110
    %s112 = sphi 0, %s110
    %s113 = sphi 0, %s112
    %s127 = sphi 0, %s113
    %s131 = sphi 0, %s131
    %s133 = sphi 0, %s131
    %s134 = sphi 0, %s133
    %s148 = sphi 0, %s134
    %s152 = sphi 0, %s152
    %s154 = sphi 0, %s152
    %s155 = sphi 0, %s154
    %s169 = sphi 0, %s155
    %s175 = sphi 0, %s177
    %s178 = sphi 0, %s175
    %s179 = sphi 0, %s178
    %s195 = sphi 0, %s179
  $region4: #{generator_forward.1} parent=0 // loop_header_branch
    %16 = sbr.rel (%p14) target = $region8
  $region5: #{generator_forward.1} parent=0 // loop_body
    %s18 = ssub.s32 %s13, 1
    %s19 = ssub.s32 %s13, 2
    %s20 = sadd.s32 %s13, 1
    %s21 = ssub.s32 %s13, %s20
    %p22 = scmp.eq.s32.totalorder %s21, 0
    %s24 = sadd.s32 %s23, 1
    %s25 = scalar_select %p22, %s23, %s24
    %p28 = pneg %p22
    %p29 = scmp.eq.s32.totalorder %s13, 1
    %p30 = por %p28, %p29
    %p31 = scmp.ne.s32.totalorder %s23, %s26
    %p32 = scmp.eq.s32.totalorder %s13, 0
    %p33 = por %p31, %p32
    %p34 = scmp.ne.s32.totalorder %s23, %s26
    %p35 = scmp.eq.s32.totalorder %s18, 1
    %p36 = por %p34, %p35
    %p37 = scmp.ne.s32.totalorder %s26, %s27
    %p38 = scmp.eq.s32.totalorder %s18, 0
    %p39 = por %p37, %p38
    %p40 = scmp.ne.s32.totalorder %s26, %s27
    %p41 = scmp.eq.s32.totalorder %s19, 1
    %p42 = por %p40, %p41
    %p44 = scmp.ne.s32.totalorder %s27, %s43
    %p45 = scmp.eq.s32.totalorder %s19, 0
    %p46 = por %p44, %p45
    %s48 = sadd.s32 %s47, 1
    %p51 = scmp.eq.s32.totalorder %s13, 1
    %p52 = scmp.ne.s32.totalorder %s47, %s49
    %p53 = scmp.eq.s32.totalorder %s13, 0
    %p54 = por %p52, %p53
    %p55 = scmp.ne.s32.totalorder %s47, %s49
    %p56 = scmp.eq.s32.totalorder %s18, 1
    %p57 = por %p55, %p56
    %p58 = scmp.ne.s32.totalorder %s49, %s50
    %p59 = scmp.eq.s32.totalorder %s18, 0
    %p60 = por %p58, %p59
    %p61 = scmp.ne.s32.totalorder %s49, %s50
    %p62 = scmp.eq.s32.totalorder %s19, 1
    %p63 = por %p61, %p62
    %p65 = scmp.ne.s32.totalorder %s50, %s64
    %p66 = scmp.eq.s32.totalorder %s19, 0
    %p67 = por %p65, %p66
    %s69 = sadd.s32 %s68, 1
    %p72 = scmp.eq.s32.totalorder %s13, 1
    %p73 = scmp.ne.s32.totalorder %s68, %s70
    %p74 = scmp.eq.s32.totalorder %s13, 0
    %p75 = por %p73, %p74
    %p76 = scmp.ne.s32.totalorder %s68, %s70
    %p77 = scmp.eq.s32.totalorder %s18, 1
    %p78 = por %p76, %p77
    %p79 = scmp.ne.s32.totalorder %s70, %s71
    %p80 = scmp.eq.s32.totalorder %s18, 0
    %p81 = por %p79, %p80
    %p82 = scmp.ne.s32.totalorder %s70, %s71
    %p83 = scmp.eq.s32.totalorder %s19, 1
    %p84 = por %p82, %p83
    %p86 = scmp.ne.s32.totalorder %s71, %s85
    %p87 = scmp.eq.s32.totalorder %s19, 0
    %p88 = por %p86, %p87
    %s90 = sadd.s32 %s89, 1
    %p93 = scmp.eq.s32.totalorder %s13, 1
    %p94 = scmp.ne.s32.totalorder %s89, %s91
    %p95 = scmp.eq.s32.totalorder %s13, 0
    %p96 = por %p94, %p95
    %p97 = scmp.ne.s32.totalorder %s89, %s91
    %p98 = scmp.eq.s32.totalorder %s18, 1
    %p99 = por %p97, %p98
    %p100 = scmp.ne.s32.totalorder %s91, %s92
    %p101 = scmp.eq.s32.totalorder %s18, 0
    %p102 = por %p100, %p101
    %p103 = scmp.ne.s32.totalorder %s91, %s92
    %p104 = scmp.eq.s32.totalorder %s19, 1
    %p105 = por %p103, %p104
    %p107 = scmp.ne.s32.totalorder %s92, %s106
    %p108 = scmp.eq.s32.totalorder %s19, 0
    %p109 = por %p107, %p108
    %s111 = sadd.s32 %s110, 1
    %p114 = scmp.eq.s32.totalorder %s13, 1
    %p115 = scmp.ne.s32.totalorder %s110, %s112
    %p116 = scmp.eq.s32.totalorder %s13, 0
    %p117 = por %p115, %p116
    %p118 = scmp.ne.s32.totalorder %s110, %s112
    %p119 = scmp.eq.s32.totalorder %s18, 1
    %p120 = por %p118, %p119
    %p121 = scmp.ne.s32.totalorder %s112, %s113
    %p122 = scmp.eq.s32.totalorder %s18, 0
    %p123 = por %p121, %p122
    %p124 = scmp.ne.s32.totalorder %s112, %s113
    %p125 = scmp.eq.s32.totalorder %s19, 1
    %p126 = por %p124, %p125
    %p128 = scmp.ne.s32.totalorder %s113, %s127
    %p129 = scmp.eq.s32.totalorder %s19, 0
    %p130 = por %p128, %p129
    %s132 = sadd.s32 %s131, 1
    %p135 = scmp.eq.s32.totalorder %s13, 1
    %p136 = scmp.ne.s32.totalorder %s131, %s133
    %p137 = scmp.eq.s32.totalorder %s13, 0
    %p138 = por %p136, %p137
    %p139 = scmp.ne.s32.totalorder %s131, %s133
    %p140 = scmp.eq.s32.totalorder %s18, 1
    %p141 = por %p139, %p140
    %p142 = scmp.ne.s32.totalorder %s133, %s134
    %p143 = scmp.eq.s32.totalorder %s18, 0
    %p144 = por %p142, %p143
    %p145 = scmp.ne.s32.totalorder %s133, %s134
    %p146 = scmp.eq.s32.totalorder %s19, 1
    %p147 = por %p145, %p146
    %p149 = scmp.ne.s32.totalorder %s134, %s148
    %p150 = scmp.eq.s32.totalorder %s19, 0
    %p151 = por %p149, %p150
    %s153 = sadd.s32 %s152, 1
    %p156 = scmp.eq.s32.totalorder %s13, 1
    %p157 = scmp.ne.s32.totalorder %s152, %s154
    %p158 = scmp.eq.s32.totalorder %s13, 0
    %p159 = por %p157, %p158
    %p160 = scmp.ne.s32.totalorder %s152, %s154
    %p161 = scmp.eq.s32.totalorder %s18, 1
    %p162 = por %p160, %p161
    %p163 = scmp.ne.s32.totalorder %s154, %s155
    %p164 = scmp.eq.s32.totalorder %s18, 0
    %p165 = por %p163, %p164
    %p166 = scmp.ne.s32.totalorder %s154, %s155
    %p167 = scmp.eq.s32.totalorder %s19, 1
    %p168 = por %p166, %p167
    %p170 = scmp.ne.s32.totalorder %s155, %s169
    %p171 = scmp.eq.s32.totalorder %s19, 0
    %p172 = por %p170, %p171
    %s173 = ssub.s32 %s13, %s20
    %p174 = scmp.eq.s32.totalorder %s173, 0
    %s176 = sadd.s32 %s175, 1
    %s177 = scalar_select %p174, %s175, %s176
    %p180 = pneg %p174
    %p181 = scmp.eq.s32.totalorder %s13, 1
    %p182 = por %p180, %p181
    %p183 = scmp.ne.s32.totalorder %s175, %s178
    %p184 = scmp.eq.s32.totalorder %s13, 0
    %p185 = por %p183, %p184
    %p186 = scmp.ne.s32.totalorder %s175, %s178
    %p187 = scmp.eq.s32.totalorder %s18, 1
    %p188 = por %p186, %p187
    %p189 = scmp.ne.s32.totalorder %s178, %s179
    %p190 = scmp.eq.s32.totalorder %s18, 0
    %p191 = por %p189, %p190
    %p192 = scmp.ne.s32.totalorder %s178, %s179
    %p193 = scmp.eq.s32.totalorder %s19, 1
    %p194 = por %p192, %p193
    %p196 = scmp.ne.s32.totalorder %s179, %s195
    %p197 = scmp.eq.s32.totalorder %s19, 0
    %p198 = por %p196, %p197
    %p199 = scmp.le.s32.totalorder 1, %s13
    %p200 = scmp.lt.s32.totalorder %s13, 3
    %p201 = pnand %p199, %p200
    %p202 = pneg %p201
    // Predicated region
    $region9: #{generator_forward.1} parent=5 // pred_check
      _
    $region10: #{generator_forward.1} parent=5 // pred_check_branch
      %204 = sbr.rel (%p201) target = $region12
    $region11: #{generator_forward.1} parent=5 // pred_region
      %s205 = ssub.s32 %s13, 1
      // Predicated region
      $region13: #{generator_forward.1} parent=11 // pred_check
        %p206 = pneg %p60
      $region14: #{generator_forward.1} parent=11 // pred_check_branch
        %208 = sbr.rel (%p206) target = $region16
      $region15: #{generator_forward.1} parent=11 // pred_region
        _
      $region16: #{generator_forward.1} parent=11 // pred_fallthru
        _
      // Predicated region
      $region17: #{generator_forward.1} parent=11 // pred_check
        %p209 = pneg %p81
      $region18: #{generator_forward.1} parent=11 // pred_check_branch
        %211 = sbr.rel (%p209) target = $region20
      $region19: #{generator_forward.1} parent=11 // pred_region
        _
      $region20: #{generator_forward.1} parent=11 // pred_fallthru
        _
      // Predicated region
      $region21: #{generator_forward.1} parent=11 // pred_check
        %p212 = pneg %p102
      $region22: #{generator_forward.1} parent=11 // pred_check_branch
        %214 = sbr.rel (%p212) target = $region24
      $region23: #{generator_forward.1} parent=11 // pred_region
        _
      $region24: #{generator_forward.1} parent=11 // pred_fallthru
        _
      // Predicated region
      $region25: #{generator_forward.1} parent=11 // pred_check
        %p215 = pneg %p123
      $region26: #{generator_forward.1} parent=11 // pred_check_branch
        %217 = sbr.rel (%p215) target = $region28
      $region27: #{generator_forward.1} parent=11 // pred_region
        _
      $region28: #{generator_forward.1} parent=11 // pred_fallthru
        _
      // Predicated region
      $region29: #{generator_forward.1} parent=11 // pred_check
        %p218 = pneg %p144
      $region30: #{generator_forward.1} parent=11 // pred_check_branch
        %220 = sbr.rel (%p218) target = $region32
      $region31: #{generator_forward.1} parent=11 // pred_region
        _
      $region32: #{generator_forward.1} parent=11 // pred_fallthru
        _
      // Predicated region
      $region33: #{generator_forward.1} parent=11 // pred_check
        %p221 = pneg %p165
      $region34: #{generator_forward.1} parent=11 // pred_check_branch
        %223 = sbr.rel (%p221) target = $region36
      $region35: #{generator_forward.1} parent=11 // pred_region
        _
      $region36: #{generator_forward.1} parent=11 // pred_fallthru
        _
    $region12: #{generator_forward.1} parent=5 // pred_fallthru
      _
    %p224 = scmp.lt.s32.totalorder %s13, 2
    // Predicated region
    $region37: #{generator_forward.1} parent=5 // pred_check
      %p225 = pneg %p224
    $region38: #{generator_forward.1} parent=5 // pred_check_branch
      %227 = sbr.rel (%p225) target = $region40
    $region39: #{generator_forward.1} parent=5 // pred_region
      // Predicated region
      $region41: #{generator_forward.1} parent=39 // pred_check
        %p228 = pneg %p33
      $region42: #{generator_forward.1} parent=39 // pred_check_branch
        %230 = sbr.rel (%p228) target = $region44
      $region43: #{generator_forward.1} parent=39 // pred_region
        %s231 = smul.u32 32, %s13
        %p232 = scmp.lt.s32.totalorder %s231, 63
        %s233 = scalar_select %p232, %s231, 63
        %s234 = smul.addr %s233, 4
        %s235 = scalar_lea.vmem %s0, %s234
        %s236 = smul.u32 32, %s13
      $region44: #{generator_forward.1} parent=39 // pred_fallthru
        _
    $region40: #{generator_forward.1} parent=5 // pred_fallthru
      _
    %p237 = scmp.le.s32.totalorder 1, %s13
    %p238 = scmp.lt.s32.totalorder %s13, 3
    %p239 = pnand %p237, %p238
    %p240 = pneg %p239
    // Predicated region
    $region45: #{generator_forward.1} parent=5 // pred_check
      _
    $region46: #{generator_forward.1} parent=5 // pred_check_branch
      %242 = sbr.rel (%p239) target = $region48
    $region47: #{generator_forward.1} parent=5 // pred_region
      %s243 = ssub.s32 %s13, 1
      %s244 = smul.u32 32, %s18
      %p245 = scmp.lt.s32.totalorder %s244, 63
      %s246 = scalar_select %p245, %s244, 63
      %s247 = smul.addr %s246, 4
      %s248 = scalar_lea.vmem %s0, %s247
      %p249 = pneg %p39
      %p250 = pneg %p36
      %p251 = pneg %p60
      %p252 = pneg %p57
      %p253 = pneg %p81
      %p254 = pneg %p78
      %p255 = pneg %p102
      %p256 = pneg %p99
      %p257 = pneg %p123
      %p258 = pneg %p120
      %p259 = pneg %p144
      %p260 = pneg %p141
      %p261 = pneg %p165
      %p262 = pneg %p162
      %p263 = pneg %p191
      %p264 = pneg %p188
      %s265 = smul.u32 32, %s18
      %p266 = scmp.lt.s32.totalorder %s265, 63
      %s267 = scalar_select %p266, %s265, 63
      %s268 = smul.addr %s267, 7
      %s269 = smul.addr %s268, 8
      %s270 = scalar_lea.vmem %s7, %s269
      %s271 = smul.u32 32, %s18
      %p272 = scmp.lt.s32.totalorder %s271, 63
      %s273 = scalar_select %p272, %s271, 63
      %s274 = smul.addr %s273, 4
      %s275 = scalar_lea.vmem %s0, %s274
      %s276 = smul.u32 32, %s18
      %s277 = smul.u32 32, %s18
      %p278 = scmp.lt.s32.totalorder %s277, 63
      %s279 = scalar_select %p278, %s277, 63
      %s280 = smul.addr %s279, 7
      %s281 = smul.addr %s280, 8
      %s282 = scalar_lea.vmem %s7, %s281
      %s283 = smul.u32 32, %s18
      %v285 = vld [vmem:[%s275] sm:$0xf]
      %v286 = vld [vmem:[%s275 + $0x4] sm:$0xf]
      %v287 = vld [vmem:[%s275 + $0x8] sm:$0xf]
      %v288 = vld [vmem:[%s275 + $0xc] sm:$0xf]
      %v289 = vld [vmem:[%s275 + $0x10] sm:$0xf]
      %v290 = vld [vmem:[%s275 + $0x14] sm:$0xf]
      %v291 = vld [vmem:[%s275 + $0x18] sm:$0xf]
      %v292 = vld [vmem:[%s275 + $0x1c] sm:$0xf]
      %v293 = vld [vmem:[%s275 + $0x20] sm:$0xf]
      %v294 = vld [vmem:[%s275 + $0x24] sm:$0xf]
      %v295 = vld [vmem:[%s275 + $0x28] sm:$0xf]
      %v296 = vld [vmem:[%s275 + $0x2c] sm:$0xf]
      %v297 = vld [vmem:[%s275 + $0x30] sm:$0xf]
      %v298 = vld [vmem:[%s275 + $0x34] sm:$0xf]
      %v299 = vld [vmem:[%s275 + $0x38] sm:$0xf]
      %v300 = vld [vmem:[%s275 + $0x3c] sm:$0xf]
      %v301 = vld [vmem:[%s275 + $0x40] sm:$0xf]
      %v302 = vld [vmem:[%s275 + $0x44] sm:$0xf]
      %v303 = vld [vmem:[%s275 + $0x48] sm:$0xf]
      %v304 = vld [vmem:[%s275 + $0x4c] sm:$0xf]
      %v305 = vld [vmem:[%s275 + $0x50] sm:$0xf]
      %v306 = vld [vmem:[%s275 + $0x54] sm:$0xf]
      %v307 = vld [vmem:[%s275 + $0x58] sm:$0xf]
      %v308 = vld [vmem:[%s275 + $0x5c] sm:$0xf]
      %v309 = vld [vmem:[%s275 + $0x60] sm:$0xf]
      %v310 = vld [vmem:[%s275 + $0x64] sm:$0xf]
      %v311 = vld [vmem:[%s275 + $0x68] sm:$0xf]
      %v312 = vld [vmem:[%s275 + $0x6c] sm:$0xf]
      %v313 = vld [vmem:[%s275 + $0x70] sm:$0xf]
      %v314 = vld [vmem:[%s275 + $0x74] sm:$0xf]
      %v315 = vld [vmem:[%s275 + $0x78] sm:$0xf]
      %v316 = vld [vmem:[%s275 + $0x7c] sm:$0xf]
      %v317 = vld [vmem:[%s1] sm:$0xff]
      %v318 = vld [vmem:[%s1 + $0x8] sm:$0xff]
      %v319 = vld [vmem:[%s1 + $0x10] sm:$0xff]
      %v320 = vld [vmem:[%s1 + $0x18] sm:$0xff]
      %v321 = vld [vmem:[%s1 + $0x20] sm:$0xff]
      %v322 = vld [vmem:[%s1 + $0x28] sm:$0xff]
      %v323 = vld [vmem:[%s1 + $0x30] sm:$0xff]
      %v324 = vld [vmem:[%s1 + $0x38] sm:$0xff]
      %v325 = vld [vmem:[%s1 + $0x40] sm:$0xff]
      %v326 = vld [vmem:[%s1 + $0x48] sm:$0xff]
      %v327 = vld [vmem:[%s1 + $0x50] sm:$0xff]
      %v328 = vld [vmem:[%s1 + $0x58] sm:$0xff]
      %v329 = vld [vmem:[%s1 + $0x60] sm:$0xff]
      %v330 = vld [vmem:[%s1 + $0x68] sm:$0xff]
      %v331 = vld [vmem:[%s1 + $0x70] sm:$0xff]
      %v332 = vld [vmem:[%s1 + $0x78] sm:$0xff]
      %v333 = vld [vmem:[%s2] sm:$0x3]
      %v335 = vlaneseq
      %v336 = vshrl.u32 %v335, 7
      %v337 = vsub.s32 0, %v336
      %v338 = vrot.slane %v333, %v337
      %v339 = vlaneseq
      %v340 = vshrl.u32 %v339, 7
      %v341 = vsub.s32 1, %v340
      %v342 = vrot.slane %v333, %v341
      %v377 = vunpack.c.l.b16 %v285
      %v378 = vunpack.c.l.b16 %v286
      %v379 = vunpack.c.l.b16 %v287
      %v380 = vunpack.c.l.b16 %v288
      %v381 = vunpack.c.l.b16 %v289
      %v382 = vunpack.c.l.b16 %v290
      %v383 = vunpack.c.l.b16 %v291
      %v384 = vunpack.c.l.b16 %v292
      %v385 = vunpack.c.l.b16 %v293
      %v386 = vunpack.c.l.b16 %v294
      %v387 = vunpack.c.l.b16 %v295
      %v388 = vunpack.c.l.b16 %v296
      %v389 = vunpack.c.l.b16 %v297
      %v390 = vunpack.c.l.b16 %v298
      %v391 = vunpack.c.l.b16 %v299
      %v392 = vunpack.c.l.b16 %v300
      %v393 = vunpack.c.l.b16 %v301
      %v394 = vunpack.c.l.b16 %v302
      %v395 = vunpack.c.l.b16 %v303
      %v396 = vunpack.c.l.b16 %v304
      %v397 = vunpack.c.l.b16 %v305
      %v398 = vunpack.c.l.b16 %v306
      %v399 = vunpack.c.l.b16 %v307
      %v400 = vunpack.c.l.b16 %v308
      %v401 = vunpack.c.l.b16 %v309
      %v402 = vunpack.c.l.b16 %v310
      %v403 = vunpack.c.l.b16 %v311
      %v404 = vunpack.c.l.b16 %v312
      %v405 = vunpack.c.l.b16 %v313
      %v406 = vunpack.c.l.b16 %v314
      %v407 = vunpack.c.l.b16 %v315
      %v408 = vunpack.c.l.b16 %v316
      %v409 = vpack.c.b16 %v378, %v377
      %v410 = vpack.c.b16 %v380, %v379
      %v411 = vpack.c.b16 %v382, %v381
      %v412 = vpack.c.b16 %v384, %v383
      %v413 = vpack.c.b16 %v386, %v385
      %v414 = vpack.c.b16 %v388, %v387
      %v415 = vpack.c.b16 %v390, %v389
      %v416 = vpack.c.b16 %v392, %v391
      %v417 = vpack.c.b16 %v394, %v393
      %v418 = vpack.c.b16 %v396, %v395
      %v419 = vpack.c.b16 %v398, %v397
      %v420 = vpack.c.b16 %v400, %v399
      %v421 = vpack.c.b16 %v402, %v401
      %v422 = vpack.c.b16 %v404, %v403
      %v423 = vpack.c.b16 %v406, %v405
      %v424 = vpack.c.b16 %v408, %v407
      %v457 = vunpack.c.l.b16 %v317
      %v458 = vunpack.c.h.b16 %v317
      %v459 = vunpack.c.l.b16 %v318
      %v460 = vunpack.c.h.b16 %v318
      %v461 = vunpack.c.l.b16 %v319
      %v462 = vunpack.c.h.b16 %v319
      %v463 = vunpack.c.l.b16 %v320
      %v464 = vunpack.c.h.b16 %v320
      %v465 = vunpack.c.l.b16 %v321
      %v466 = vunpack.c.h.b16 %v321
      %v467 = vunpack.c.l.b16 %v322
      %v468 = vunpack.c.h.b16 %v322
      %v469 = vunpack.c.l.b16 %v323
      %v470 = vunpack.c.h.b16 %v323
      %v471 = vunpack.c.l.b16 %v324
      %v472 = vunpack.c.h.b16 %v324
      %v473 = vunpack.c.l.b16 %v325
      %v474 = vunpack.c.h.b16 %v325
      %v475 = vunpack.c.l.b16 %v326
      %v476 = vunpack.c.h.b16 %v326
      %v477 = vunpack.c.l.b16 %v327
      %v478 = vunpack.c.h.b16 %v327
      %v479 = vunpack.c.l.b16 %v328
      %v480 = vunpack.c.h.b16 %v328
      %v481 = vunpack.c.l.b16 %v329
      %v482 = vunpack.c.h.b16 %v329
      %v483 = vunpack.c.l.b16 %v330
      %v484 = vunpack.c.h.b16 %v330
      %v485 = vunpack.c.l.b16 %v331
      %v486 = vunpack.c.h.b16 %v331
      %v487 = vunpack.c.l.b16 %v332
      %v488 = vunpack.c.h.b16 %v332
      %v489 = vpack.c.b16 %v459, %v457
      %v490 = vpack.c.b16 %v460, %v458
      %v491 = vpack.c.b16 %v463, %v461
      %v492 = vpack.c.b16 %v464, %v462
      %v493 = vpack.c.b16 %v467, %v465
      %v494 = vpack.c.b16 %v468, %v466
      %v495 = vpack.c.b16 %v471, %v469
      %v496 = vpack.c.b16 %v472, %v470
      %v497 = vpack.c.b16 %v475, %v473
      %v498 = vpack.c.b16 %v476, %v474
      %v499 = vpack.c.b16 %v479, %v477
      %v500 = vpack.c.b16 %v480, %v478
      %v501 = vpack.c.b16 %v483, %v481
      %v502 = vpack.c.b16 %v484, %v482
      %v503 = vpack.c.b16 %v487, %v485
      %v504 = vpack.c.b16 %v488, %v486
      %521 = vmatprep.subr.bf16.mxu0 %v490
      %522 = vmatpush1.bf16.msra.mxu0 %v489
      %523 = vmatprep.subr.bf16.mxu0 %v492
      %524 = vmatpush1.bf16.msra.mxu0 %v491
      %525 = vmatprep.subr.bf16.mxu0 %v494
      %526 = vmatpush1.bf16.msra.mxu0 %v493
      %527 = vmatprep.subr.bf16.mxu0 %v496
      %528 = vmatpush1.bf16.msra.mxu0 %v495
      %529 = vmatprep.subr.bf16.mxu0 %v498
      %530 = vmatpush1.bf16.msra.mxu0 %v497
      %531 = vmatprep.subr.bf16.mxu0 %v500
      %532 = vmatpush1.bf16.msra.mxu0 %v499
      %533 = vmatprep.subr.bf16.mxu0 %v502
      %534 = vmatpush1.bf16.msra.mxu0 %v501
      %535 = vmatprep.subr.bf16.mxu0 %v504
      %536 = vmatpush1.bf16.msra.mxu0 %v503
      %537 = vmatprep.subr.bf16.mxu0 0
      %538 = vmatpush1.bf16.msra.mxu0 0
      %539 = vmatprep.subr.bf16.mxu0 0
      %540 = vmatpush1.bf16.msra.mxu0 0
      %541 = vmatprep.subr.bf16.mxu0 0
      %542 = vmatpush1.bf16.msra.mxu0 0
      %543 = vmatprep.subr.bf16.mxu0 0
      %544 = vmatpush1.bf16.msra.mxu0 0
      %545 = vmatprep.subr.bf16.mxu0 0
      %546 = vmatpush1.bf16.msra.mxu0 0
      %547 = vmatprep.subr.bf16.mxu0 0
      %548 = vmatpush1.bf16.msra.mxu0 0
      %549 = vmatprep.subr.bf16.mxu0 0
      %550 = vmatpush1.bf16.msra.mxu0 0
      %551 = vmatprep.subr.bf16.mxu0 0
      %552 = vmatpush1.bf16.msra.mxu0 0
      %553 = vmatprep.mubr.bf16.mxu0 0
      %554 = vmatmul.mubr.bf16.gmra.mrb[0].mxu0 %v409
      %v555 = vpop.f32.mrb[0].mxu0
      %v556 = vadd.f32 %v338, %v555
      %v557 = vpop.f32.mrb[0].mxu0
      %v558 = vadd.f32 %v342, %v557
      %v559 = vpop.f32.mrb[0].mxu0
      %v560 = vadd.f32 %v338, %v559
      %v561 = vpop.f32.mrb[0].mxu0
      %v562 = vadd.f32 %v342, %v561
      %563 = vmatprep.mubr.bf16.mxu0 0
      %564 = vmatmul.mubr.bf16.gmra.mrb[0].mxu0 %v410
      %v565 = vpop.f32.mrb[0].mxu0
      %v566 = vadd.f32 %v338, %v565
      %v567 = vpop.f32.mrb[0].mxu0
      %v568 = vadd.f32 %v342, %v567
      %v569 = vpop.f32.mrb[0].mxu0
      %v570 = vadd.f32 %v338, %v569
      %v571 = vpop.f32.mrb[0].mxu0
      %v572 = vadd.f32 %v342, %v571
      %573 = vmatprep.mubr.bf16.mxu0 0
      %574 = vmatmul.mubr.bf16.gmra.mrb[0].mxu0 %v411
      %v575 = vpop.f32.mrb[0].mxu0
      %v576 = vadd.f32 %v338, %v575
      %v577 = vpop.f32.mrb[0].mxu0
      %v578 = vadd.f32 %v342, %v577
      %v579 = vpop.f32.mrb[0].mxu0
      %v580 = vadd.f32 %v338, %v579
      %v581 = vpop.f32.mrb[0].mxu0
      %v582 = vadd.f32 %v342, %v581
      %583 = vmatprep.mubr.bf16.mxu0 0
      %584 = vmatmul.mubr.bf16.gmra.mrb[0].mxu0 %v412
      %v585 = vpop.f32.mrb[0].mxu0
      %v586 = vadd.f32 %v338, %v585
      %v587 = vpop.f32.mrb[0].mxu0
      %v588 = vadd.f32 %v342, %v587
      %v589 = vpop.f32.mrb[0].mxu0
      %v590 = vadd.f32 %v338, %v589
      %v591 = vpop.f32.mrb[0].mxu0
      %v592 = vadd.f32 %v342, %v591
      %593 = vmatprep.mubr.bf16.mxu0 0
      %594 = vmatmul.mubr.bf16.gmra.mrb[0].mxu0 %v413
      %v595 = vpop.f32.mrb[0].mxu0
      %v596 = vadd.f32 %v338, %v595
      %v597 = vpop.f32.mrb[0].mxu0
      %v598 = vadd.f32 %v342, %v597
      %v599 = vpop.f32.mrb[0].mxu0
      %v600 = vadd.f32 %v338, %v599
      %v601 = vpop.f32.mrb[0].mxu0
      %v602 = vadd.f32 %v342, %v601
      %603 = vmatprep.mubr.bf16.mxu0 0
      %604 = vmatmul.mubr.bf16.gmra.mrb[0].mxu0 %v414
      %v605 = vpop.f32.mrb[0].mxu0
      %v606 = vadd.f32 %v338, %v605
      %v607 = vpop.f32.mrb[0].mxu0
      %v608 = vadd.f32 %v342, %v607
      %v609 = vpop.f32.mrb[0].mxu0
      %v610 = vadd.f32 %v338, %v609
      %v611 = vpop.f32.mrb[0].mxu0
      %v612 = vadd.f32 %v342, %v611
      %613 = vmatprep.mubr.bf16.mxu0 0
      %614 = vmatmul.mubr.bf16.gmra.mrb[0].mxu0 %v415
      %v615 = vpop.f32.mrb[0].mxu0
      %v616 = vadd.f32 %v338, %v615
      %v617 = vpop.f32.mrb[0].mxu0
      %v618 = vadd.f32 %v342, %v617
      %v619 = vpop.f32.mrb[0].mxu0
      %v620 = vadd.f32 %v338, %v619
      %v621 = vpop.f32.mrb[0].mxu0
      %v622 = vadd.f32 %v342, %v621
      %623 = vmatprep.mubr.bf16.mxu0 0
      %624 = vmatmul.mubr.bf16.gmra.mrb[0].mxu0 %v416
      %v625 = vpop.f32.mrb[0].mxu0
      %v626 = vadd.f32 %v338, %v625
      %v627 = vpop.f32.mrb[0].mxu0
      %v628 = vadd.f32 %v342, %v627
      %v629 = vpop.f32.mrb[0].mxu0
      %v630 = vadd.f32 %v338, %v629
      %v631 = vpop.f32.mrb[0].mxu0
      %v632 = vadd.f32 %v342, %v631
      %633 = vmatprep.mubr.bf16.mxu0 0
      %634 = vmatmul.mubr.bf16.gmra.mrb[0].mxu0 %v417
      %v635 = vpop.f32.mrb[0].mxu0
      %v636 = vadd.f32 %v338, %v635
      %v637 = vpop.f32.mrb[0].mxu0
      %v638 = vadd.f32 %v342, %v637
      %v639 = vpop.f32.mrb[0].mxu0
      %v640 = vadd.f32 %v338, %v639
      %v641 = vpop.f32.mrb[0].mxu0
      %v642 = vadd.f32 %v342, %v641
      %643 = vmatprep.mubr.bf16.mxu0 0
      %644 = vmatmul.mubr.bf16.gmra.mrb[0].mxu0 %v418
      %v645 = vpop.f32.mrb[0].mxu0
      %v646 = vadd.f32 %v338, %v645
      %v647 = vpop.f32.mrb[0].mxu0
      %v648 = vadd.f32 %v342, %v647
      %v649 = vpop.f32.mrb[0].mxu0
      %v650 = vadd.f32 %v338, %v649
      %v651 = vpop.f32.mrb[0].mxu0
      %v652 = vadd.f32 %v342, %v651
      %653 = vmatprep.mubr.bf16.mxu0 0
      %654 = vmatmul.mubr.bf16.gmra.mrb[0].mxu0 %v419
      %v655 = vpop.f32.mrb[0].mxu0
      %v656 = vadd.f32 %v338, %v655
      %v657 = vpop.f32.mrb[0].mxu0
      %v658 = vadd.f32 %v342, %v657
      %v659 = vpop.f32.mrb[0].mxu0
      %v660 = vadd.f32 %v338, %v659
      %v661 = vpop.f32.mrb[0].mxu0
      %v662 = vadd.f32 %v342, %v661
      %663 = vmatprep.mubr.bf16.mxu0 0
      %664 = vmatmul.mubr.bf16.gmra.mrb[0].mxu0 %v420
      %v665 = vpop.f32.mrb[0].mxu0
      %v666 = vadd.f32 %v338, %v665
      %v667 = vpop.f32.mrb[0].mxu0
      %v668 = vadd.f32 %v342, %v667
      %v669 = vpop.f32.mrb[0].mxu0
      %v670 = vadd.f32 %v338, %v669
      %v671 = vpop.f32.mrb[0].mxu0
      %v672 = vadd.f32 %v342, %v671
      %673 = vmatprep.mubr.bf16.mxu0 0
      %674 = vmatmul.mubr.bf16.gmra.mrb[0].mxu0 %v421
      %v675 = vpop.f32.mrb[0].mxu0
      %v676 = vadd.f32 %v338, %v675
      %v677 = vpop.f32.mrb[0].mxu0
      %v678 = vadd.f32 %v342, %v677
      %v679 = vpop.f32.mrb[0].mxu0
      %v680 = vadd.f32 %v338, %v679
      %v681 = vpop.f32.mrb[0].mxu0
      %v682 = vadd.f32 %v342, %v681
      %683 = vmatprep.mubr.bf16.mxu0 0
      %684 = vmatmul.mubr.bf16.gmra.mrb[0].mxu0 %v422
      %v685 = vpop.f32.mrb[0].mxu0
      %v686 = vadd.f32 %v338, %v685
      %v687 = vpop.f32.mrb[0].mxu0
      %v688 = vadd.f32 %v342, %v687
      %v689 = vpop.f32.mrb[0].mxu0
      %v690 = vadd.f32 %v338, %v689
      %v691 = vpop.f32.mrb[0].mxu0
      %v692 = vadd.f32 %v342, %v691
      %693 = vmatprep.mubr.bf16.mxu0 0
      %694 = vmatmul.mubr.bf16.gmra.mrb[0].mxu0 %v423
      %v695 = vpop.f32.mrb[0].mxu0
      %v696 = vadd.f32 %v338, %v695
      %v697 = vpop.f32.mrb[0].mxu0
      %v698 = vadd.f32 %v342, %v697
      %v699 = vpop.f32.mrb[0].mxu0
      %v700 = vadd.f32 %v338, %v699
      %v701 = vpop.f32.mrb[0].mxu0
      %v702 = vadd.f32 %v342, %v701
      %703 = vmatprep.mubr.bf16.mxu0 0
      %704 = vmatmul.mubr.bf16.gmra.mrb[0].mxu0 %v424
      %v705 = vpop.f32.mrb[0].mxu0
      %v706 = vadd.f32 %v338, %v705
      %v707 = vpop.f32.mrb[0].mxu0
      %v708 = vadd.f32 %v342, %v707
      %v709 = vpop.f32.mrb[0].mxu0
      %v710 = vadd.f32 %v338, %v709
      %v711 = vpop.f32.mrb[0].mxu0
      %v712 = vadd.f32 %v342, %v711
      %713 = vdwg.mxu0
      %vm714 = vcmp.gt.f32.partialorder %v556, 0.0
      %vm715 = vcmp.gt.f32.partialorder %v558, 0.0
      %vm716 = vcmp.gt.f32.partialorder %v560, 0.0
      %vm717 = vcmp.gt.f32.partialorder %v562, 0.0
      %vm718 = vcmp.gt.f32.partialorder %v566, 0.0
      %vm719 = vcmp.gt.f32.partialorder %v568, 0.0
      %vm720 = vcmp.gt.f32.partialorder %v570, 0.0
      %vm721 = vcmp.gt.f32.partialorder %v572, 0.0
      %vm722 = vcmp.gt.f32.partialorder %v576, 0.0
      %vm723 = vcmp.gt.f32.partialorder %v578, 0.0
      %vm724 = vcmp.gt.f32.partialorder %v580, 0.0
      %vm725 = vcmp.gt.f32.partialorder %v582, 0.0
      %vm726 = vcmp.gt.f32.partialorder %v586, 0.0
      %vm727 = vcmp.gt.f32.partialorder %v588, 0.0
      %vm728 = vcmp.gt.f32.partialorder %v590, 0.0
      %vm729 = vcmp.gt.f32.partialorder %v592, 0.0
      %vm730 = vcmp.gt.f32.partialorder %v596, 0.0
      %vm731 = vcmp.gt.f32.partialorder %v598, 0.0
      %vm732 = vcmp.gt.f32.partialorder %v600, 0.0
      %vm733 = vcmp.gt.f32.partialorder %v602, 0.0
      %vm734 = vcmp.gt.f32.partialorder %v606, 0.0
      %vm735 = vcmp.gt.f32.partialorder %v608, 0.0
      %vm736 = vcmp.gt.f32.partialorder %v610, 0.0
      %vm737 = vcmp.gt.f32.partialorder %v612, 0.0
      %vm738 = vcmp.gt.f32.partialorder %v616, 0.0
      %vm739 = vcmp.gt.f32.partialorder %v618, 0.0
      %vm740 = vcmp.gt.f32.partialorder %v620, 0.0
      %vm741 = vcmp.gt.f32.partialorder %v622, 0.0
      %vm742 = vcmp.gt.f32.partialorder %v626, 0.0
      %vm743 = vcmp.gt.f32.partialorder %v628, 0.0
      %vm744 = vcmp.gt.f32.partialorder %v630, 0.0
      %vm745 = vcmp.gt.f32.partialorder %v632, 0.0
      %vm746 = vcmp.gt.f32.partialorder %v636, 0.0
      %vm747 = vcmp.gt.f32.partialorder %v638, 0.0
      %vm748 = vcmp.gt.f32.partialorder %v640, 0.0
      %vm749 = vcmp.gt.f32.partialorder %v642, 0.0
      %vm750 = vcmp.gt.f32.partialorder %v646, 0.0
      %vm751 = vcmp.gt.f32.partialorder %v648, 0.0
      %vm752 = vcmp.gt.f32.partialorder %v650, 0.0
      %vm753 = vcmp.gt.f32.partialorder %v652, 0.0
      %vm754 = vcmp.gt.f32.partialorder %v656, 0.0
      %vm755 = vcmp.gt.f32.partialorder %v658, 0.0
      %vm756 = vcmp.gt.f32.partialorder %v660, 0.0
      %vm757 = vcmp.gt.f32.partialorder %v662, 0.0
      %vm758 = vcmp.gt.f32.partialorder %v666, 0.0
      %vm759 = vcmp.gt.f32.partialorder %v668, 0.0
      %vm760 = vcmp.gt.f32.partialorder %v670, 0.0
      %vm761 = vcmp.gt.f32.partialorder %v672, 0.0
      %vm762 = vcmp.gt.f32.partialorder %v676, 0.0
      %vm763 = vcmp.gt.f32.partialorder %v678, 0.0
      %vm764 = vcmp.gt.f32.partialorder %v680, 0.0
      %vm765 = vcmp.gt.f32.partialorder %v682, 0.0
      %vm766 = vcmp.gt.f32.partialorder %v686, 0.0
      %vm767 = vcmp.gt.f32.partialorder %v688, 0.0
      %vm768 = vcmp.gt.f32.partialorder %v690, 0.0
      %vm769 = vcmp.gt.f32.partialorder %v692, 0.0
      %vm770 = vcmp.gt.f32.partialorder %v696, 0.0
      %vm771 = vcmp.gt.f32.partialorder %v698, 0.0
      %vm772 = vcmp.gt.f32.partialorder %v700, 0.0
      %vm773 = vcmp.gt.f32.partialorder %v702, 0.0
      %vm774 = vcmp.gt.f32.partialorder %v706, 0.0
      %vm775 = vcmp.gt.f32.partialorder %v708, 0.0
      %vm776 = vcmp.gt.f32.partialorder %v710, 0.0
      %vm777 = vcmp.gt.f32.partialorder %v712, 0.0
      %v778 = vmul.f32 %v556, 0.2
      %v779 = vmul.f32 %v558, 0.2
      %v780 = vmul.f32 %v560, 0.2
      %v781 = vmul.f32 %v562, 0.2
      %v782 = vmul.f32 %v566, 0.2
      %v783 = vmul.f32 %v568, 0.2
      %v784 = vmul.f32 %v570, 0.2
      %v785 = vmul.f32 %v572, 0.2
      %v786 = vmul.f32 %v576, 0.2
      %v787 = vmul.f32 %v578, 0.2
      %v788 = vmul.f32 %v580, 0.2
      %v789 = vmul.f32 %v582, 0.2
      %v790 = vmul.f32 %v586, 0.2
      %v791 = vmul.f32 %v588, 0.2
      %v792 = vmul.f32 %v590, 0.2
      %v793 = vmul.f32 %v592, 0.2
      %v794 = vmul.f32 %v596, 0.2
      %v795 = vmul.f32 %v598, 0.2
      %v796 = vmul.f32 %v600, 0.2
      %v797 = vmul.f32 %v602, 0.2
      %v798 = vmul.f32 %v606, 0.2
      %v799 = vmul.f32 %v608, 0.2
      %v800 = vmul.f32 %v610, 0.2
      %v801 = vmul.f32 %v612, 0.2
      %v802 = vmul.f32 %v616, 0.2
      %v803 = vmul.f32 %v618, 0.2
      %v804 = vmul.f32 %v620, 0.2
      %v805 = vmul.f32 %v622, 0.2
      %v806 = vmul.f32 %v626, 0.2
      %v807 = vmul.f32 %v628, 0.2
      %v808 = vmul.f32 %v630, 0.2
      %v809 = vmul.f32 %v632, 0.2
      %v810 = vmul.f32 %v636, 0.2
      %v811 = vmul.f32 %v638, 0.2
      %v812 = vmul.f32 %v640, 0.2
      %v813 = vmul.f32 %v642, 0.2
      %v814 = vmul.f32 %v646, 0.2
      %v815 = vmul.f32 %v648, 0.2
      %v816 = vmul.f32 %v650, 0.2
      %v817 = vmul.f32 %v652, 0.2
      %v818 = vmul.f32 %v656, 0.2
      %v819 = vmul.f32 %v658, 0.2
      %v820 = vmul.f32 %v660, 0.2
      %v821 = vmul.f32 %v662, 0.2
      %v822 = vmul.f32 %v666, 0.2
      %v823 = vmul.f32 %v668, 0.2
      %v824 = vmul.f32 %v670, 0.2
      %v825 = vmul.f32 %v672, 0.2
      %v826 = vmul.f32 %v676, 0.2
      %v827 = vmul.f32 %v678, 0.2
      %v828 = vmul.f32 %v680, 0.2
      %v829 = vmul.f32 %v682, 0.2
      %v830 = vmul.f32 %v686, 0.2
      %v831 = vmul.f32 %v688, 0.2
      %v832 = vmul.f32 %v690, 0.2
      %v833 = vmul.f32 %v692, 0.2
      %v834 = vmul.f32 %v696, 0.2
      %v835 = vmul.f32 %v698, 0.2
      %v836 = vmul.f32 %v700, 0.2
      %v837 = vmul.f32 %v702, 0.2
      %v838 = vmul.f32 %v706, 0.2
      %v839 = vmul.f32 %v708, 0.2
      %v840 = vmul.f32 %v710, 0.2
      %v841 = vmul.f32 %v712, 0.2
      %v842 = vsel %vm714, %v556, %v778
      %v843 = vsel %vm715, %v558, %v779
      %v844 = vsel %vm716, %v560, %v780
      %v845 = vsel %vm717, %v562, %v781
      %v846 = vsel %vm718, %v566, %v782
      %v847 = vsel %vm719, %v568, %v783
      %v848 = vsel %vm720, %v570, %v784
      %v849 = vsel %vm721, %v572, %v785
      %v850 = vsel %vm722, %v576, %v786
      %v851 = vsel %vm723, %v578, %v787
      %v852 = vsel %vm724, %v580, %v788
      %v853 = vsel %vm725, %v582, %v789
      %v854 = vsel %vm726, %v586, %v790
      %v855 = vsel %vm727, %v588, %v791
      %v856 = vsel %vm728, %v590, %v792
      %v857 = vsel %vm729, %v592, %v793
      %v858 = vsel %vm730, %v596, %v794
      %v859 = vsel %vm731, %v598, %v795
      %v860 = vsel %vm732, %v600, %v796
      %v861 = vsel %vm733, %v602, %v797
      %v862 = vsel %vm734, %v606, %v798
      %v863 = vsel %vm735, %v608, %v799
      %v864 = vsel %vm736, %v610, %v800
      %v865 = vsel %vm737, %v612, %v801
      %v866 = vsel %vm738, %v616, %v802
      %v867 = vsel %vm739, %v618, %v803
      %v868 = vsel %vm740, %v620, %v804
      %v869 = vsel %vm741, %v622, %v805
      %v870 = vsel %vm742, %v626, %v806
      %v871 = vsel %vm743, %v628, %v807
      %v872 = vsel %vm744, %v630, %v808
      %v873 = vsel %vm745, %v632, %v809
      %v874 = vsel %vm746, %v636, %v810
      %v875 = vsel %vm747, %v638, %v811
      %v876 = vsel %vm748, %v640, %v812
      %v877 = vsel %vm749, %v642, %v813
      %v878 = vsel %vm750, %v646, %v814
      %v879 = vsel %vm751, %v648, %v815
      %v880 = vsel %vm752, %v650, %v816
      %v881 = vsel %vm753, %v652, %v817
      %v882 = vsel %vm754, %v656, %v818
      %v883 = vsel %vm755, %v658, %v819
      %v884 = vsel %vm756, %v660, %v820
      %v885 = vsel %vm757, %v662, %v821
      %v886 = vsel %vm758, %v666, %v822
      %v887 = vsel %vm759, %v668, %v823
      %v888 = vsel %vm760, %v670, %v824
      %v889 = vsel %vm761, %v672, %v825
      %v890 = vsel %vm762, %v676, %v826
      %v891 = vsel %vm763, %v678, %v827
      %v892 = vsel %vm764, %v680, %v828
      %v893 = vsel %vm765, %v682, %v829
      %v894 = vsel %vm766, %v686, %v830
      %v895 = vsel %vm767, %v688, %v831
      %v896 = vsel %vm768, %v690, %v832
      %v897 = vsel %vm769, %v692, %v833
      %v898 = vsel %vm770, %v696, %v834
      %v899 = vsel %vm771, %v698, %v835
      %v900 = vsel %vm772, %v700, %v836
      %v901 = vsel %vm773, %v702, %v837
      %v902 = vsel %vm774, %v706, %v838
      %v903 = vsel %vm775, %v708, %v839
      %v904 = vsel %vm776, %v710, %v840
      %v905 = vsel %vm777, %v712, %v841
      %v906 = vpack.c.bf16 %v844, %v842
      %v907 = vpack.c.bf16 %v845, %v843
      %v908 = vpack.c.bf16 %v848, %v846
      %v909 = vpack.c.bf16 %v849, %v847
      %v910 = vpack.c.bf16 %v852, %v850
      %v911 = vpack.c.bf16 %v853, %v851
      %v912 = vpack.c.bf16 %v856, %v854
      %v913 = vpack.c.bf16 %v857, %v855
      %v914 = vpack.c.bf16 %v860, %v858
      %v915 = vpack.c.bf16 %v861, %v859
      %v916 = vpack.c.bf16 %v864, %v862
      %v917 = vpack.c.bf16 %v865, %v863
      %v918 = vpack.c.bf16 %v868, %v866
      %v919 = vpack.c.bf16 %v869, %v867
      %v920 = vpack.c.bf16 %v872, %v870
      %v921 = vpack.c.bf16 %v873, %v871
      %v922 = vpack.c.bf16 %v876, %v874
      %v923 = vpack.c.bf16 %v877, %v875
      %v924 = vpack.c.bf16 %v880, %v878
      %v925 = vpack.c.bf16 %v881, %v879
      %v926 = vpack.c.bf16 %v884, %v882
      %v927 = vpack.c.bf16 %v885, %v883
      %v928 = vpack.c.bf16 %v888, %v886
      %v929 = vpack.c.bf16 %v889, %v887
      %v930 = vpack.c.bf16 %v892, %v890
      %v931 = vpack.c.bf16 %v893, %v891
      %v932 = vpack.c.bf16 %v896, %v894
      %v933 = vpack.c.bf16 %v897, %v895
      %v934 = vpack.c.bf16 %v900, %v898
      %v935 = vpack.c.bf16 %v901, %v899
      %v936 = vpack.c.bf16 %v904, %v902
      %v937 = vpack.c.bf16 %v905, %v903
      %v938 = vld [vmem:[%s3] sm:$0xff]
      %v939 = vld [vmem:[%s3 + $0x8] sm:$0xff]
      %v940 = vld [vmem:[%s3 + $0x10] sm:$0xff]
      %v941 = vld [vmem:[%s3 + $0x18] sm:$0xff]
      %v942 = vld [vmem:[%s3 + $0x20] sm:$0xff]
      %v943 = vld [vmem:[%s3 + $0x28] sm:$0xff]
      %v944 = vld [vmem:[%s3 + $0x30] sm:$0xff]
      %v945 = vld [vmem:[%s3 + $0x38] sm:$0xff]
      %v946 = vld [vmem:[%s3 + $0x40] sm:$0xff]
      %v947 = vld [vmem:[%s3 + $0x48] sm:$0xff]
      %v948 = vld [vmem:[%s3 + $0x50] sm:$0xff]
      %v949 = vld [vmem:[%s3 + $0x58] sm:$0xff]
      %v950 = vld [vmem:[%s3 + $0x60] sm:$0xff]
      %v951 = vld [vmem:[%s3 + $0x68] sm:$0xff]
      %v952 = vld [vmem:[%s3 + $0x70] sm:$0xff]
      %v953 = vld [vmem:[%s3 + $0x78] sm:$0xff]
      %v954 = vld [vmem:[%s3 + $0x80] sm:$0xff]
      %v955 = vld [vmem:[%s3 + $0x88] sm:$0xff]
      %v956 = vld [vmem:[%s3 + $0x90] sm:$0xff]
      %v957 = vld [vmem:[%s3 + $0x98] sm:$0xff]
      %v958 = vld [vmem:[%s3 + $0xa0] sm:$0xff]
      %v959 = vld [vmem:[%s3 + $0xa8] sm:$0xff]
      %v960 = vld [vmem:[%s3 + $0xb0] sm:$0xff]
      %v961 = vld [vmem:[%s3 + $0xb8] sm:$0xff]
      %v962 = vld [vmem:[%s3 + $0xc0] sm:$0xff]
      %v963 = vld [vmem:[%s3 + $0xc8] sm:$0xff]
      %v964 = vld [vmem:[%s3 + $0xd0] sm:$0xff]
      %v965 = vld [vmem:[%s3 + $0xd8] sm:$0xff]
      %v966 = vld [vmem:[%s3 + $0xe0] sm:$0xff]
      %v967 = vld [vmem:[%s3 + $0xe8] sm:$0xff]
      %v968 = vld [vmem:[%s3 + $0xf0] sm:$0xff]
      %v969 = vld [vmem:[%s3 + $0xf8] sm:$0xff]
      %v970 = vld [vmem:[%s3 + $0x100] sm:$0xff]
      %v971 = vld [vmem:[%s3 + $0x108] sm:$0xff]
      %v972 = vld [vmem:[%s3 + $0x110] sm:$0xff]
      %v973 = vld [vmem:[%s3 + $0x118] sm:$0xff]
      %v974 = vld [vmem:[%s3 + $0x120] sm:$0xff]
      %v975 = vld [vmem:[%s3 + $0x128] sm:$0xff]
      %v976 = vld [vmem:[%s3 + $0x130] sm:$0xff]
      %v977 = vld [vmem:[%s3 + $0x138] sm:$0xff]
      %v978 = vld [vmem:[%s3 + $0x140] sm:$0xff]
      %v979 = vld [vmem:[%s3 + $0x148] sm:$0xff]
      %v980 = vld [vmem:[%s3 + $0x150] sm:$0xff]
      %v981 = vld [vmem:[%s3 + $0x158] sm:$0xff]
      %v982 = vld [vmem:[%s3 + $0x160] sm:$0xff]
      %v983 = vld [vmem:[%s3 + $0x168] sm:$0xff]
      %v984 = vld [vmem:[%s3 + $0x170] sm:$0xff]
      %v985 = vld [vmem:[%s3 + $0x178] sm:$0xff]
      %v986 = vld [vmem:[%s3 + $0x180] sm:$0xff]
      %v987 = vld [vmem:[%s3 + $0x188] sm:$0xff]
      %v988 = vld [vmem:[%s3 + $0x190] sm:$0xff]
      %v989 = vld [vmem:[%s3 + $0x198] sm:$0xff]
      %v990 = vld [vmem:[%s3 + $0x1a0] sm:$0xff]
      %v991 = vld [vmem:[%s3 + $0x1a8] sm:$0xff]
      %v992 = vld [vmem:[%s3 + $0x1b0] sm:$0xff]
      %v993 = vld [vmem:[%s3 + $0x1b8] sm:$0xff]
      %v994 = vld [vmem:[%s3 + $0x1c0] sm:$0xff]
      %v995 = vld [vmem:[%s3 + $0x1c8] sm:$0xff]
      %v996 = vld [vmem:[%s3 + $0x1d0] sm:$0xff]
      %v997 = vld [vmem:[%s3 + $0x1d8] sm:$0xff]
      %v998 = vld [vmem:[%s3 + $0x1e0] sm:$0xff]
      %v999 = vld [vmem:[%s3 + $0x1e8] sm:$0xff]
      %v1000 = vld [vmem:[%s3 + $0x1f0] sm:$0xff]
      %v1001 = vld [vmem:[%s3 + $0x1f8] sm:$0xff]
      %v1002 = vld [vmem:[%s4] sm:$0xf]
      %v1004 = vlaneseq
      %v1005 = vshrl.u32 %v1004, 7
      %v1006 = vsub.s32 0, %v1005
      %v1007 = vrot.slane %v1002, %v1006
      %v1008 = vlaneseq
      %v1009 = vshrl.u32 %v1008, 7
      %v1010 = vsub.s32 1, %v1009
      %v1011 = vrot.slane %v1002, %v1010
      %v1012 = vlaneseq
      %v1013 = vshrl.u32 %v1012, 7
      %v1014 = vsub.s32 2, %v1013
      %v1015 = vrot.slane %v1002, %v1014
      %v1016 = vlaneseq
      %v1017 = vshrl.u32 %v1016, 7
      %v1018 = vsub.s32 3, %v1017
      %v1019 = vrot.slane %v1002, %v1018
      %v1088 = vunpack.c.l.b16 %v938
      %v1089 = vunpack.c.h.b16 %v938
      %v1090 = vunpack.c.l.b16 %v939
      %v1091 = vunpack.c.h.b16 %v939
      %v1092 = vunpack.c.l.b16 %v940
      %v1093 = vunpack.c.h.b16 %v940
      %v1094 = vunpack.c.l.b16 %v941
      %v1095 = vunpack.c.h.b16 %v941
      %v1096 = vunpack.c.l.b16 %v942
      %v1097 = vunpack.c.h.b16 %v942
      %v1098 = vunpack.c.l.b16 %v943
      %v1099 = vunpack.c.h.b16 %v943
      %v1100 = vunpack.c.l.b16 %v944
      %v1101 = vunpack.c.h.b16 %v944
      %v1102 = vunpack.c.l.b16 %v945
      %v1103 = vunpack.c.h.b16 %v945
      %v1104 = vunpack.c.l.b16 %v946
      %v1105 = vunpack.c.h.b16 %v946
      %v1106 = vunpack.c.l.b16 %v947
      %v1107 = vunpack.c.h.b16 %v947
      %v1108 = vunpack.c.l.b16 %v948
      %v1109 = vunpack.c.h.b16 %v948
      %v1110 = vunpack.c.l.b16 %v949
      %v1111 = vunpack.c.h.b16 %v949
      %v1112 = vunpack.c.l.b16 %v950
      %v1113 = vunpack.c.h.b16 %v950
      %v1114 = vunpack.c.l.b16 %v951
      %v1115 = vunpack.c.h.b16 %v951
      %v1116 = vunpack.c.l.b16 %v952
      %v1117 = vunpack.c.h.b16 %v952
      %v1118 = vunpack.c.l.b16 %v953
      %v1119 = vunpack.c.h.b16 %v953
      %v1120 = vunpack.c.l.b16 %v954
      %v1121 = vunpack.c.h.b16 %v954
      %v1122 = vunpack.c.l.b16 %v955
      %v1123 = vunpack.c.h.b16 %v955
      %v1124 = vunpack.c.l.b16 %v956
      %v1125 = vunpack.c.h.b16 %v956
      %v1126 = vunpack.c.l.b16 %v957
      %v1127 = vunpack.c.h.b16 %v957
      %v1128 = vunpack.c.l.b16 %v958
      %v1129 = vunpack.c.h.b16 %v958
      %v1130 = vunpack.c.l.b16 %v959
      %v1131 = vunpack.c.h.b16 %v959
      %v1132 = vunpack.c.l.b16 %v960
      %v1133 = vunpack.c.h.b16 %v960
      %v1134 = vunpack.c.l.b16 %v961
      %v1135 = vunpack.c.h.b16 %v961
      %v1136 = vunpack.c.l.b16 %v962
      %v1137 = vunpack.c.h.b16 %v962
      %v1138 = vunpack.c.l.b16 %v963
      %v1139 = vunpack.c.h.b16 %v963
      %v1140 = vunpack.c.l.b16 %v964
      %v1141 = vunpack.c.h.b16 %v964
      %v1142 = vunpack.c.l.b16 %v965
      %v1143 = vunpack.c.h.b16 %v965
      %v1144 = vunpack.c.l.b16 %v966
      %v1145 = vunpack.c.h.b16 %v966
      %v1146 = vunpack.c.l.b16 %v967
      %v1147 = vunpack.c.h.b16 %v967
      %v1148 = vunpack.c.l.b16 %v968
      %v1149 = vunpack.c.h.b16 %v968
      %v1150 = vunpack.c.l.b16 %v969
      %v1151 = vunpack.c.h.b16 %v969
      %v1152 = vunpack.c.l.b16 %v970
      %v1153 = vunpack.c.h.b16 %v970
      %v1154 = vunpack.c.l.b16 %v971
      %v1155 = vunpack.c.h.b16 %v971
      %v1156 = vunpack.c.l.b16 %v972
      %v1157 = vunpack.c.h.b16 %v972
      %v1158 = vunpack.c.l.b16 %v973
      %v1159 = vunpack.c.h.b16 %v973
      %v1160 = vunpack.c.l.b16 %v974
      %v1161 = vunpack.c.h.b16 %v974
      %v1162 = vunpack.c.l.b16 %v975
      %v1163 = vunpack.c.h.b16 %v975
      %v1164 = vunpack.c.l.b16 %v976
      %v1165 = vunpack.c.h.b16 %v976
      %v1166 = vunpack.c.l.b16 %v977
      %v1167 = vunpack.c.h.b16 %v977
      %v1168 = vunpack.c.l.b16 %v978
      %v1169 = vunpack.c.h.b16 %v978
      %v1170 = vunpack.c.l.b16 %v979
      %v1171 = vunpack.c.h.b16 %v979
      %v1172 = vunpack.c.l.b16 %v980
      %v1173 = vunpack.c.h.b16 %v980
      %v1174 = vunpack.c.l.b16 %v981
      %v1175 = vunpack.c.h.b16 %v981
      %v1176 = vunpack.c.l.b16 %v982
      %v1177 = vunpack.c.h.b16 %v982
      %v1178 = vunpack.c.l.b16 %v983
      %v1179 = vunpack.c.h.b16 %v983
      %v1180 = vunpack.c.l.b16 %v984
      %v1181 = vunpack.c.h.b16 %v984
      %v1182 = vunpack.c.l.b16 %v985
      %v1183 = vunpack.c.h.b16 %v985
      %v1184 = vunpack.c.l.b16 %v986
      %v1185 = vunpack.c.h.b16 %v986
      %v1186 = vunpack.c.l.b16 %v987
      %v1187 = vunpack.c.h.b16 %v987
      %v1188 = vunpack.c.l.b16 %v988
      %v1189 = vunpack.c.h.b16 %v988
      %v1190 = vunpack.c.l.b16 %v989
      %v1191 = vunpack.c.h.b16 %v989
      %v1192 = vunpack.c.l.b16 %v990
      %v1193 = vunpack.c.h.b16 %v990
      %v1194 = vunpack.c.l.b16 %v991
      %v1195 = vunpack.c.h.b16 %v991
      %v1196 = vunpack.c.l.b16 %v992
      %v1197 = vunpack.c.h.b16 %v992
      %v1198 = vunpack.c.l.b16 %v993
      %v1199 = vunpack.c.h.b16 %v993
      %v1200 = vunpack.c.l.b16 %v994
      %v1201 = vunpack.c.h.b16 %v994
      %v1202 = vunpack.c.l.b16 %v995
      %v1203 = vunpack.c.h.b16 %v995
      %v1204 = vunpack.c.l.b16 %v996
      %v1205 = vunpack.c.h.b16 %v996
      %v1206 = vunpack.c.l.b16 %v997
      %v1207 = vunpack.c.h.b16 %v997
      %v1208 = vunpack.c.l.b16 %v998
      %v1209 = vunpack.c.h.b16 %v998
      %v1210 = vunpack.c.l.b16 %v999
      %v1211 = vunpack.c.h.b16 %v999
      %v1212 = vunpack.c.l.b16 %v1000
      %v1213 = vunpack.c.h.b16 %v1000
      %v1214 = vunpack.c.l.b16 %v1001
      %v1215 = vunpack.c.h.b16 %v1001
      %v1216 = vpack.c.b16 %v1092, %v1088
      %v1217 = vpack.c.b16 %v1093, %v1089
      %v1218 = vpack.c.b16 %v1094, %v1090
      %v1219 = vpack.c.b16 %v1095, %v1091
      %v1220 = vpack.c.b16 %v1100, %v1096
      %v1221 = vpack.c.b16 %v1101, %v1097
      %v1222 = vpack.c.b16 %v1102, %v1098
      %v1223 = vpack.c.b16 %v1103, %v1099
      %v1224 = vpack.c.b16 %v1108, %v1104
      %v1225 = vpack.c.b16 %v1109, %v1105
      %v1226 = vpack.c.b16 %v1110, %v1106
      %v1227 = vpack.c.b16 %v1111, %v1107
      %v1228 = vpack.c.b16 %v1116, %v1112
      %v1229 = vpack.c.b16 %v1117, %v1113
      %v1230 = vpack.c.b16 %v1118, %v1114
      %v1231 = vpack.c.b16 %v1119, %v1115
      %v1232 = vpack.c.b16 %v1124, %v1120
      %v1233 = vpack.c.b16 %v1125, %v1121
      %v1234 = vpack.c.b16 %v1126, %v1122
      %v1235 = vpack.c.b16 %v1127, %v1123
      %v1236 = vpack.c.b16 %v1132, %v1128
      %v1237 = vpack.c.b16 %v1133, %v1129
      %v1238 = vpack.c.b16 %v1134, %v1130
      %v1239 = vpack.c.b16 %v1135, %v1131
      %v1240 = vpack.c.b16 %v1140, %v1136
      %v1241 = vpack.c.b16 %v1141, %v1137
      %v1242 = vpack.c.b16 %v1142, %v1138
      %v1243 = vpack.c.b16 %v1143, %v1139
      %v1244 = vpack.c.b16 %v1148, %v1144
      %v1245 = vpack.c.b16 %v1149, %v1145
      %v1246 = vpack.c.b16 %v1150, %v1146
      %v1247 = vpack.c.b16 %v1151, %v1147
      %v1248 = vpack.c.b16 %v1156, %v1152
      %v1249 = vpack.c.b16 %v1157, %v1153
      %v1250 = vpack.c.b16 %v1158, %v1154
      %v1251 = vpack.c.b16 %v1159, %v1155
      %v1252 = vpack.c.b16 %v1164, %v1160
      %v1253 = vpack.c.b16 %v1165, %v1161
      %v1254 = vpack.c.b16 %v1166, %v1162
      %v1255 = vpack.c.b16 %v1167, %v1163
      %v1256 = vpack.c.b16 %v1172, %v1168
      %v1257 = vpack.c.b16 %v1173, %v1169
      %v1258 = vpack.c.b16 %v1174, %v1170
      %v1259 = vpack.c.b16 %v1175, %v1171
      %v1260 = vpack.c.b16 %v1180, %v1176
      %v1261 = vpack.c.b16 %v1181, %v1177
      %v1262 = vpack.c.b16 %v1182, %v1178
      %v1263 = vpack.c.b16 %v1183, %v1179
      %v1264 = vpack.c.b16 %v1188, %v1184
      %v1265 = vpack.c.b16 %v1189, %v1185
      %v1266 = vpack.c.b16 %v1190, %v1186
      %v1267 = vpack.c.b16 %v1191, %v1187
      %v1268 = vpack.c.b16 %v1196, %v1192
      %v1269 = vpack.c.b16 %v1197, %v1193
      %v1270 = vpack.c.b16 %v1198, %v1194
      %v1271 = vpack.c.b16 %v1199, %v1195
      %v1272 = vpack.c.b16 %v1204, %v1200
      %v1273 = vpack.c.b16 %v1205, %v1201
      %v1274 = vpack.c.b16 %v1206, %v1202
      %v1275 = vpack.c.b16 %v1207, %v1203
      %v1276 = vpack.c.b16 %v1212, %v1208
      %v1277 = vpack.c.b16 %v1213, %v1209
      %v1278 = vpack.c.b16 %v1214, %v1210
      %v1279 = vpack.c.b16 %v1215, %v1211
      %1344 = vmatprep.subr.bf16.mxu0 %v1217
      %1345 = vmatpush1.bf16.msra.mxu0 %v1216
      %1346 = vmatprep.subr.bf16.mxu0 %v1221
      %1347 = vmatpush1.bf16.msra.mxu0 %v1220
      %1348 = vmatprep.subr.bf16.mxu0 %v1225
      %1349 = vmatpush1.bf16.msra.mxu0 %v1224
      %1350 = vmatprep.subr.bf16.mxu0 %v1229
      %1351 = vmatpush1.bf16.msra.mxu0 %v1228
      %1352 = vmatprep.subr.bf16.mxu0 %v1233
      %1353 = vmatpush1.bf16.msra.mxu0 %v1232
      %1354 = vmatprep.subr.bf16.mxu0 %v1237
      %1355 = vmatpush1.bf16.msra.mxu0 %v1236
      %1356 = vmatprep.subr.bf16.mxu0 %v1241
      %1357 = vmatpush1.bf16.msra.mxu0 %v1240
      %1358 = vmatprep.subr.bf16.mxu0 %v1245
      %1359 = vmatpush1.bf16.msra.mxu0 %v1244
      %1360 = vmatprep.subr.bf16.mxu0 %v1249
      %1361 = vmatpush1.bf16.msra.mxu0 %v1248
      %1362 = vmatprep.subr.bf16.mxu0 %v1253
      %1363 = vmatpush1.bf16.msra.mxu0 %v1252
      %1364 = vmatprep.subr.bf16.mxu0 %v1257
      %1365 = vmatpush1.bf16.msra.mxu0 %v1256
      %1366 = vmatprep.subr.bf16.mxu0 %v1261
      %1367 = vmatpush1.bf16.msra.mxu0 %v1260
      %1368 = vmatprep.subr.bf16.mxu0 %v1265
      %1369 = vmatpush1.bf16.msra.mxu0 %v1264
      %1370 = vmatprep.subr.bf16.mxu0 %v1269
      %1371 = vmatpush1.bf16.msra.mxu0 %v1268
      %1372 = vmatprep.subr.bf16.mxu0 %v1273
      %1373 = vmatpush1.bf16.msra.mxu0 %v1272
      %1374 = vmatprep.subr.bf16.mxu0 %v1277
      %1375 = vmatpush1.bf16.msra.mxu0 %v1276
      %1376 = vmatprep.mubr.bf16.mxu0 %v907
      %1377 = vmatmul.mubr.bf16.gmra.mrb[0].mxu0 %v906
      %v1378 = vpop.f32.mrb[0].mxu0
      %v1379 = vadd.f32 %v1007, %v1378
      %v1380 = vpop.f32.mrb[0].mxu0
      %v1381 = vadd.f32 %v1011, %v1380
      %v1382 = vpop.f32.mrb[0].mxu0
      %v1383 = vadd.f32 %v1007, %v1382
      %v1384 = vpop.f32.mrb[0].mxu0
      %v1385 = vadd.f32 %v1011, %v1384
      %1386 = vmatprep.mubr.bf16.mxu0 %v909
      %1387 = vmatmul.mubr.bf16.gmra.mrb[0].mxu0 %v908
      %v1388 = vpop.f32.mrb[0].mxu0
      %v1389 = vadd.f32 %v1007, %v1388
      %v1390 = vpop.f32.mrb[0].mxu0
      %v1391 = vadd.f32 %v1011, %v1390
      %v1392 = vpop.f32.mrb[0].mxu0
      %v1393 = vadd.f32 %v1007, %v1392
      %v1394 = vpop.f32.mrb[0].mxu0
      %v1395 = vadd.f32 %v1011, %v1394
      %1396 = vmatprep.mubr.bf16.mxu0 %v911
      %1397 = vmatmul.mubr.bf16.gmra.mrb[0].mxu0 %v910
      %v1398 = vpop.f32.mrb[0].mxu0
      %v1399 = vadd.f32 %v1007, %v1398
      %v1400 = vpop.f32.mrb[0].mxu0
      %v1401 = vadd.f32 %v1011, %v1400
      %v1402 = vpop.f32.mrb[0].mxu0
      %v1403 = vadd.f32 %v1007, %v1402
      %v1404 = vpop.f32.mrb[0].mxu0
      %v1405 = vadd.f32 %v1011, %v1404
      %1406 = vmatprep.mubr.bf16.mxu0 %v913
      %1407 = vmatmul.mubr.bf16.gmra.mrb[0].mxu0 %v912
      %v1408 = vpop.f32.mrb[0].mxu0
      %v1409 = vadd.f32 %v1007, %v1408
      %v1410 = vpop.f32.mrb[0].mxu0
      %v1411 = vadd.f32 %v1011, %v1410
      %v1412 = vpop.f32.mrb[0].mxu0
      %v1413 = vadd.f32 %v1007, %v1412
      %v1414 = vpop.f32.mrb[0].mxu0
      %v1415 = vadd.f32 %v1011, %v1414
      %1416 = vmatprep.mubr.bf16.mxu0 %v915
      %1417 = vmatmul.mubr.bf16.gmra.mrb[0].mxu0 %v914
      %v1418 = vpop.f32.mrb[0].mxu0
      %v1419 = vadd.f32 %v1007, %v1418
      %v1420 = vpop.f32.mrb[0].mxu0
      %v1421 = vadd.f32 %v1011, %v1420
      %v1422 = vpop.f32.mrb[0].mxu0
      %v1423 = vadd.f32 %v1007, %v1422
      %v1424 = vpop.f32.mrb[0].mxu0
      %v1425 = vadd.f32 %v1011, %v1424
      %1426 = vmatprep.mubr.bf16.mxu0 %v917
      %1427 = vmatmul.mubr.bf16.gmra.mrb[0].mxu0 %v916
      %v1428 = vpop.f32.mrb[0].mxu0
      %v1429 = vadd.f32 %v1007, %v1428
      %v1430 = vpop.f32.mrb[0].mxu0
      %v1431 = vadd.f32 %v1011, %v1430
      %v1432 = vpop.f32.mrb[0].mxu0
      %v1433 = vadd.f32 %v1007, %v1432
      %v1434 = vpop.f32.mrb[0].mxu0
      %v1435 = vadd.f32 %v1011, %v1434
      %1436 = vmatprep.mubr.bf16.mxu0 %v919
      %1437 = vmatmul.mubr.bf16.gmra.mrb[0].mxu0 %v918
      %v1438 = vpop.f32.mrb[0].mxu0
      %v1439 = vadd.f32 %v1007, %v1438
      %v1440 = vpop.f32.mrb[0].mxu0
      %v1441 = vadd.f32 %v1011, %v1440
      %v1442 = vpop.f32.mrb[0].mxu0
      %v1443 = vadd.f32 %v1007, %v1442
      %v1444 = vpop.f32.mrb[0].mxu0
      %v1445 = vadd.f32 %v1011, %v1444
      %1446 = vmatprep.mubr.bf16.mxu0 %v921
      %1447 = vmatmul.mubr.bf16.gmra.mrb[0].mxu0 %v920
      %v1448 = vpop.f32.mrb[0].mxu0
      %v1449 = vadd.f32 %v1007, %v1448
      %v1450 = vpop.f32.mrb[0].mxu0
      %v1451 = vadd.f32 %v1011, %v1450
      %v1452 = vpop.f32.mrb[0].mxu0
      %v1453 = vadd.f32 %v1007, %v1452
      %v1454 = vpop.f32.mrb[0].mxu0
      %v1455 = vadd.f32 %v1011, %v1454
      %1456 = vmatprep.mubr.bf16.mxu0 %v923
      %1457 = vmatmul.mubr.bf16.gmra.mrb[0].mxu0 %v922
      %v1458 = vpop.f32.mrb[0].mxu0
      %v1459 = vadd.f32 %v1007, %v1458
      %v1460 = vpop.f32.mrb[0].mxu0
      %v1461 = vadd.f32 %v1011, %v1460
      %v1462 = vpop.f32.mrb[0].mxu0
      %v1463 = vadd.f32 %v1007, %v1462
      %v1464 = vpop.f32.mrb[0].mxu0
      %v1465 = vadd.f32 %v1011, %v1464
      %1466 = vmatprep.mubr.bf16.mxu0 %v925
      %1467 = vmatmul.mubr.bf16.gmra.mrb[0].mxu0 %v924
      %v1468 = vpop.f32.mrb[0].mxu0
      %v1469 = vadd.f32 %v1007, %v1468
      %v1470 = vpop.f32.mrb[0].mxu0
      %v1471 = vadd.f32 %v1011, %v1470
      %v1472 = vpop.f32.mrb[0].mxu0
      %v1473 = vadd.f32 %v1007, %v1472
      %v1474 = vpop.f32.mrb[0].mxu0
      %v1475 = vadd.f32 %v1011, %v1474
      %1476 = vmatprep.mubr.bf16.mxu0 %v927
      %1477 = vmatmul.mubr.bf16.gmra.mrb[0].mxu0 %v926
      %v1478 = vpop.f32.mrb[0].mxu0
      %v1479 = vadd.f32 %v1007, %v1478
      %v1480 = vpop.f32.mrb[0].mxu0
      %v1481 = vadd.f32 %v1011, %v1480
      %v1482 = vpop.f32.mrb[0].mxu0
      %v1483 = vadd.f32 %v1007, %v1482
      %v1484 = vpop.f32.mrb[0].mxu0
      %v1485 = vadd.f32 %v1011, %v1484
      %1486 = vmatprep.mubr.bf16.mxu0 %v929
      %1487 = vmatmul.mubr.bf16.gmra.mrb[0].mxu0 %v928
      %v1488 = vpop.f32.mrb[0].mxu0
      %v1489 = vadd.f32 %v1007, %v1488
      %v1490 = vpop.f32.mrb[0].mxu0
      %v1491 = vadd.f32 %v1011, %v1490
      %v1492 = vpop.f32.mrb[0].mxu0
      %v1493 = vadd.f32 %v1007, %v1492
      %v1494 = vpop.f32.mrb[0].mxu0
      %v1495 = vadd.f32 %v1011, %v1494
      %1496 = vmatprep.mubr.bf16.mxu0 %v931
      %1497 = vmatmul.mubr.bf16.gmra.mrb[0].mxu0 %v930
      %v1498 = vpop.f32.mrb[0].mxu0
      %v1499 = vadd.f32 %v1007, %v1498
      %v1500 = vpop.f32.mrb[0].mxu0
      %v1501 = vadd.f32 %v1011, %v1500
      %v1502 = vpop.f32.mrb[0].mxu0
      %v1503 = vadd.f32 %v1007, %v1502
      %v1504 = vpop.f32.mrb[0].mxu0
      %v1505 = vadd.f32 %v1011, %v1504
      %1506 = vmatprep.mubr.bf16.mxu0 %v933
      %1507 = vmatmul.mubr.bf16.gmra.mrb[0].mxu0 %v932
      %v1508 = vpop.f32.mrb[0].mxu0
      %v1509 = vadd.f32 %v1007, %v1508
      %v1510 = vpop.f32.mrb[0].mxu0
      %v1511 = vadd.f32 %v1011, %v1510
      %v1512 = vpop.f32.mrb[0].mxu0
      %v1513 = vadd.f32 %v1007, %v1512
      %v1514 = vpop.f32.mrb[0].mxu0
      %v1515 = vadd.f32 %v1011, %v1514
      %1516 = vmatprep.mubr.bf16.mxu0 %v935
      %1517 = vmatmul.mubr.bf16.gmra.mrb[0].mxu0 %v934
      %v1518 = vpop.f32.mrb[0].mxu0
      %v1519 = vadd.f32 %v1007, %v1518
      %v1520 = vpop.f32.mrb[0].mxu0
      %v1521 = vadd.f32 %v1011, %v1520
      %v1522 = vpop.f32.mrb[0].mxu0
      %v1523 = vadd.f32 %v1007, %v1522
      %v1524 = vpop.f32.mrb[0].mxu0
      %v1525 = vadd.f32 %v1011, %v1524
      %1526 = vmatprep.mubr.bf16.mxu0 %v937
      %1527 = vmatmul.mubr.bf16.gmra.mrb[0].mxu0 %v936
      %v1528 = vpop.f32.mrb[0].mxu0
      %v1529 = vadd.f32 %v1007, %v1528
      %v1530 = vpop.f32.mrb[0].mxu0
      %v1531 = vadd.f32 %v1011, %v1530
      %v1532 = vpop.f32.mrb[0].mxu0
      %v1533 = vadd.f32 %v1007, %v1532
      %v1534 = vpop.f32.mrb[0].mxu0
      %v1535 = vadd.f32 %v1011, %v1534
      %1536 = vdwg.mxu0
      %1537 = vmatprep.subr.bf16.mxu0 %v1219
      %1538 = vmatpush1.bf16.msra.mxu0 %v1218
      %1539 = vmatprep.subr.bf16.mxu0 %v1223
      %1540 = vmatpush1.bf16.msra.mxu0 %v1222
      %1541 = vmatprep.subr.bf16.mxu0 %v1227
      %1542 = vmatpush1.bf16.msra.mxu0 %v1226
      %1543 = vmatprep.subr.bf16.mxu0 %v1231
      %1544 = vmatpush1.bf16.msra.mxu0 %v1230
      %1545 = vmatprep.subr.bf16.mxu0 %v1235
      %1546 = vmatpush1.bf16.msra.mxu0 %v1234
      %1547 = vmatprep.subr.bf16.mxu0 %v1239
      %1548 = vmatpush1.bf16.msra.mxu0 %v1238
      %1549 = vmatprep.subr.bf16.mxu0 %v1243
      %1550 = vmatpush1.bf16.msra.mxu0 %v1242
      %1551 = vmatprep.subr.bf16.mxu0 %v1247
      %1552 = vmatpush1.bf16.msra.mxu0 %v1246
      %1553 = vmatprep.subr.bf16.mxu0 %v1251
      %1554 = vmatpush1.bf16.msra.mxu0 %v1250
      %1555 = vmatprep.subr.bf16.mxu0 %v1255
      %1556 = vmatpush1.bf16.msra.mxu0 %v1254
      %1557 = vmatprep.subr.bf16.mxu0 %v1259
      %1558 = vmatpush1.bf16.msra.mxu0 %v1258
      %1559 = vmatprep.subr.bf16.mxu0 %v1263
      %1560 = vmatpush1.bf16.msra.mxu0 %v1262
      %1561 = vmatprep.subr.bf16.mxu0 %v1267
      %1562 = vmatpush1.bf16.msra.mxu0 %v1266
      %1563 = vmatprep.subr.bf16.mxu0 %v1271
      %1564 = vmatpush1.bf16.msra.mxu0 %v1270
      %1565 = vmatprep.subr.bf16.mxu0 %v1275
      %1566 = vmatpush1.bf16.msra.mxu0 %v1274
      %1567 = vmatprep.subr.bf16.mxu0 %v1279
      %1568 = vmatpush1.bf16.msra.mxu0 %v1278
      %1569 = vmatprep.mubr.bf16.mxu0 %v907
      %1570 = vmatmul.mubr.bf16.gmra.mrb[0].mxu0 %v906
      %v1571 = vpop.f32.mrb[0].mxu0
      %v1572 = vadd.f32 %v1015, %v1571
      %v1573 = vpop.f32.mrb[0].mxu0
      %v1574 = vadd.f32 %v1019, %v1573
      %v1575 = vpop.f32.mrb[0].mxu0
      %v1576 = vadd.f32 %v1015, %v1575
      %v1577 = vpop.f32.mrb[0].mxu0
      %v1578 = vadd.f32 %v1019, %v1577
      %1579 = vmatprep.mubr.bf16.mxu0 %v909
      %1580 = vmatmul.mubr.bf16.gmra.mrb[0].mxu0 %v908
      %v1581 = vpop.f32.mrb[0].mxu0
      %v1582 = vadd.f32 %v1015, %v1581
      %v1583 = vpop.f32.mrb[0].mxu0
      %v1584 = vadd.f32 %v1019, %v1583
      %v1585 = vpop.f32.mrb[0].mxu0
      %v1586 = vadd.f32 %v1015, %v1585
      %v1587 = vpop.f32.mrb[0].mxu0
      %v1588 = vadd.f32 %v1019, %v1587
      %1589 = vmatprep.mubr.bf16.mxu0 %v911
      %1590 = vmatmul.mubr.bf16.gmra.mrb[0].mxu0 %v910
      %v1591 = vpop.f32.mrb[0].mxu0
      %v1592 = vadd.f32 %v1015, %v1591
      %v1593 = vpop.f32.mrb[0].mxu0
      %v1594 = vadd.f32 %v1019, %v1593
      %v1595 = vpop.f32.mrb[0].mxu0
      %v1596 = vadd.f32 %v1015, %v1595
      %v1597 = vpop.f32.mrb[0].mxu0
      %v1598 = vadd.f32 %v1019, %v1597
      %1599 = vmatprep.mubr.bf16.mxu0 %v913
      %1600 = vmatmul.mubr.bf16.gmra.mrb[0].mxu0 %v912
      %v1601 = vpop.f32.mrb[0].mxu0
      %v1602 = vadd.f32 %v1015, %v1601
      %v1603 = vpop.f32.mrb[0].mxu0
      %v1604 = vadd.f32 %v1019, %v1603
      %v1605 = vpop.f32.mrb[0].mxu0
      %v1606 = vadd.f32 %v1015, %v1605
      %v1607 = vpop.f32.mrb[0].mxu0
      %v1608 = vadd.f32 %v1019, %v1607
      %1609 = vmatprep.mubr.bf16.mxu0 %v915
      %1610 = vmatmul.mubr.bf16.gmra.mrb[0].mxu0 %v914
      %v1611 = vpop.f32.mrb[0].mxu0
      %v1612 = vadd.f32 %v1015, %v1611
      %v1613 = vpop.f32.mrb[0].mxu0
      %v1614 = vadd.f32 %v1019, %v1613
      %v1615 = vpop.f32.mrb[0].mxu0
      %v1616 = vadd.f32 %v1015, %v1615
      %v1617 = vpop.f32.mrb[0].mxu0
      %v1618 = vadd.f32 %v1019, %v1617
      %1619 = vmatprep.mubr.bf16.mxu0 %v917
      %1620 = vmatmul.mubr.bf16.gmra.mrb[0].mxu0 %v916
      %v1621 = vpop.f32.mrb[0].mxu0
      %v1622 = vadd.f32 %v1015, %v1621
      %v1623 = vpop.f32.mrb[0].mxu0
      %v1624 = vadd.f32 %v1019, %v1623
      %v1625 = vpop.f32.mrb[0].mxu0
      %v1626 = vadd.f32 %v1015, %v1625
      %v1627 = vpop.f32.mrb[0].mxu0
      %v1628 = vadd.f32 %v1019, %v1627
      %1629 = vmatprep.mubr.bf16.mxu0 %v919
      %1630 = vmatmul.mubr.bf16.gmra.mrb[0].mxu0 %v918
      %v1631 = vpop.f32.mrb[0].mxu0
      %v1632 = vadd.f32 %v1015, %v1631
      %v1633 = vpop.f32.mrb[0].mxu0
      %v1634 = vadd.f32 %v1019, %v1633
      %v1635 = vpop.f32.mrb[0].mxu0
      %v1636 = vadd.f32 %v1015, %v1635
      %v1637 = vpop.f32.mrb[0].mxu0
      %v1638 = vadd.f32 %v1019, %v1637
      %1639 = vmatprep.mubr.bf16.mxu0 %v921
      %1640 = vmatmul.mubr.bf16.gmra.mrb[0].mxu0 %v920
      %v1641 = vpop.f32.mrb[0].mxu0
      %v1642 = vadd.f32 %v1015, %v1641
      %v1643 = vpop.f32.mrb[0].mxu0
      %v1644 = vadd.f32 %v1019, %v1643
      %v1645 = vpop.f32.mrb[0].mxu0
      %v1646 = vadd.f32 %v1015, %v1645
      %v1647 = vpop.f32.mrb[0].mxu0
      %v1648 = vadd.f32 %v1019, %v1647
      %1649 = vmatprep.mubr.bf16.mxu0 %v923
      %1650 = vmatmul.mubr.bf16.gmra.mrb[0].mxu0 %v922
      %v1651 = vpop.f32.mrb[0].mxu0
      %v1652 = vadd.f32 %v1015, %v1651
      %v1653 = vpop.f32.mrb[0].mxu0
      %v1654 = vadd.f32 %v1019, %v1653
      %v1655 = vpop.f32.mrb[0].mxu0
      %v1656 = vadd.f32 %v1015, %v1655
      %v1657 = vpop.f32.mrb[0].mxu0
      %v1658 = vadd.f32 %v1019, %v1657
      %1659 = vmatprep.mubr.bf16.mxu0 %v925
      %1660 = vmatmul.mubr.bf16.gmra.mrb[0].mxu0 %v924
      %v1661 = vpop.f32.mrb[0].mxu0
      %v1662 = vadd.f32 %v1015, %v1661
      %v1663 = vpop.f32.mrb[0].mxu0
      %v1664 = vadd.f32 %v1019, %v1663
      %v1665 = vpop.f32.mrb[0].mxu0
      %v1666 = vadd.f32 %v1015, %v1665
      %v1667 = vpop.f32.mrb[0].mxu0
      %v1668 = vadd.f32 %v1019, %v1667
      %1669 = vmatprep.mubr.bf16.mxu0 %v927
      %1670 = vmatmul.mubr.bf16.gmra.mrb[0].mxu0 %v926
      %v1671 = vpop.f32.mrb[0].mxu0
      %v1672 = vadd.f32 %v1015, %v1671
      %v1673 = vpop.f32.mrb[0].mxu0
      %v1674 = vadd.f32 %v1019, %v1673
      %v1675 = vpop.f32.mrb[0].mxu0
      %v1676 = vadd.f32 %v1015, %v1675
      %v1677 = vpop.f32.mrb[0].mxu0
      %v1678 = vadd.f32 %v1019, %v1677
      %1679 = vmatprep.mubr.bf16.mxu0 %v929
      %1680 = vmatmul.mubr.bf16.gmra.mrb[0].mxu0 %v928
      %v1681 = vpop.f32.mrb[0].mxu0
      %v1682 = vadd.f32 %v1015, %v1681
      %v1683 = vpop.f32.mrb[0].mxu0
      %v1684 = vadd.f32 %v1019, %v1683
      %v1685 = vpop.f32.mrb[0].mxu0
      %v1686 = vadd.f32 %v1015, %v1685
      %v1687 = vpop.f32.mrb[0].mxu0
      %v1688 = vadd.f32 %v1019, %v1687
      %1689 = vmatprep.mubr.bf16.mxu0 %v931
      %1690 = vmatmul.mubr.bf16.gmra.mrb[0].mxu0 %v930
      %v1691 = vpop.f32.mrb[0].mxu0
      %v1692 = vadd.f32 %v1015, %v1691
      %v1693 = vpop.f32.mrb[0].mxu0
      %v1694 = vadd.f32 %v1019, %v1693
      %v1695 = vpop.f32.mrb[0].mxu0
      %v1696 = vadd.f32 %v1015, %v1695
      %v1697 = vpop.f32.mrb[0].mxu0
      %v1698 = vadd.f32 %v1019, %v1697
      %1699 = vmatprep.mubr.bf16.mxu0 %v933
      %1700 = vmatmul.mubr.bf16.gmra.mrb[0].mxu0 %v932
      %v1701 = vpop.f32.mrb[0].mxu0
      %v1702 = vadd.f32 %v1015, %v1701
      %v1703 = vpop.f32.mrb[0].mxu0
      %v1704 = vadd.f32 %v1019, %v1703
      %v1705 = vpop.f32.mrb[0].mxu0
      %v1706 = vadd.f32 %v1015, %v1705
      %v1707 = vpop.f32.mrb[0].mxu0
      %v1708 = vadd.f32 %v1019, %v1707
      %1709 = vmatprep.mubr.bf16.mxu0 %v935
      %1710 = vmatmul.mubr.bf16.gmra.mrb[0].mxu0 %v934
      %v1711 = vpop.f32.mrb[0].mxu0
      %v1712 = vadd.f32 %v1015, %v1711
      %v1713 = vpop.f32.mrb[0].mxu0
      %v1714 = vadd.f32 %v1019, %v1713
      %v1715 = vpop.f32.mrb[0].mxu0
      %v1716 = vadd.f32 %v1015, %v1715
      %v1717 = vpop.f32.mrb[0].mxu0
      %v1718 = vadd.f32 %v1019, %v1717
      %1719 = vmatprep.mubr.bf16.mxu0 %v937
      %1720 = vmatmul.mubr.bf16.gmra.mrb[0].mxu0 %v936
      %v1721 = vpop.f32.mrb[0].mxu0
      %v1722 = vadd.f32 %v1015, %v1721
      %v1723 = vpop.f32.mrb[0].mxu0
      %v1724 = vadd.f32 %v1019, %v1723
      %v1725 = vpop.f32.mrb[0].mxu0
      %v1726 = vadd.f32 %v1015, %v1725
      %v1727 = vpop.f32.mrb[0].mxu0
      %v1728 = vadd.f32 %v1019, %v1727
      %1729 = vdwg.mxu0
      %vm1730 = vcmp.gt.f32.partialorder %v1379, 0.0
      %vm1731 = vcmp.gt.f32.partialorder %v1381, 0.0
      %vm1732 = vcmp.gt.f32.partialorder %v1572, 0.0
      %vm1733 = vcmp.gt.f32.partialorder %v1574, 0.0
      %vm1734 = vcmp.gt.f32.partialorder %v1383, 0.0
      %vm1735 = vcmp.gt.f32.partialorder %v1385, 0.0
      %vm1736 = vcmp.gt.f32.partialorder %v1576, 0.0
      %vm1737 = vcmp.gt.f32.partialorder %v1578, 0.0
      %vm1738 = vcmp.gt.f32.partialorder %v1389, 0.0
      %vm1739 = vcmp.gt.f32.partialorder %v1391, 0.0
      %vm1740 = vcmp.gt.f32.partialorder %v1582, 0.0
      %vm1741 = vcmp.gt.f32.partialorder %v1584, 0.0
      %vm1742 = vcmp.gt.f32.partialorder %v1393, 0.0
      %vm1743 = vcmp.gt.f32.partialorder %v1395, 0.0
      %vm1744 = vcmp.gt.f32.partialorder %v1586, 0.0
      %vm1745 = vcmp.gt.f32.partialorder %v1588, 0.0
      %vm1746 = vcmp.gt.f32.partialorder %v1399, 0.0
      %vm1747 = vcmp.gt.f32.partialorder %v1401, 0.0
      %vm1748 = vcmp.gt.f32.partialorder %v1592, 0.0
      %vm1749 = vcmp.gt.f32.partialorder %v1594, 0.0
      %vm1750 = vcmp.gt.f32.partialorder %v1403, 0.0
      %vm1751 = vcmp.gt.f32.partialorder %v1405, 0.0
      %vm1752 = vcmp.gt.f32.partialorder %v1596, 0.0
      %vm1753 = vcmp.gt.f32.partialorder %v1598, 0.0
      %vm1754 = vcmp.gt.f32.partialorder %v1409, 0.0
      %vm1755 = vcmp.gt.f32.partialorder %v1411, 0.0
      %vm1756 = vcmp.gt.f32.partialorder %v1602, 0.0
      %vm1757 = vcmp.gt.f32.partialorder %v1604, 0.0
      %vm1758 = vcmp.gt.f32.partialorder %v1413, 0.0
      %vm1759 = vcmp.gt.f32.partialorder %v1415, 0.0
      %vm1760 = vcmp.gt.f32.partialorder %v1606, 0.0
      %vm1761 = vcmp.gt.f32.partialorder %v1608, 0.0
      %vm1762 = vcmp.gt.f32.partialorder %v1419, 0.0
      %vm1763 = vcmp.gt.f32.partialorder %v1421, 0.0
      %vm1764 = vcmp.gt.f32.partialorder %v1612, 0.0
      %vm1765 = vcmp.gt.f32.partialorder %v1614, 0.0
      %vm1766 = vcmp.gt.f32.partialorder %v1423, 0.0
      %vm1767 = vcmp.gt.f32.partialorder %v1425, 0.0
      %vm1768 = vcmp.gt.f32.partialorder %v1616, 0.0
      %vm1769 = vcmp.gt.f32.partialorder %v1618, 0.0
      %vm1770 = vcmp.gt.f32.partialorder %v1429, 0.0
      %vm1771 = vcmp.gt.f32.partialorder %v1431, 0.0
      %vm1772 = vcmp.gt.f32.partialorder %v1622, 0.0
      %vm1773 = vcmp.gt.f32.partialorder %v1624, 0.0
      %vm1774 = vcmp.gt.f32.partialorder %v1433, 0.0
      %vm1775 = vcmp.gt.f32.partialorder %v1435, 0.0
      %vm1776 = vcmp.gt.f32.partialorder %v1626, 0.0
      %vm1777 = vcmp.gt.f32.partialorder %v1628, 0.0
      %vm1778 = vcmp.gt.f32.partialorder %v1439, 0.0
      %vm1779 = vcmp.gt.f32.partialorder %v1441, 0.0
      %vm1780 = vcmp.gt.f32.partialorder %v1632, 0.0
      %vm1781 = vcmp.gt.f32.partialorder %v1634, 0.0
      %vm1782 = vcmp.gt.f32.partialorder %v1443, 0.0
      %vm1783 = vcmp.gt.f32.partialorder %v1445, 0.0
      %vm1784 = vcmp.gt.f32.partialorder %v1636, 0.0
      %vm1785 = vcmp.gt.f32.partialorder %v1638, 0.0
      %vm1786 = vcmp.gt.f32.partialorder %v1449, 0.0
      %vm1787 = vcmp.gt.f32.partialorder %v1451, 0.0
      %vm1788 = vcmp.gt.f32.partialorder %v1642, 0.0
      %vm1789 = vcmp.gt.f32.partialorder %v1644, 0.0
      %vm1790 = vcmp.gt.f32.partialorder %v1453, 0.0
      %vm1791 = vcmp.gt.f32.partialorder %v1455, 0.0
      %vm1792 = vcmp.gt.f32.partialorder %v1646, 0.0
      %vm1793 = vcmp.gt.f32.partialorder %v1648, 0.0
      %vm1794 = vcmp.gt.f32.partialorder %v1459, 0.0
      %vm1795 = vcmp.gt.f32.partialorder %v1461, 0.0
      %vm1796 = vcmp.gt.f32.partialorder %v1652, 0.0
      %vm1797 = vcmp.gt.f32.partialorder %v1654, 0.0
      %vm1798 = vcmp.gt.f32.partialorder %v1463, 0.0
      %vm1799 = vcmp.gt.f32.partialorder %v1465, 0.0
      %vm1800 = vcmp.gt.f32.partialorder %v1656, 0.0
      %vm1801 = vcmp.gt.f32.partialorder %v1658, 0.0
      %vm1802 = vcmp.gt.f32.partialorder %v1469, 0.0
      %vm1803 = vcmp.gt.f32.partialorder %v1471, 0.0
      %vm1804 = vcmp.gt.f32.partialorder %v1662, 0.0
      %vm1805 = vcmp.gt.f32.partialorder %v1664, 0.0
      %vm1806 = vcmp.gt.f32.partialorder %v1473, 0.0
      %vm1807 = vcmp.gt.f32.partialorder %v1475, 0.0
      %vm1808 = vcmp.gt.f32.partialorder %v1666, 0.0
      %vm1809 = vcmp.gt.f32.partialorder %v1668, 0.0
      %vm1810 = vcmp.gt.f32.partialorder %v1479, 0.0
      %vm1811 = vcmp.gt.f32.partialorder %v1481, 0.0
      %vm1812 = vcmp.gt.f32.partialorder %v1672, 0.0
      %vm1813 = vcmp.gt.f32.partialorder %v1674, 0.0
      %vm1814 = vcmp.gt.f32.partialorder %v1483, 0.0
      %vm1815 = vcmp.gt.f32.partialorder %v1485, 0.0
      %vm1816 = vcmp.gt.f32.partialorder %v1676, 0.0
      %vm1817 = vcmp.gt.f32.partialorder %v1678, 0.0
      %vm1818 = vcmp.gt.f32.partialorder %v1489, 0.0
      %vm1819 = vcmp.gt.f32.partialorder %v1491, 0.0
      %vm1820 = vcmp.gt.f32.partialorder %v1682, 0.0
      %vm1821 = vcmp.gt.f32.partialorder %v1684, 0.0
      %vm1822 = vcmp.gt.f32.partialorder %v1493, 0.0
      %vm1823 = vcmp.gt.f32.partialorder %v1495, 0.0
      %vm1824 = vcmp.gt.f32.partialorder %v1686, 0.0
      %vm1825 = vcmp.gt.f32.partialorder %v1688, 0.0
      %vm1826 = vcmp.gt.f32.partialorder %v1499, 0.0
      %vm1827 = vcmp.gt.f32.partialorder %v1501, 0.0
      %vm1828 = vcmp.gt.f32.partialorder %v1692, 0.0
      %vm1829 = vcmp.gt.f32.partialorder %v1694, 0.0
      %vm1830 = vcmp.gt.f32.partialorder %v1503, 0.0
      %vm1831 = vcmp.gt.f32.partialorder %v1505, 0.0
      %vm1832 = vcmp.gt.f32.partialorder %v1696, 0.0
      %vm1833 = vcmp.gt.f32.partialorder %v1698, 0.0
      %vm1834 = vcmp.gt.f32.partialorder %v1509, 0.0
      %vm1835 = vcmp.gt.f32.partialorder %v1511, 0.0
      %vm1836 = vcmp.gt.f32.partialorder %v1702, 0.0
      %vm1837 = vcmp.gt.f32.partialorder %v1704, 0.0
      %vm1838 = vcmp.gt.f32.partialorder %v1513, 0.0
      %vm1839 = vcmp.gt.f32.partialorder %v1515, 0.0
      %vm1840 = vcmp.gt.f32.partialorder %v1706, 0.0
      %vm1841 = vcmp.gt.f32.partialorder %v1708, 0.0
      %vm1842 = vcmp.gt.f32.partialorder %v1519, 0.0
      %vm1843 = vcmp.gt.f32.partialorder %v1521, 0.0
      %vm1844 = vcmp.gt.f32.partialorder %v1712, 0.0
      %vm1845 = vcmp.gt.f32.partialorder %v1714, 0.0
      %vm1846 = vcmp.gt.f32.partialorder %v1523, 0.0
      %vm1847 = vcmp.gt.f32.partialorder %v1525, 0.0
      %vm1848 = vcmp.gt.f32.partialorder %v1716, 0.0
      %vm1849 = vcmp.gt.f32.partialorder %v1718, 0.0
      %vm1850 = vcmp.gt.f32.partialorder %v1529, 0.0
      %vm1851 = vcmp.gt.f32.partialorder %v1531, 0.0
      %vm1852 = vcmp.gt.f32.partialorder %v1722, 0.0
      %vm1853 = vcmp.gt.f32.partialorder %v1724, 0.0
      %vm1854 = vcmp.gt.f32.partialorder %v1533, 0.0
      %vm1855 = vcmp.gt.f32.partialorder %v1535, 0.0
      %vm1856 = vcmp.gt.f32.partialorder %v1726, 0.0
      %vm1857 = vcmp.gt.f32.partialorder %v1728, 0.0
      %v1858 = vmul.f32 %v1379, 0.2
      %v1859 = vmul.f32 %v1381, 0.2
      %v1860 = vmul.f32 %v1572, 0.2
      %v1861 = vmul.f32 %v1574, 0.2
      %v1862 = vmul.f32 %v1383, 0.2
      %v1863 = vmul.f32 %v1385, 0.2
      %v1864 = vmul.f32 %v1576, 0.2
      %v1865 = vmul.f32 %v1578, 0.2
      %v1866 = vmul.f32 %v1389, 0.2
      %v1867 = vmul.f32 %v1391, 0.2
      %v1868 = vmul.f32 %v1582, 0.2
      %v1869 = vmul.f32 %v1584, 0.2
      %v1870 = vmul.f32 %v1393, 0.2
      %v1871 = vmul.f32 %v1395, 0.2
      %v1872 = vmul.f32 %v1586, 0.2
      %v1873 = vmul.f32 %v1588, 0.2
      %v1874 = vmul.f32 %v1399, 0.2
      %v1875 = vmul.f32 %v1401, 0.2
      %v1876 = vmul.f32 %v1592, 0.2
      %v1877 = vmul.f32 %v1594, 0.2
      %v1878 = vmul.f32 %v1403, 0.2
      %v1879 = vmul.f32 %v1405, 0.2
      %v1880 = vmul.f32 %v1596, 0.2
      %v1881 = vmul.f32 %v1598, 0.2
      %v1882 = vmul.f32 %v1409, 0.2
      %v1883 = vmul.f32 %v1411, 0.2
      %v1884 = vmul.f32 %v1602, 0.2
      %v1885 = vmul.f32 %v1604, 0.2
      %v1886 = vmul.f32 %v1413, 0.2
      %v1887 = vmul.f32 %v1415, 0.2
      %v1888 = vmul.f32 %v1606, 0.2
      %v1889 = vmul.f32 %v1608, 0.2
      %v1890 = vmul.f32 %v1419, 0.2
      %v1891 = vmul.f32 %v1421, 0.2
      %v1892 = vmul.f32 %v1612, 0.2
      %v1893 = vmul.f32 %v1614, 0.2
      %v1894 = vmul.f32 %v1423, 0.2
      %v1895 = vmul.f32 %v1425, 0.2
      %v1896 = vmul.f32 %v1616, 0.2
      %v1897 = vmul.f32 %v1618, 0.2
      %v1898 = vmul.f32 %v1429, 0.2
      %v1899 = vmul.f32 %v1431, 0.2
      %v1900 = vmul.f32 %v1622, 0.2
      %v1901 = vmul.f32 %v1624, 0.2
      %v1902 = vmul.f32 %v1433, 0.2
      %v1903 = vmul.f32 %v1435, 0.2
      %v1904 = vmul.f32 %v1626, 0.2
      %v1905 = vmul.f32 %v1628, 0.2
      %v1906 = vmul.f32 %v1439, 0.2
      %v1907 = vmul.f32 %v1441, 0.2
      %v1908 = vmul.f32 %v1632, 0.2
      %v1909 = vmul.f32 %v1634, 0.2
      %v1910 = vmul.f32 %v1443, 0.2
      %v1911 = vmul.f32 %v1445, 0.2
      %v1912 = vmul.f32 %v1636, 0.2
      %v1913 = vmul.f32 %v1638, 0.2
      %v1914 = vmul.f32 %v1449, 0.2
      %v1915 = vmul.f32 %v1451, 0.2
      %v1916 = vmul.f32 %v1642, 0.2
      %v1917 = vmul.f32 %v1644, 0.2
      %v1918 = vmul.f32 %v1453, 0.2
      %v1919 = vmul.f32 %v1455, 0.2
      %v1920 = vmul.f32 %v1646, 0.2
      %v1921 = vmul.f32 %v1648, 0.2
      %v1922 = vmul.f32 %v1459, 0.2
      %v1923 = vmul.f32 %v1461, 0.2
      %v1924 = vmul.f32 %v1652, 0.2
      %v1925 = vmul.f32 %v1654, 0.2
      %v1926 = vmul.f32 %v1463, 0.2
      %v1927 = vmul.f32 %v1465, 0.2
      %v1928 = vmul.f32 %v1656, 0.2
      %v1929 = vmul.f32 %v1658, 0.2
      %v1930 = vmul.f32 %v1469, 0.2
      %v1931 = vmul.f32 %v1471, 0.2
      %v1932 = vmul.f32 %v1662, 0.2
      %v1933 = vmul.f32 %v1664, 0.2
      %v1934 = vmul.f32 %v1473, 0.2
      %v1935 = vmul.f32 %v1475, 0.2
      %v1936 = vmul.f32 %v1666, 0.2
      %v1937 = vmul.f32 %v1668, 0.2
      %v1938 = vmul.f32 %v1479, 0.2
      %v1939 = vmul.f32 %v1481, 0.2
      %v1940 = vmul.f32 %v1672, 0.2
      %v1941 = vmul.f32 %v1674, 0.2
      %v1942 = vmul.f32 %v1483, 0.2
      %v1943 = vmul.f32 %v1485, 0.2
      %v1944 = vmul.f32 %v1676, 0.2
      %v1945 = vmul.f32 %v1678, 0.2
      %v1946 = vmul.f32 %v1489, 0.2
      %v1947 = vmul.f32 %v1491, 0.2
      %v1948 = vmul.f32 %v1682, 0.2
      %v1949 = vmul.f32 %v1684, 0.2
      %v1950 = vmul.f32 %v1493, 0.2
      %v1951 = vmul.f32 %v1495, 0.2
      %v1952 = vmul.f32 %v1686, 0.2
      %v1953 = vmul.f32 %v1688, 0.2
      %v1954 = vmul.f32 %v1499, 0.2
      %v1955 = vmul.f32 %v1501, 0.2
      %v1956 = vmul.f32 %v1692, 0.2
      %v1957 = vmul.f32 %v1694, 0.2
      %v1958 = vmul.f32 %v1503, 0.2
      %v1959 = vmul.f32 %v1505, 0.2
      %v1960 = vmul.f32 %v1696, 0.2
      %v1961 = vmul.f32 %v1698, 0.2
      %v1962 = vmul.f32 %v1509, 0.2
      %v1963 = vmul.f32 %v1511, 0.2
      %v1964 = vmul.f32 %v1702, 0.2
      %v1965 = vmul.f32 %v1704, 0.2
      %v1966 = vmul.f32 %v1513, 0.2
      %v1967 = vmul.f32 %v1515, 0.2
      %v1968 = vmul.f32 %v1706, 0.2
      %v1969 = vmul.f32 %v1708, 0.2
      %v1970 = vmul.f32 %v1519, 0.2
      %v1971 = vmul.f32 %v1521, 0.2
      %v1972 = vmul.f32 %v1712, 0.2
      %v1973 = vmul.f32 %v1714, 0.2
      %v1974 = vmul.f32 %v1523, 0.2
      %v1975 = vmul.f32 %v1525, 0.2
      %v1976 = vmul.f32 %v1716, 0.2
      %v1977 = vmul.f32 %v1718, 0.2
      %v1978 = vmul.f32 %v1529, 0.2
      %v1979 = vmul.f32 %v1531, 0.2
      %v1980 = vmul.f32 %v1722, 0.2
      %v1981 = vmul.f32 %v1724, 0.2
      %v1982 = vmul.f32 %v1533, 0.2
      %v1983 = vmul.f32 %v1535, 0.2
      %v1984 = vmul.f32 %v1726, 0.2
      %v1985 = vmul.f32 %v1728, 0.2
      %v1986 = vsel %vm1730, %v1379, %v1858
      %v1987 = vsel %vm1731, %v1381, %v1859
      %v1988 = vsel %vm1732, %v1572, %v1860
      %v1989 = vsel %vm1733, %v1574, %v1861
      %v1990 = vsel %vm1734, %v1383, %v1862
      %v1991 = vsel %vm1735, %v1385, %v1863
      %v1992 = vsel %vm1736, %v1576, %v1864
      %v1993 = vsel %vm1737, %v1578, %v1865
      %v1994 = vsel %vm1738, %v1389, %v1866
      %v1995 = vsel %vm1739, %v1391, %v1867
      %v1996 = vsel %vm1740, %v1582, %v1868
      %v1997 = vsel %vm1741, %v1584, %v1869
      %v1998 = vsel %vm1742, %v1393, %v1870
      %v1999 = vsel %vm1743, %v1395, %v1871
      %v2000 = vsel %vm1744, %v1586, %v1872
      %v2001 = vsel %vm1745, %v1588, %v1873
      %v2002 = vsel %vm1746, %v1399, %v1874
      %v2003 = vsel %vm1747, %v1401, %v1875
      %v2004 = vsel %vm1748, %v1592, %v1876
      %v2005 = vsel %vm1749, %v1594, %v1877
      %v2006 = vsel %vm1750, %v1403, %v1878
      %v2007 = vsel %vm1751, %v1405, %v1879
      %v2008 = vsel %vm1752, %v1596, %v1880
      %v2009 = vsel %vm1753, %v1598, %v1881
      %v2010 = vsel %vm1754, %v1409, %v1882
      %v2011 = vsel %vm1755, %v1411, %v1883
      %v2012 = vsel %vm1756, %v1602, %v1884
      %v2013 = vsel %vm1757, %v1604, %v1885
      %v2014 = vsel %vm1758, %v1413, %v1886
      %v2015 = vsel %vm1759, %v1415, %v1887
      %v2016 = vsel %vm1760, %v1606, %v1888
      %v2017 = vsel %vm1761, %v1608, %v1889
      %v2018 = vsel %vm1762, %v1419, %v1890
      %v2019 = vsel %vm1763, %v1421, %v1891
      %v2020 = vsel %vm1764, %v1612, %v1892
      %v2021 = vsel %vm1765, %v1614, %v1893
      %v2022 = vsel %vm1766, %v1423, %v1894
      %v2023 = vsel %vm1767, %v1425, %v1895
      %v2024 = vsel %vm1768, %v1616, %v1896
      %v2025 = vsel %vm1769, %v1618, %v1897
      %v2026 = vsel %vm1770, %v1429, %v1898
      %v2027 = vsel %vm1771, %v1431, %v1899
      %v2028 = vsel %vm1772, %v1622, %v1900
      %v2029 = vsel %vm1773, %v1624, %v1901
      %v2030 = vsel %vm1774, %v1433, %v1902
      %v2031 = vsel %vm1775, %v1435, %v1903
      %v2032 = vsel %vm1776, %v1626, %v1904
      %v2033 = vsel %vm1777, %v1628, %v1905
      %v2034 = vsel %vm1778, %v1439, %v1906
      %v2035 = vsel %vm1779, %v1441, %v1907
      %v2036 = vsel %vm1780, %v1632, %v1908
      %v2037 = vsel %vm1781, %v1634, %v1909
      %v2038 = vsel %vm1782, %v1443, %v1910
      %v2039 = vsel %vm1783, %v1445, %v1911
      %v2040 = vsel %vm1784, %v1636, %v1912
      %v2041 = vsel %vm1785, %v1638, %v1913
      %v2042 = vsel %vm1786, %v1449, %v1914
      %v2043 = vsel %vm1787, %v1451, %v1915
      %v2044 = vsel %vm1788, %v1642, %v1916
      %v2045 = vsel %vm1789, %v1644, %v1917
      %v2046 = vsel %vm1790, %v1453, %v1918
      %v2047 = vsel %vm1791, %v1455, %v1919
      %v2048 = vsel %vm1792, %v1646, %v1920
      %v2049 = vsel %vm1793, %v1648, %v1921
      %v2050 = vsel %vm1794, %v1459, %v1922
      %v2051 = vsel %vm1795, %v1461, %v1923
      %v2052 = vsel %vm1796, %v1652, %v1924
      %v2053 = vsel %vm1797, %v1654, %v1925
      %v2054 = vsel %vm1798, %v1463, %v1926
      %v2055 = vsel %vm1799, %v1465, %v1927
      %v2056 = vsel %vm1800, %v1656, %v1928
      %v2057 = vsel %vm1801, %v1658, %v1929
      %v2058 = vsel %vm1802, %v1469, %v1930
      %v2059 = vsel %vm1803, %v1471, %v1931
      %v2060 = vsel %vm1804, %v1662, %v1932
      %v2061 = vsel %vm1805, %v1664, %v1933
      %v2062 = vsel %vm1806, %v1473, %v1934
      %v2063 = vsel %vm1807, %v1475, %v1935
      %v2064 = vsel %vm1808, %v1666, %v1936
      %v2065 = vsel %vm1809, %v1668, %v1937
      %v2066 = vsel %vm1810, %v1479, %v1938
      %v2067 = vsel %vm1811, %v1481, %v1939
      %v2068 = vsel %vm1812, %v1672, %v1940
      %v2069 = vsel %vm1813, %v1674, %v1941
      %v2070 = vsel %vm1814, %v1483, %v1942
      %v2071 = vsel %vm1815, %v1485, %v1943
      %v2072 = vsel %vm1816, %v1676, %v1944
      %v2073 = vsel %vm1817, %v1678, %v1945
      %v2074 = vsel %vm1818, %v1489, %v1946
      %v2075 = vsel %vm1819, %v1491, %v1947
      %v2076 = vsel %vm1820, %v1682, %v1948
      %v2077 = vsel %vm1821, %v1684, %v1949
      %v2078 = vsel %vm1822, %v1493, %v1950
      %v2079 = vsel %vm1823, %v1495, %v1951
      %v2080 = vsel %vm1824, %v1686, %v1952
      %v2081 = vsel %vm1825, %v1688, %v1953
      %v2082 = vsel %vm1826, %v1499, %v1954
      %v2083 = vsel %vm1827, %v1501, %v1955
      %v2084 = vsel %vm1828, %v1692, %v1956
      %v2085 = vsel %vm1829, %v1694, %v1957
      %v2086 = vsel %vm1830, %v1503, %v1958
      %v2087 = vsel %vm1831, %v1505, %v1959
      %v2088 = vsel %vm1832, %v1696, %v1960
      %v2089 = vsel %vm1833, %v1698, %v1961
      %v2090 = vsel %vm1834, %v1509, %v1962
      %v2091 = vsel %vm1835, %v1511, %v1963
      %v2092 = vsel %vm1836, %v1702, %v1964
      %v2093 = vsel %vm1837, %v1704, %v1965
      %v2094 = vsel %vm1838, %v1513, %v1966
      %v2095 = vsel %vm1839, %v1515, %v1967
      %v2096 = vsel %vm1840, %v1706, %v1968
      %v2097 = vsel %vm1841, %v1708, %v1969
      %v2098 = vsel %vm1842, %v1519, %v1970
      %v2099 = vsel %vm1843, %v1521, %v1971
      %v2100 = vsel %vm1844, %v1712, %v1972
      %v2101 = vsel %vm1845, %v1714, %v1973
      %v2102 = vsel %vm1846, %v1523, %v1974
      %v2103 = vsel %vm1847, %v1525, %v1975
      %v2104 = vsel %vm1848, %v1716, %v1976
      %v2105 = vsel %vm1849, %v1718, %v1977
      %v2106 = vsel %vm1850, %v1529, %v1978
      %v2107 = vsel %vm1851, %v1531, %v1979
      %v2108 = vsel %vm1852, %v1722, %v1980
      %v2109 = vsel %vm1853, %v1724, %v1981
      %v2110 = vsel %vm1854, %v1533, %v1982
      %v2111 = vsel %vm1855, %v1535, %v1983
      %v2112 = vsel %vm1856, %v1726, %v1984
      %v2113 = vsel %vm1857, %v1728, %v1985
      %v2114 = vpack.c.bf16 %v1990, %v1986
      %v2115 = vpack.c.bf16 %v1991, %v1987
      %v2116 = vpack.c.bf16 %v1992, %v1988
      %v2117 = vpack.c.bf16 %v1993, %v1989
      %v2118 = vpack.c.bf16 %v1998, %v1994
      %v2119 = vpack.c.bf16 %v1999, %v1995
      %v2120 = vpack.c.bf16 %v2000, %v1996
      %v2121 = vpack.c.bf16 %v2001, %v1997
      %v2122 = vpack.c.bf16 %v2006, %v2002
      %v2123 = vpack.c.bf16 %v2007, %v2003
      %v2124 = vpack.c.bf16 %v2008, %v2004
      %v2125 = vpack.c.bf16 %v2009, %v2005
      %v2126 = vpack.c.bf16 %v2014, %v2010
      %v2127 = vpack.c.bf16 %v2015, %v2011
      %v2128 = vpack.c.bf16 %v2016, %v2012
      %v2129 = vpack.c.bf16 %v2017, %v2013
      %v2130 = vpack.c.bf16 %v2022, %v2018
      %v2131 = vpack.c.bf16 %v2023, %v2019
      %v2132 = vpack.c.bf16 %v2024, %v2020
      %v2133 = vpack.c.bf16 %v2025, %v2021
      %v2134 = vpack.c.bf16 %v2030, %v2026
      %v2135 = vpack.c.bf16 %v2031, %v2027
      %v2136 = vpack.c.bf16 %v2032, %v2028
      %v2137 = vpack.c.bf16 %v2033, %v2029
      %v2138 = vpack.c.bf16 %v2038, %v2034
      %v2139 = vpack.c.bf16 %v2039, %v2035
      %v2140 = vpack.c.bf16 %v2040, %v2036
      %v2141 = vpack.c.bf16 %v2041, %v2037
      %v2142 = vpack.c.bf16 %v2046, %v2042
      %v2143 = vpack.c.bf16 %v2047, %v2043
      %v2144 = vpack.c.bf16 %v2048, %v2044
      %v2145 = vpack.c.bf16 %v2049, %v2045
      %v2146 = vpack.c.bf16 %v2054, %v2050
      %v2147 = vpack.c.bf16 %v2055, %v2051
      %v2148 = vpack.c.bf16 %v2056, %v2052
      %v2149 = vpack.c.bf16 %v2057, %v2053
      %v2150 = vpack.c.bf16 %v2062, %v2058
      %v2151 = vpack.c.bf16 %v2063, %v2059
      %v2152 = vpack.c.bf16 %v2064, %v2060
      %v2153 = vpack.c.bf16 %v2065, %v2061
      %v2154 = vpack.c.bf16 %v2070, %v2066
      %v2155 = vpack.c.bf16 %v2071, %v2067
      %v2156 = vpack.c.bf16 %v2072, %v2068
      %v2157 = vpack.c.bf16 %v2073, %v2069
      %v2158 = vpack.c.bf16 %v2078, %v2074
      %v2159 = vpack.c.bf16 %v2079, %v2075
      %v2160 = vpack.c.bf16 %v2080, %v2076
      %v2161 = vpack.c.bf16 %v2081, %v2077
      %v2162 = vpack.c.bf16 %v2086, %v2082
      %v2163 = vpack.c.bf16 %v2087, %v2083
      %v2164 = vpack.c.bf16 %v2088, %v2084
      %v2165 = vpack.c.bf16 %v2089, %v2085
      %v2166 = vpack.c.bf16 %v2094, %v2090
      %v2167 = vpack.c.bf16 %v2095, %v2091
      %v2168 = vpack.c.bf16 %v2096, %v2092
      %v2169 = vpack.c.bf16 %v2097, %v2093
      %v2170 = vpack.c.bf16 %v2102, %v2098
      %v2171 = vpack.c.bf16 %v2103, %v2099
      %v2172 = vpack.c.bf16 %v2104, %v2100
      %v2173 = vpack.c.bf16 %v2105, %v2101
      %v2174 = vpack.c.bf16 %v2110, %v2106
      %v2175 = vpack.c.bf16 %v2111, %v2107
      %v2176 = vpack.c.bf16 %v2112, %v2108
      %v2177 = vpack.c.bf16 %v2113, %v2109
      %v2178 = vld [vmem:[%s5] sm:$0xff]
      %v2179 = vld [vmem:[%s5 + $0x8] sm:$0xff]
      %v2180 = vld [vmem:[%s5 + $0x10] sm:$0xff]
      %v2181 = vld [vmem:[%s5 + $0x18] sm:$0xf]
      %v2182 = vld [vmem:[%s5 + $0x1c] sm:$0xff]
      %v2183 = vld [vmem:[%s5 + $0x24] sm:$0xff]
      %v2184 = vld [vmem:[%s5 + $0x2c] sm:$0xff]
      %v2185 = vld [vmem:[%s5 + $0x34] sm:$0xf]
      %v2186 = vld [vmem:[%s5 + $0x38] sm:$0xff]
      %v2187 = vld [vmem:[%s5 + $0x40] sm:$0xff]
      %v2188 = vld [vmem:[%s5 + $0x48] sm:$0xff]
      %v2189 = vld [vmem:[%s5 + $0x50] sm:$0xf]
      %v2190 = vld [vmem:[%s5 + $0x54] sm:$0xff]
      %v2191 = vld [vmem:[%s5 + $0x5c] sm:$0xff]
      %v2192 = vld [vmem:[%s5 + $0x64] sm:$0xff]
      %v2193 = vld [vmem:[%s5 + $0x6c] sm:$0xf]
      %v2194 = vld [vmem:[%s5 + $0x70] sm:$0xff]
      %v2195 = vld [vmem:[%s5 + $0x78] sm:$0xff]
      %v2196 = vld [vmem:[%s5 + $0x80] sm:$0xff]
      %v2197 = vld [vmem:[%s5 + $0x88] sm:$0xf]
      %v2198 = vld [vmem:[%s5 + $0x8c] sm:$0xff]
      %v2199 = vld [vmem:[%s5 + $0x94] sm:$0xff]
      %v2200 = vld [vmem:[%s5 + $0x9c] sm:$0xff]
      %v2201 = vld [vmem:[%s5 + $0xa4] sm:$0xf]
      %v2202 = vld [vmem:[%s5 + $0xa8] sm:$0xff]
      %v2203 = vld [vmem:[%s5 + $0xb0] sm:$0xff]
      %v2204 = vld [vmem:[%s5 + $0xb8] sm:$0xff]
      %v2205 = vld [vmem:[%s5 + $0xc0] sm:$0xf]
      %v2206 = vld [vmem:[%s5 + $0xc4] sm:$0xff]
      %v2207 = vld [vmem:[%s5 + $0xcc] sm:$0xff]
      %v2208 = vld [vmem:[%s5 + $0xd4] sm:$0xff]
      %v2209 = vld [vmem:[%s5 + $0xdc] sm:$0xf]
      %v2210 = vld [vmem:[%s5 + $0xe0] sm:$0xff]
      %v2211 = vld [vmem:[%s5 + $0xe8] sm:$0xff]
      %v2212 = vld [vmem:[%s5 + $0xf0] sm:$0xff]
      %v2213 = vld [vmem:[%s5 + $0xf8] sm:$0xf]
      %v2214 = vld [vmem:[%s5 + $0xfc] sm:$0xff]
      %v2215 = vld [vmem:[%s5 + $0x104] sm:$0xff]
      %v2216 = vld [vmem:[%s5 + $0x10c] sm:$0xff]
      %v2217 = vld [vmem:[%s5 + $0x114] sm:$0xf]
      %v2218 = vld [vmem:[%s5 + $0x118] sm:$0xff]
      %v2219 = vld [vmem:[%s5 + $0x120] sm:$0xff]
      %v2220 = vld [vmem:[%s5 + $0x128] sm:$0xff]
      %v2221 = vld [vmem:[%s5 + $0x130] sm:$0xf]
      %v2222 = vld [vmem:[%s5 + $0x134] sm:$0xff]
      %v2223 = vld [vmem:[%s5 + $0x13c] sm:$0xff]
      %v2224 = vld [vmem:[%s5 + $0x144] sm:$0xff]
      %v2225 = vld [vmem:[%s5 + $0x14c] sm:$0xf]
      %v2226 = vld [vmem:[%s5 + $0x150] sm:$0xff]
      %v2227 = vld [vmem:[%s5 + $0x158] sm:$0xff]
      %v2228 = vld [vmem:[%s5 + $0x160] sm:$0xff]
      %v2229 = vld [vmem:[%s5 + $0x168] sm:$0xf]
      %v2230 = vld [vmem:[%s5 + $0x16c] sm:$0xff]
      %v2231 = vld [vmem:[%s5 + $0x174] sm:$0xff]
      %v2232 = vld [vmem:[%s5 + $0x17c] sm:$0xff]
      %v2233 = vld [vmem:[%s5 + $0x184] sm:$0xf]
      %v2234 = vld [vmem:[%s5 + $0x188] sm:$0xff]
      %v2235 = vld [vmem:[%s5 + $0x190] sm:$0xff]
      %v2236 = vld [vmem:[%s5 + $0x198] sm:$0xff]
      %v2237 = vld [vmem:[%s5 + $0x1a0] sm:$0xf]
      %v2238 = vld [vmem:[%s5 + $0x1a4] sm:$0xff]
      %v2239 = vld [vmem:[%s5 + $0x1ac] sm:$0xff]
      %v2240 = vld [vmem:[%s5 + $0x1b4] sm:$0xff]
      %v2241 = vld [vmem:[%s5 + $0x1bc] sm:$0xf]
      %v2242 = vld [vmem:[%s5 + $0x1c0] sm:$0xff]
      %v2243 = vld [vmem:[%s5 + $0x1c8] sm:$0xff]
      %v2244 = vld [vmem:[%s5 + $0x1d0] sm:$0xff]
      %v2245 = vld [vmem:[%s5 + $0x1d8] sm:$0xf]
      %v2246 = vld [vmem:[%s5 + $0x1dc] sm:$0xff]
      %v2247 = vld [vmem:[%s5 + $0x1e4] sm:$0xff]
      %v2248 = vld [vmem:[%s5 + $0x1ec] sm:$0xff]
      %v2249 = vld [vmem:[%s5 + $0x1f4] sm:$0xf]
      %v2250 = vld [vmem:[%s5 + $0x1f8] sm:$0xff]
      %v2251 = vld [vmem:[%s5 + $0x200] sm:$0xff]
      %v2252 = vld [vmem:[%s5 + $0x208] sm:$0xff]
      %v2253 = vld [vmem:[%s5 + $0x210] sm:$0xf]
      %v2254 = vld [vmem:[%s5 + $0x214] sm:$0xff]
      %v2255 = vld [vmem:[%s5 + $0x21c] sm:$0xff]
      %v2256 = vld [vmem:[%s5 + $0x224] sm:$0xff]
      %v2257 = vld [vmem:[%s5 + $0x22c] sm:$0xf]
      %v2258 = vld [vmem:[%s5 + $0x230] sm:$0xff]
      %v2259 = vld [vmem:[%s5 + $0x238] sm:$0xff]
      %v2260 = vld [vmem:[%s5 + $0x240] sm:$0xff]
      %v2261 = vld [vmem:[%s5 + $0x248] sm:$0xf]
      %v2262 = vld [vmem:[%s5 + $0x24c] sm:$0xff]
      %v2263 = vld [vmem:[%s5 + $0x254] sm:$0xff]
      %v2264 = vld [vmem:[%s5 + $0x25c] sm:$0xff]
      %v2265 = vld [vmem:[%s5 + $0x264] sm:$0xf]
      %v2266 = vld [vmem:[%s5 + $0x268] sm:$0xff]
      %v2267 = vld [vmem:[%s5 + $0x270] sm:$0xff]
      %v2268 = vld [vmem:[%s5 + $0x278] sm:$0xff]
      %v2269 = vld [vmem:[%s5 + $0x280] sm:$0xf]
      %v2270 = vld [vmem:[%s5 + $0x284] sm:$0xff]
      %v2271 = vld [vmem:[%s5 + $0x28c] sm:$0xff]
      %v2272 = vld [vmem:[%s5 + $0x294] sm:$0xff]
      %v2273 = vld [vmem:[%s5 + $0x29c] sm:$0xf]
      %v2274 = vld [vmem:[%s5 + $0x2a0] sm:$0xff]
      %v2275 = vld [vmem:[%s5 + $0x2a8] sm:$0xff]
      %v2276 = vld [vmem:[%s5 + $0x2b0] sm:$0xff]
      %v2277 = vld [vmem:[%s5 + $0x2b8] sm:$0xf]
      %v2278 = vld [vmem:[%s5 + $0x2bc] sm:$0xff]
      %v2279 = vld [vmem:[%s5 + $0x2c4] sm:$0xff]
      %v2280 = vld [vmem:[%s5 + $0x2cc] sm:$0xff]
      %v2281 = vld [vmem:[%s5 + $0x2d4] sm:$0xf]
      %v2282 = vld [vmem:[%s5 + $0x2d8] sm:$0xff]
      %v2283 = vld [vmem:[%s5 + $0x2e0] sm:$0xff]
      %v2284 = vld [vmem:[%s5 + $0x2e8] sm:$0xff]
      %v2285 = vld [vmem:[%s5 + $0x2f0] sm:$0xf]
      %v2286 = vld [vmem:[%s5 + $0x2f4] sm:$0xff]
      %v2287 = vld [vmem:[%s5 + $0x2fc] sm:$0xff]
      %v2288 = vld [vmem:[%s5 + $0x304] sm:$0xff]
      %v2289 = vld [vmem:[%s5 + $0x30c] sm:$0xf]
      %v2290 = vld [vmem:[%s5 + $0x310] sm:$0xff]
      %v2291 = vld [vmem:[%s5 + $0x318] sm:$0xff]
      %v2292 = vld [vmem:[%s5 + $0x320] sm:$0xff]
      %v2293 = vld [vmem:[%s5 + $0x328] sm:$0xf]
      %v2294 = vld [vmem:[%s5 + $0x32c] sm:$0xff]
      %v2295 = vld [vmem:[%s5 + $0x334] sm:$0xff]
      %v2296 = vld [vmem:[%s5 + $0x33c] sm:$0xff]
      %v2297 = vld [vmem:[%s5 + $0x344] sm:$0xf]
      %v2298 = vld [vmem:[%s5 + $0x348] sm:$0xff]
      %v2299 = vld [vmem:[%s5 + $0x350] sm:$0xff]
      %v2300 = vld [vmem:[%s5 + $0x358] sm:$0xff]
      %v2301 = vld [vmem:[%s5 + $0x360] sm:$0xf]
      %v2302 = vld [vmem:[%s5 + $0x364] sm:$0xff]
      %v2303 = vld [vmem:[%s5 + $0x36c] sm:$0xff]
      %v2304 = vld [vmem:[%s5 + $0x374] sm:$0xff]
      %v2305 = vld [vmem:[%s5 + $0x37c] sm:$0xf]
      %v2306 = vld [vmem:[%s5 + $0x380] sm:$0xff]
      %v2307 = vld [vmem:[%s5 + $0x388] sm:$0xff]
      %v2308 = vld [vmem:[%s5 + $0x390] sm:$0xff]
      %v2309 = vld [vmem:[%s5 + $0x398] sm:$0xf]
      %v2310 = vld [vmem:[%s5 + $0x39c] sm:$0xff]
      %v2311 = vld [vmem:[%s5 + $0x3a4] sm:$0xff]
      %v2312 = vld [vmem:[%s5 + $0x3ac] sm:$0xff]
      %v2313 = vld [vmem:[%s5 + $0x3b4] sm:$0xf]
      %v2314 = vld [vmem:[%s5 + $0x3b8] sm:$0xff]
      %v2315 = vld [vmem:[%s5 + $0x3c0] sm:$0xff]
      %v2316 = vld [vmem:[%s5 + $0x3c8] sm:$0xff]
      %v2317 = vld [vmem:[%s5 + $0x3d0] sm:$0xf]
      %v2318 = vld [vmem:[%s5 + $0x3d4] sm:$0xff]
      %v2319 = vld [vmem:[%s5 + $0x3dc] sm:$0xff]
      %v2320 = vld [vmem:[%s5 + $0x3e4] sm:$0xff]
      %v2321 = vld [vmem:[%s5 + $0x3ec] sm:$0xf]
      %v2322 = vld [vmem:[%s5 + $0x3f0] sm:$0xff]
      %v2323 = vld [vmem:[%s5 + $0x3f8] sm:$0xff]
      %v2324 = vld [vmem:[%s5 + $0x400] sm:$0xff]
      %v2325 = vld [vmem:[%s5 + $0x408] sm:$0xf]
      %v2326 = vld [vmem:[%s5 + $0x40c] sm:$0xff]
      %v2327 = vld [vmem:[%s5 + $0x414] sm:$0xff]
      %v2328 = vld [vmem:[%s5 + $0x41c] sm:$0xff]
      %v2329 = vld [vmem:[%s5 + $0x424] sm:$0xf]
      %v2330 = vld [vmem:[%s5 + $0x428] sm:$0xff]
      %v2331 = vld [vmem:[%s5 + $0x430] sm:$0xff]
      %v2332 = vld [vmem:[%s5 + $0x438] sm:$0xff]
      %v2333 = vld [vmem:[%s5 + $0x440] sm:$0xf]
      %v2334 = vld [vmem:[%s5 + $0x444] sm:$0xff]
      %v2335 = vld [vmem:[%s5 + $0x44c] sm:$0xff]
      %v2336 = vld [vmem:[%s5 + $0x454] sm:$0xff]
      %v2337 = vld [vmem:[%s5 + $0x45c] sm:$0xf]
      %v2338 = vld [vmem:[%s5 + $0x460] sm:$0xff]
      %v2339 = vld [vmem:[%s5 + $0x468] sm:$0xff]
      %v2340 = vld [vmem:[%s5 + $0x470] sm:$0xff]
      %v2341 = vld [vmem:[%s5 + $0x478] sm:$0xf]
      %v2342 = vld [vmem:[%s5 + $0x47c] sm:$0xff]
      %v2343 = vld [vmem:[%s5 + $0x484] sm:$0xff]
      %v2344 = vld [vmem:[%s5 + $0x48c] sm:$0xff]
      %v2345 = vld [vmem:[%s5 + $0x494] sm:$0xf]
      %v2346 = vld [vmem:[%s5 + $0x498] sm:$0xff]
      %v2347 = vld [vmem:[%s5 + $0x4a0] sm:$0xff]
      %v2348 = vld [vmem:[%s5 + $0x4a8] sm:$0xff]
      %v2349 = vld [vmem:[%s5 + $0x4b0] sm:$0xf]
      %v2350 = vld [vmem:[%s5 + $0x4b4] sm:$0xff]
      %v2351 = vld [vmem:[%s5 + $0x4bc] sm:$0xff]
      %v2352 = vld [vmem:[%s5 + $0x4c4] sm:$0xff]
      %v2353 = vld [vmem:[%s5 + $0x4cc] sm:$0xf]
      %v2354 = vld [vmem:[%s5 + $0x4d0] sm:$0xff]
      %v2355 = vld [vmem:[%s5 + $0x4d8] sm:$0xff]
      %v2356 = vld [vmem:[%s5 + $0x4e0] sm:$0xff]
      %v2357 = vld [vmem:[%s5 + $0x4e8] sm:$0xf]
      %v2358 = vld [vmem:[%s5 + $0x4ec] sm:$0xff]
      %v2359 = vld [vmem:[%s5 + $0x4f4] sm:$0xff]
      %v2360 = vld [vmem:[%s5 + $0x4fc] sm:$0xff]
      %v2361 = vld [vmem:[%s5 + $0x504] sm:$0xf]
      %v2362 = vld [vmem:[%s5 + $0x508] sm:$0xff]
      %v2363 = vld [vmem:[%s5 + $0x510] sm:$0xff]
      %v2364 = vld [vmem:[%s5 + $0x518] sm:$0xff]
      %v2365 = vld [vmem:[%s5 + $0x520] sm:$0xf]
      %v2366 = vld [vmem:[%s5 + $0x524] sm:$0xff]
      %v2367 = vld [vmem:[%s5 + $0x52c] sm:$0xff]
      %v2368 = vld [vmem:[%s5 + $0x534] sm:$0xff]
      %v2369 = vld [vmem:[%s5 + $0x53c] sm:$0xf]
      %v2370 = vld [vmem:[%s5 + $0x540] sm:$0xff]
      %v2371 = vld [vmem:[%s5 + $0x548] sm:$0xff]
      %v2372 = vld [vmem:[%s5 + $0x550] sm:$0xff]
      %v2373 = vld [vmem:[%s5 + $0x558] sm:$0xf]
      %v2374 = vld [vmem:[%s5 + $0x55c] sm:$0xff]
      %v2375 = vld [vmem:[%s5 + $0x564] sm:$0xff]
      %v2376 = vld [vmem:[%s5 + $0x56c] sm:$0xff]
      %v2377 = vld [vmem:[%s5 + $0x574] sm:$0xf]
      %v2378 = vld [vmem:[%s5 + $0x578] sm:$0xff]
      %v2379 = vld [vmem:[%s5 + $0x580] sm:$0xff]
      %v2380 = vld [vmem:[%s5 + $0x588] sm:$0xff]
      %v2381 = vld [vmem:[%s5 + $0x590] sm:$0xf]
      %v2382 = vld [vmem:[%s5 + $0x594] sm:$0xff]
      %v2383 = vld [vmem:[%s5 + $0x59c] sm:$0xff]
      %v2384 = vld [vmem:[%s5 + $0x5a4] sm:$0xff]
      %v2385 = vld [vmem:[%s5 + $0x5ac] sm:$0xf]
      %v2386 = vld [vmem:[%s5 + $0x5b0] sm:$0xff]
      %v2387 = vld [vmem:[%s5 + $0x5b8] sm:$0xff]
      %v2388 = vld [vmem:[%s5 + $0x5c0] sm:$0xff]
      %v2389 = vld [vmem:[%s5 + $0x5c8] sm:$0xf]
      %v2390 = vld [vmem:[%s5 + $0x5cc] sm:$0xff]
      %v2391 = vld [vmem:[%s5 + $0x5d4] sm:$0xff]
      %v2392 = vld [vmem:[%s5 + $0x5dc] sm:$0xff]
      %v2393 = vld [vmem:[%s5 + $0x5e4] sm:$0xf]
      %v2394 = vld [vmem:[%s5 + $0x5e8] sm:$0xff]
      %v2395 = vld [vmem:[%s5 + $0x5f0] sm:$0xff]
      %v2396 = vld [vmem:[%s5 + $0x5f8] sm:$0xff]
      %v2397 = vld [vmem:[%s5 + $0x600] sm:$0xf]
      %v2398 = vld [vmem:[%s5 + $0x604] sm:$0xff]
      %v2399 = vld [vmem:[%s5 + $0x60c] sm:$0xff]
      %v2400 = vld [vmem:[%s5 + $0x614] sm:$0xff]
      %v2401 = vld [vmem:[%s5 + $0x61c] sm:$0xf]
      %v2402 = vld [vmem:[%s5 + $0x620] sm:$0xff]
      %v2403 = vld [vmem:[%s5 + $0x628] sm:$0xff]
      %v2404 = vld [vmem:[%s5 + $0x630] sm:$0xff]
      %v2405 = vld [vmem:[%s5 + $0x638] sm:$0xf]
      %v2406 = vld [vmem:[%s5 + $0x63c] sm:$0xff]
      %v2407 = vld [vmem:[%s5 + $0x644] sm:$0xff]
      %v2408 = vld [vmem:[%s5 + $0x64c] sm:$0xff]
      %v2409 = vld [vmem:[%s5 + $0x654] sm:$0xf]
      %v2410 = vld [vmem:[%s5 + $0x658] sm:$0xff]
      %v2411 = vld [vmem:[%s5 + $0x660] sm:$0xff]
      %v2412 = vld [vmem:[%s5 + $0x668] sm:$0xff]
      %v2413 = vld [vmem:[%s5 + $0x670] sm:$0xf]
      %v2414 = vld [vmem:[%s5 + $0x674] sm:$0xff]
      %v2415 = vld [vmem:[%s5 + $0x67c] sm:$0xff]
      %v2416 = vld [vmem:[%s5 + $0x684] sm:$0xff]
      %v2417 = vld [vmem:[%s5 + $0x68c] sm:$0xf]
      %v2418 = vld [vmem:[%s5 + $0x690] sm:$0xff]
      %v2419 = vld [vmem:[%s5 + $0x698] sm:$0xff]
      %v2420 = vld [vmem:[%s5 + $0x6a0] sm:$0xff]
      %v2421 = vld [vmem:[%s5 + $0x6a8] sm:$0xf]
      %v2422 = vld [vmem:[%s5 + $0x6ac] sm:$0xff]
      %v2423 = vld [vmem:[%s5 + $0x6b4] sm:$0xff]
      %v2424 = vld [vmem:[%s5 + $0x6bc] sm:$0xff]
      %v2425 = vld [vmem:[%s5 + $0x6c4] sm:$0xf]
      %v2426 = vld [vmem:[%s5 + $0x6c8] sm:$0xff]
      %v2427 = vld [vmem:[%s5 + $0x6d0] sm:$0xff]
      %v2428 = vld [vmem:[%s5 + $0x6d8] sm:$0xff]
      %v2429 = vld [vmem:[%s5 + $0x6e0] sm:$0xf]
      %v2430 = vld [vmem:[%s5 + $0x6e4] sm:$0xff]
      %v2431 = vld [vmem:[%s5 + $0x6ec] sm:$0xff]
      %v2432 = vld [vmem:[%s5 + $0x6f4] sm:$0xff]
      %v2433 = vld [vmem:[%s5 + $0x6fc] sm:$0xf]
      %v2434 = vld [vmem:[%s6] sm:$0xff]
      %v2436 = vlaneseq
      %v2437 = vshrl.u32 %v2436, 7
      %v2438 = vsub.s32 0, %v2437
      %v2439 = vrot.slane %v2434, %v2438
      %v2440 = vlaneseq
      %v2441 = vshrl.u32 %v2440, 7
      %v2442 = vsub.s32 1, %v2441
      %v2443 = vrot.slane %v2434, %v2442
      %v2444 = vlaneseq
      %v2445 = vshrl.u32 %v2444, 7
      %v2446 = vsub.s32 2, %v2445
      %v2447 = vrot.slane %v2434, %v2446
      %v2448 = vlaneseq
      %v2449 = vshrl.u32 %v2448, 7
      %v2450 = vsub.s32 3, %v2449
      %v2451 = vrot.slane %v2434, %v2450
      %v2452 = vlaneseq
      %v2453 = vshrl.u32 %v2452, 7
      %v2454 = vsub.s32 4, %v2453
      %v2455 = vrot.slane %v2434, %v2454
      %v2456 = vlaneseq
      %v2457 = vshrl.u32 %v2456, 7
      %v2458 = vsub.s32 5, %v2457
      %v2459 = vrot.slane %v2434, %v2458
      %v2460 = vlaneseq
      %v2461 = vshrl.u32 %v2460, 7
      %v2462 = vsub.s32 6, %v2461
      %v2463 = vrot.slane %v2434, %v2462
      %v2727 = vunpack.c.l.b16 %v2178
      %v2728 = vunpack.c.h.b16 %v2178
      %v2729 = vunpack.c.l.b16 %v2179
      %v2730 = vunpack.c.h.b16 %v2179
      %v2731 = vunpack.c.l.b16 %v2180
      %v2732 = vunpack.c.h.b16 %v2180
      %v2733 = vunpack.c.l.b16 %v2181
      %v2734 = vunpack.c.l.b16 %v2182
      %v2735 = vunpack.c.h.b16 %v2182
      %v2736 = vunpack.c.l.b16 %v2183
      %v2737 = vunpack.c.h.b16 %v2183
      %v2738 = vunpack.c.l.b16 %v2184
      %v2739 = vunpack.c.h.b16 %v2184
      %v2740 = vunpack.c.l.b16 %v2185
      %v2741 = vunpack.c.l.b16 %v2186
      %v2742 = vunpack.c.h.b16 %v2186
      %v2743 = vunpack.c.l.b16 %v2187
      %v2744 = vunpack.c.h.b16 %v2187
      %v2745 = vunpack.c.l.b16 %v2188
      %v2746 = vunpack.c.h.b16 %v2188
      %v2747 = vunpack.c.l.b16 %v2189
      %v2748 = vunpack.c.l.b16 %v2190
      %v2749 = vunpack.c.h.b16 %v2190
      %v2750 = vunpack.c.l.b16 %v2191
      %v2751 = vunpack.c.h.b16 %v2191
      %v2752 = vunpack.c.l.b16 %v2192
      %v2753 = vunpack.c.h.b16 %v2192
      %v2754 = vunpack.c.l.b16 %v2193
      %v2755 = vunpack.c.l.b16 %v2194
      %v2756 = vunpack.c.h.b16 %v2194
      %v2757 = vunpack.c.l.b16 %v2195
      %v2758 = vunpack.c.h.b16 %v2195
      %v2759 = vunpack.c.l.b16 %v2196
      %v2760 = vunpack.c.h.b16 %v2196
      %v2761 = vunpack.c.l.b16 %v2197
      %v2762 = vunpack.c.l.b16 %v2198
      %v2763 = vunpack.c.h.b16 %v2198
      %v2764 = vunpack.c.l.b16 %v2199
      %v2765 = vunpack.c.h.b16 %v2199
      %v2766 = vunpack.c.l.b16 %v2200
      %v2767 = vunpack.c.h.b16 %v2200
      %v2768 = vunpack.c.l.b16 %v2201
      %v2769 = vunpack.c.l.b16 %v2202
      %v2770 = vunpack.c.h.b16 %v2202
      %v2771 = vunpack.c.l.b16 %v2203
      %v2772 = vunpack.c.h.b16 %v2203
      %v2773 = vunpack.c.l.b16 %v2204
      %v2774 = vunpack.c.h.b16 %v2204
      %v2775 = vunpack.c.l.b16 %v2205
      %v2776 = vunpack.c.l.b16 %v2206
      %v2777 = vunpack.c.h.b16 %v2206
      %v2778 = vunpack.c.l.b16 %v2207
      %v2779 = vunpack.c.h.b16 %v2207
      %v2780 = vunpack.c.l.b16 %v2208
      %v2781 = vunpack.c.h.b16 %v2208
      %v2782 = vunpack.c.l.b16 %v2209
      %v2783 = vunpack.c.l.b16 %v2210
      %v2784 = vunpack.c.h.b16 %v2210
      %v2785 = vunpack.c.l.b16 %v2211
      %v2786 = vunpack.c.h.b16 %v2211
      %v2787 = vunpack.c.l.b16 %v2212
      %v2788 = vunpack.c.h.b16 %v2212
      %v2789 = vunpack.c.l.b16 %v2213
      %v2790 = vunpack.c.l.b16 %v2214
      %v2791 = vunpack.c.h.b16 %v2214
      %v2792 = vunpack.c.l.b16 %v2215
      %v2793 = vunpack.c.h.b16 %v2215
      %v2794 = vunpack.c.l.b16 %v2216
      %v2795 = vunpack.c.h.b16 %v2216
      %v2796 = vunpack.c.l.b16 %v2217
      %v2797 = vunpack.c.l.b16 %v2218
      %v2798 = vunpack.c.h.b16 %v2218
      %v2799 = vunpack.c.l.b16 %v2219
      %v2800 = vunpack.c.h.b16 %v2219
      %v2801 = vunpack.c.l.b16 %v2220
      %v2802 = vunpack.c.h.b16 %v2220
      %v2803 = vunpack.c.l.b16 %v2221
      %v2804 = vunpack.c.l.b16 %v2222
      %v2805 = vunpack.c.h.b16 %v2222
      %v2806 = vunpack.c.l.b16 %v2223
      %v2807 = vunpack.c.h.b16 %v2223
      %v2808 = vunpack.c.l.b16 %v2224
      %v2809 = vunpack.c.h.b16 %v2224
      %v2810 = vunpack.c.l.b16 %v2225
      %v2811 = vunpack.c.l.b16 %v2226
      %v2812 = vunpack.c.h.b16 %v2226
      %v2813 = vunpack.c.l.b16 %v2227
      %v2814 = vunpack.c.h.b16 %v2227
      %v2815 = vunpack.c.l.b16 %v2228
      %v2816 = vunpack.c.h.b16 %v2228
      %v2817 = vunpack.c.l.b16 %v2229
      %v2818 = vunpack.c.l.b16 %v2230
      %v2819 = vunpack.c.h.b16 %v2230
      %v2820 = vunpack.c.l.b16 %v2231
      %v2821 = vunpack.c.h.b16 %v2231
      %v2822 = vunpack.c.l.b16 %v2232
      %v2823 = vunpack.c.h.b16 %v2232
      %v2824 = vunpack.c.l.b16 %v2233
      %v2825 = vunpack.c.l.b16 %v2234
      %v2826 = vunpack.c.h.b16 %v2234
      %v2827 = vunpack.c.l.b16 %v2235
      %v2828 = vunpack.c.h.b16 %v2235
      %v2829 = vunpack.c.l.b16 %v2236
      %v2830 = vunpack.c.h.b16 %v2236
      %v2831 = vunpack.c.l.b16 %v2237
      %v2832 = vunpack.c.l.b16 %v2238
      %v2833 = vunpack.c.h.b16 %v2238
      %v2834 = vunpack.c.l.b16 %v2239
      %v2835 = vunpack.c.h.b16 %v2239
      %v2836 = vunpack.c.l.b16 %v2240
      %v2837 = vunpack.c.h.b16 %v2240
      %v2838 = vunpack.c.l.b16 %v2241
      %v2839 = vunpack.c.l.b16 %v2242
      %v2840 = vunpack.c.h.b16 %v2242
      %v2841 = vunpack.c.l.b16 %v2243
      %v2842 = vunpack.c.h.b16 %v2243
      %v2843 = vunpack.c.l.b16 %v2244
      %v2844 = vunpack.c.h.b16 %v2244
      %v2845 = vunpack.c.l.b16 %v2245
      %v2846 = vunpack.c.l.b16 %v2246
      %v2847 = vunpack.c.h.b16 %v2246
      %v2848 = vunpack.c.l.b16 %v2247
      %v2849 = vunpack.c.h.b16 %v2247
      %v2850 = vunpack.c.l.b16 %v2248
      %v2851 = vunpack.c.h.b16 %v2248
      %v2852 = vunpack.c.l.b16 %v2249
      %v2853 = vunpack.c.l.b16 %v2250
      %v2854 = vunpack.c.h.b16 %v2250
      %v2855 = vunpack.c.l.b16 %v2251
      %v2856 = vunpack.c.h.b16 %v2251
      %v2857 = vunpack.c.l.b16 %v2252
      %v2858 = vunpack.c.h.b16 %v2252
      %v2859 = vunpack.c.l.b16 %v2253
      %v2860 = vunpack.c.l.b16 %v2254
      %v2861 = vunpack.c.h.b16 %v2254
      %v2862 = vunpack.c.l.b16 %v2255
      %v2863 = vunpack.c.h.b16 %v2255
      %v2864 = vunpack.c.l.b16 %v2256
      %v2865 = vunpack.c.h.b16 %v2256
      %v2866 = vunpack.c.l.b16 %v2257
      %v2867 = vunpack.c.l.b16 %v2258
      %v2868 = vunpack.c.h.b16 %v2258
      %v2869 = vunpack.c.l.b16 %v2259
      %v2870 = vunpack.c.h.b16 %v2259
      %v2871 = vunpack.c.l.b16 %v2260
      %v2872 = vunpack.c.h.b16 %v2260
      %v2873 = vunpack.c.l.b16 %v2261
      %v2874 = vunpack.c.l.b16 %v2262
      %v2875 = vunpack.c.h.b16 %v2262
      %v2876 = vunpack.c.l.b16 %v2263
      %v2877 = vunpack.c.h.b16 %v2263
      %v2878 = vunpack.c.l.b16 %v2264
      %v2879 = vunpack.c.h.b16 %v2264
      %v2880 = vunpack.c.l.b16 %v2265
      %v2881 = vunpack.c.l.b16 %v2266
      %v2882 = vunpack.c.h.b16 %v2266
      %v2883 = vunpack.c.l.b16 %v2267
      %v2884 = vunpack.c.h.b16 %v2267
      %v2885 = vunpack.c.l.b16 %v2268
      %v2886 = vunpack.c.h.b16 %v2268
      %v2887 = vunpack.c.l.b16 %v2269
      %v2888 = vunpack.c.l.b16 %v2270
      %v2889 = vunpack.c.h.b16 %v2270
      %v2890 = vunpack.c.l.b16 %v2271
      %v2891 = vunpack.c.h.b16 %v2271
      %v2892 = vunpack.c.l.b16 %v2272
      %v2893 = vunpack.c.h.b16 %v2272
      %v2894 = vunpack.c.l.b16 %v2273
      %v2895 = vunpack.c.l.b16 %v2274
      %v2896 = vunpack.c.h.b16 %v2274
      %v2897 = vunpack.c.l.b16 %v2275
      %v2898 = vunpack.c.h.b16 %v2275
      %v2899 = vunpack.c.l.b16 %v2276
      %v2900 = vunpack.c.h.b16 %v2276
      %v2901 = vunpack.c.l.b16 %v2277
      %v2902 = vunpack.c.l.b16 %v2278
      %v2903 = vunpack.c.h.b16 %v2278
      %v2904 = vunpack.c.l.b16 %v2279
      %v2905 = vunpack.c.h.b16 %v2279
      %v2906 = vunpack.c.l.b16 %v2280
      %v2907 = vunpack.c.h.b16 %v2280
      %v2908 = vunpack.c.l.b16 %v2281
      %v2909 = vunpack.c.l.b16 %v2282
      %v2910 = vunpack.c.h.b16 %v2282
      %v2911 = vunpack.c.l.b16 %v2283
      %v2912 = vunpack.c.h.b16 %v2283
      %v2913 = vunpack.c.l.b16 %v2284
      %v2914 = vunpack.c.h.b16 %v2284
      %v2915 = vunpack.c.l.b16 %v2285
      %v2916 = vunpack.c.l.b16 %v2286
      %v2917 = vunpack.c.h.b16 %v2286
      %v2918 = vunpack.c.l.b16 %v2287
      %v2919 = vunpack.c.h.b16 %v2287
      %v2920 = vunpack.c.l.b16 %v2288
      %v2921 = vunpack.c.h.b16 %v2288
      %v2922 = vunpack.c.l.b16 %v2289
      %v2923 = vunpack.c.l.b16 %v2290
      %v2924 = vunpack.c.h.b16 %v2290
      %v2925 = vunpack.c.l.b16 %v2291
      %v2926 = vunpack.c.h.b16 %v2291
      %v2927 = vunpack.c.l.b16 %v2292
      %v2928 = vunpack.c.h.b16 %v2292
      %v2929 = vunpack.c.l.b16 %v2293
      %v2930 = vunpack.c.l.b16 %v2294
      %v2931 = vunpack.c.h.b16 %v2294
      %v2932 = vunpack.c.l.b16 %v2295
      %v2933 = vunpack.c.h.b16 %v2295
      %v2934 = vunpack.c.l.b16 %v2296
      %v2935 = vunpack.c.h.b16 %v2296
      %v2936 = vunpack.c.l.b16 %v2297
      %v2937 = vunpack.c.l.b16 %v2298
      %v2938 = vunpack.c.h.b16 %v2298
      %v2939 = vunpack.c.l.b16 %v2299
      %v2940 = vunpack.c.h.b16 %v2299
      %v2941 = vunpack.c.l.b16 %v2300
      %v2942 = vunpack.c.h.b16 %v2300
      %v2943 = vunpack.c.l.b16 %v2301
      %v2944 = vunpack.c.l.b16 %v2302
      %v2945 = vunpack.c.h.b16 %v2302
      %v2946 = vunpack.c.l.b16 %v2303
      %v2947 = vunpack.c.h.b16 %v2303
      %v2948 = vunpack.c.l.b16 %v2304
      %v2949 = vunpack.c.h.b16 %v2304
      %v2950 = vunpack.c.l.b16 %v2305
      %v2951 = vunpack.c.l.b16 %v2306
      %v2952 = vunpack.c.h.b16 %v2306
      %v2953 = vunpack.c.l.b16 %v2307
      %v2954 = vunpack.c.h.b16 %v2307
      %v2955 = vunpack.c.l.b16 %v2308
      %v2956 = vunpack.c.h.b16 %v2308
      %v2957 = vunpack.c.l.b16 %v2309
      %v2958 = vunpack.c.l.b16 %v2310
      %v2959 = vunpack.c.h.b16 %v2310
      %v2960 = vunpack.c.l.b16 %v2311
      %v2961 = vunpack.c.h.b16 %v2311
      %v2962 = vunpack.c.l.b16 %v2312
      %v2963 = vunpack.c.h.b16 %v2312
      %v2964 = vunpack.c.l.b16 %v2313
      %v2965 = vunpack.c.l.b16 %v2314
      %v2966 = vunpack.c.h.b16 %v2314
      %v2967 = vunpack.c.l.b16 %v2315
      %v2968 = vunpack.c.h.b16 %v2315
      %v2969 = vunpack.c.l.b16 %v2316
      %v2970 = vunpack.c.h.b16 %v2316
      %v2971 = vunpack.c.l.b16 %v2317
      %v2972 = vunpack.c.l.b16 %v2318
      %v2973 = vunpack.c.h.b16 %v2318
      %v2974 = vunpack.c.l.b16 %v2319
      %v2975 = vunpack.c.h.b16 %v2319
      %v2976 = vunpack.c.l.b16 %v2320
      %v2977 = vunpack.c.h.b16 %v2320
      %v2978 = vunpack.c.l.b16 %v2321
      %v2979 = vunpack.c.l.b16 %v2322
      %v2980 = vunpack.c.h.b16 %v2322
      %v2981 = vunpack.c.l.b16 %v2323
      %v2982 = vunpack.c.h.b16 %v2323
      %v2983 = vunpack.c.l.b16 %v2324
      %v2984 = vunpack.c.h.b16 %v2324
      %v2985 = vunpack.c.l.b16 %v2325
      %v2986 = vunpack.c.l.b16 %v2326
      %v2987 = vunpack.c.h.b16 %v2326
      %v2988 = vunpack.c.l.b16 %v2327
      %v2989 = vunpack.c.h.b16 %v2327
      %v2990 = vunpack.c.l.b16 %v2328
      %v2991 = vunpack.c.h.b16 %v2328
      %v2992 = vunpack.c.l.b16 %v2329
      %v2993 = vunpack.c.l.b16 %v2330
      %v2994 = vunpack.c.h.b16 %v2330
      %v2995 = vunpack.c.l.b16 %v2331
      %v2996 = vunpack.c.h.b16 %v2331
      %v2997 = vunpack.c.l.b16 %v2332
      %v2998 = vunpack.c.h.b16 %v2332
      %v2999 = vunpack.c.l.b16 %v2333
      %v3000 = vunpack.c.l.b16 %v2334
      %v3001 = vunpack.c.h.b16 %v2334
      %v3002 = vunpack.c.l.b16 %v2335
      %v3003 = vunpack.c.h.b16 %v2335
      %v3004 = vunpack.c.l.b16 %v2336
      %v3005 = vunpack.c.h.b16 %v2336
      %v3006 = vunpack.c.l.b16 %v2337
      %v3007 = vunpack.c.l.b16 %v2338
      %v3008 = vunpack.c.h.b16 %v2338
      %v3009 = vunpack.c.l.b16 %v2339
      %v3010 = vunpack.c.h.b16 %v2339
      %v3011 = vunpack.c.l.b16 %v2340
      %v3012 = vunpack.c.h.b16 %v2340
      %v3013 = vunpack.c.l.b16 %v2341
      %v3014 = vunpack.c.l.b16 %v2342
      %v3015 = vunpack.c.h.b16 %v2342
      %v3016 = vunpack.c.l.b16 %v2343
      %v3017 = vunpack.c.h.b16 %v2343
      %v3018 = vunpack.c.l.b16 %v2344
      %v3019 = vunpack.c.h.b16 %v2344
      %v3020 = vunpack.c.l.b16 %v2345
      %v3021 = vunpack.c.l.b16 %v2346
      %v3022 = vunpack.c.h.b16 %v2346
      %v3023 = vunpack.c.l.b16 %v2347
      %v3024 = vunpack.c.h.b16 %v2347
      %v3025 = vunpack.c.l.b16 %v2348
      %v3026 = vunpack.c.h.b16 %v2348
      %v3027 = vunpack.c.l.b16 %v2349
      %v3028 = vunpack.c.l.b16 %v2350
      %v3029 = vunpack.c.h.b16 %v2350
      %v3030 = vunpack.c.l.b16 %v2351
      %v3031 = vunpack.c.h.b16 %v2351
      %v3032 = vunpack.c.l.b16 %v2352
      %v3033 = vunpack.c.h.b16 %v2352
      %v3034 = vunpack.c.l.b16 %v2353
      %v3035 = vunpack.c.l.b16 %v2354
      %v3036 = vunpack.c.h.b16 %v2354
      %v3037 = vunpack.c.l.b16 %v2355
      %v3038 = vunpack.c.h.b16 %v2355
      %v3039 = vunpack.c.l.b16 %v2356
      %v3040 = vunpack.c.h.b16 %v2356
      %v3041 = vunpack.c.l.b16 %v2357
      %v3042 = vunpack.c.l.b16 %v2358
      %v3043 = vunpack.c.h.b16 %v2358
      %v3044 = vunpack.c.l.b16 %v2359
      %v3045 = vunpack.c.h.b16 %v2359
      %v3046 = vunpack.c.l.b16 %v2360
      %v3047 = vunpack.c.h.b16 %v2360
      %v3048 = vunpack.c.l.b16 %v2361
      %v3049 = vunpack.c.l.b16 %v2362
      %v3050 = vunpack.c.h.b16 %v2362
      %v3051 = vunpack.c.l.b16 %v2363
      %v3052 = vunpack.c.h.b16 %v2363
      %v3053 = vunpack.c.l.b16 %v2364
      %v3054 = vunpack.c.h.b16 %v2364
      %v3055 = vunpack.c.l.b16 %v2365
      %v3056 = vunpack.c.l.b16 %v2366
      %v3057 = vunpack.c.h.b16 %v2366
      %v3058 = vunpack.c.l.b16 %v2367
      %v3059 = vunpack.c.h.b16 %v2367
      %v3060 = vunpack.c.l.b16 %v2368
      %v3061 = vunpack.c.h.b16 %v2368
      %v3062 = vunpack.c.l.b16 %v2369
      %v3063 = vunpack.c.l.b16 %v2370
      %v3064 = vunpack.c.h.b16 %v2370
      %v3065 = vunpack.c.l.b16 %v2371
      %v3066 = vunpack.c.h.b16 %v2371
      %v3067 = vunpack.c.l.b16 %v2372
      %v3068 = vunpack.c.h.b16 %v2372
      %v3069 = vunpack.c.l.b16 %v2373
      %v3070 = vunpack.c.l.b16 %v2374
      %v3071 = vunpack.c.h.b16 %v2374
      %v3072 = vunpack.c.l.b16 %v2375
      %v3073 = vunpack.c.h.b16 %v2375
      %v3074 = vunpack.c.l.b16 %v2376
      %v3075 = vunpack.c.h.b16 %v2376
      %v3076 = vunpack.c.l.b16 %v2377
      %v3077 = vunpack.c.l.b16 %v2378
      %v3078 = vunpack.c.h.b16 %v2378
      %v3079 = vunpack.c.l.b16 %v2379
      %v3080 = vunpack.c.h.b16 %v2379
      %v3081 = vunpack.c.l.b16 %v2380
      %v3082 = vunpack.c.h.b16 %v2380
      %v3083 = vunpack.c.l.b16 %v2381
      %v3084 = vunpack.c.l.b16 %v2382
      %v3085 = vunpack.c.h.b16 %v2382
      %v3086 = vunpack.c.l.b16 %v2383
      %v3087 = vunpack.c.h.b16 %v2383
      %v3088 = vunpack.c.l.b16 %v2384
      %v3089 = vunpack.c.h.b16 %v2384
      %v3090 = vunpack.c.l.b16 %v2385
      %v3091 = vunpack.c.l.b16 %v2386
      %v3092 = vunpack.c.h.b16 %v2386
      %v3093 = vunpack.c.l.b16 %v2387
      %v3094 = vunpack.c.h.b16 %v2387
      %v3095 = vunpack.c.l.b16 %v2388
      %v3096 = vunpack.c.h.b16 %v2388
      %v3097 = vunpack.c.l.b16 %v2389
      %v3098 = vunpack.c.l.b16 %v2390
      %v3099 = vunpack.c.h.b16 %v2390
      %v3100 = vunpack.c.l.b16 %v2391
      %v3101 = vunpack.c.h.b16 %v2391
      %v3102 = vunpack.c.l.b16 %v2392
      %v3103 = vunpack.c.h.b16 %v2392
      %v3104 = vunpack.c.l.b16 %v2393
      %v3105 = vunpack.c.l.b16 %v2394
      %v3106 = vunpack.c.h.b16 %v2394
      %v3107 = vunpack.c.l.b16 %v2395
      %v3108 = vunpack.c.h.b16 %v2395
      %v3109 = vunpack.c.l.b16 %v2396
      %v3110 = vunpack.c.h.b16 %v2396
      %v3111 = vunpack.c.l.b16 %v2397
      %v3112 = vunpack.c.l.b16 %v2398
      %v3113 = vunpack.c.h.b16 %v2398
      %v3114 = vunpack.c.l.b16 %v2399
      %v3115 = vunpack.c.h.b16 %v2399
      %v3116 = vunpack.c.l.b16 %v2400
      %v3117 = vunpack.c.h.b16 %v2400
      %v3118 = vunpack.c.l.b16 %v2401
      %v3119 = vunpack.c.l.b16 %v2402
      %v3120 = vunpack.c.h.b16 %v2402
      %v3121 = vunpack.c.l.b16 %v2403
      %v3122 = vunpack.c.h.b16 %v2403
      %v3123 = vunpack.c.l.b16 %v2404
      %v3124 = vunpack.c.h.b16 %v2404
      %v3125 = vunpack.c.l.b16 %v2405
      %v3126 = vunpack.c.l.b16 %v2406
      %v3127 = vunpack.c.h.b16 %v2406
      %v3128 = vunpack.c.l.b16 %v2407
      %v3129 = vunpack.c.h.b16 %v2407
      %v3130 = vunpack.c.l.b16 %v2408
      %v3131 = vunpack.c.h.b16 %v2408
      %v3132 = vunpack.c.l.b16 %v2409
      %v3133 = vunpack.c.l.b16 %v2410
      %v3134 = vunpack.c.h.b16 %v2410
      %v3135 = vunpack.c.l.b16 %v2411
      %v3136 = vunpack.c.h.b16 %v2411
      %v3137 = vunpack.c.l.b16 %v2412
      %v3138 = vunpack.c.h.b16 %v2412
      %v3139 = vunpack.c.l.b16 %v2413
      %v3140 = vunpack.c.l.b16 %v2414
      %v3141 = vunpack.c.h.b16 %v2414
      %v3142 = vunpack.c.l.b16 %v2415
      %v3143 = vunpack.c.h.b16 %v2415
      %v3144 = vunpack.c.l.b16 %v2416
      %v3145 = vunpack.c.h.b16 %v2416
      %v3146 = vunpack.c.l.b16 %v2417
      %v3147 = vunpack.c.l.b16 %v2418
      %v3148 = vunpack.c.h.b16 %v2418
      %v3149 = vunpack.c.l.b16 %v2419
      %v3150 = vunpack.c.h.b16 %v2419
      %v3151 = vunpack.c.l.b16 %v2420
      %v3152 = vunpack.c.h.b16 %v2420
      %v3153 = vunpack.c.l.b16 %v2421
      %v3154 = vunpack.c.l.b16 %v2422
      %v3155 = vunpack.c.h.b16 %v2422
      %v3156 = vunpack.c.l.b16 %v2423
      %v3157 = vunpack.c.h.b16 %v2423
      %v3158 = vunpack.c.l.b16 %v2424
      %v3159 = vunpack.c.h.b16 %v2424
      %v3160 = vunpack.c.l.b16 %v2425
      %v3161 = vunpack.c.l.b16 %v2426
      %v3162 = vunpack.c.h.b16 %v2426
      %v3163 = vunpack.c.l.b16 %v2427
      %v3164 = vunpack.c.h.b16 %v2427
      %v3165 = vunpack.c.l.b16 %v2428
      %v3166 = vunpack.c.h.b16 %v2428
      %v3167 = vunpack.c.l.b16 %v2429
      %v3168 = vunpack.c.l.b16 %v2430
      %v3169 = vunpack.c.h.b16 %v2430
      %v3170 = vunpack.c.l.b16 %v2431
      %v3171 = vunpack.c.h.b16 %v2431
      %v3172 = vunpack.c.l.b16 %v2432
      %v3173 = vunpack.c.h.b16 %v2432
      %v3174 = vunpack.c.l.b16 %v2433
      %v3175 = vpack.c.b16 %v2734, %v2727
      %v3176 = vpack.c.b16 %v2735, %v2728
      %v3177 = vpack.c.b16 %v2736, %v2729
      %v3178 = vpack.c.b16 %v2737, %v2730
      %v3179 = vpack.c.b16 %v2738, %v2731
      %v3180 = vpack.c.b16 %v2739, %v2732
      %v3181 = vpack.c.b16 %v2740, %v2733
      %v3182 = vpack.c.b16 %v2748, %v2741
      %v3183 = vpack.c.b16 %v2749, %v2742
      %v3184 = vpack.c.b16 %v2750, %v2743
      %v3185 = vpack.c.b16 %v2751, %v2744
      %v3186 = vpack.c.b16 %v2752, %v2745
      %v3187 = vpack.c.b16 %v2753, %v2746
      %v3188 = vpack.c.b16 %v2754, %v2747
      %v3189 = vpack.c.b16 %v2762, %v2755
      %v3190 = vpack.c.b16 %v2763, %v2756
      %v3191 = vpack.c.b16 %v2764, %v2757
      %v3192 = vpack.c.b16 %v2765, %v2758
      %v3193 = vpack.c.b16 %v2766, %v2759
      %v3194 = vpack.c.b16 %v2767, %v2760
      %v3195 = vpack.c.b16 %v2768, %v2761
      %v3196 = vpack.c.b16 %v2776, %v2769
      %v3197 = vpack.c.b16 %v2777, %v2770
      %v3198 = vpack.c.b16 %v2778, %v2771
      %v3199 = vpack.c.b16 %v2779, %v2772
      %v3200 = vpack.c.b16 %v2780, %v2773
      %v3201 = vpack.c.b16 %v2781, %v2774
      %v3202 = vpack.c.b16 %v2782, %v2775
      %v3203 = vpack.c.b16 %v2790, %v2783
      %v3204 = vpack.c.b16 %v2791, %v2784
      %v3205 = vpack.c.b16 %v2792, %v2785
      %v3206 = vpack.c.b16 %v2793, %v2786
      %v3207 = vpack.c.b16 %v2794, %v2787
      %v3208 = vpack.c.b16 %v2795, %v2788
      %v3209 = vpack.c.b16 %v2796, %v2789
      %v3210 = vpack.c.b16 %v2804, %v2797
      %v3211 = vpack.c.b16 %v2805, %v2798
      %v3212 = vpack.c.b16 %v2806, %v2799
      %v3213 = vpack.c.b16 %v2807, %v2800
      %v3214 = vpack.c.b16 %v2808, %v2801
      %v3215 = vpack.c.b16 %v2809, %v2802
      %v3216 = vpack.c.b16 %v2810, %v2803
      %v3217 = vpack.c.b16 %v2818, %v2811
      %v3218 = vpack.c.b16 %v2819, %v2812
      %v3219 = vpack.c.b16 %v2820, %v2813
      %v3220 = vpack.c.b16 %v2821, %v2814
      %v3221 = vpack.c.b16 %v2822, %v2815
      %v3222 = vpack.c.b16 %v2823, %v2816
      %v3223 = vpack.c.b16 %v2824, %v2817
      %v3224 = vpack.c.b16 %v2832, %v2825
      %v3225 = vpack.c.b16 %v2833, %v2826
      %v3226 = vpack.c.b16 %v2834, %v2827
      %v3227 = vpack.c.b16 %v2835, %v2828
      %v3228 = vpack.c.b16 %v2836, %v2829
      %v3229 = vpack.c.b16 %v2837, %v2830
      %v3230 = vpack.c.b16 %v2838, %v2831
      %v3231 = vpack.c.b16 %v2846, %v2839
      %v3232 = vpack.c.b16 %v2847, %v2840
      %v3233 = vpack.c.b16 %v2848, %v2841
      %v3234 = vpack.c.b16 %v2849, %v2842
      %v3235 = vpack.c.b16 %v2850, %v2843
      %v3236 = vpack.c.b16 %v2851, %v2844
      %v3237 = vpack.c.b16 %v2852, %v2845
      %v3238 = vpack.c.b16 %v2860, %v2853
      %v3239 = vpack.c.b16 %v2861, %v2854
      %v3240 = vpack.c.b16 %v2862, %v2855
      %v3241 = vpack.c.b16 %v2863, %v2856
      %v3242 = vpack.c.b16 %v2864, %v2857
      %v3243 = vpack.c.b16 %v2865, %v2858
      %v3244 = vpack.c.b16 %v2866, %v2859
      %v3245 = vpack.c.b16 %v2874, %v2867
      %v3246 = vpack.c.b16 %v2875, %v2868
      %v3247 = vpack.c.b16 %v2876, %v2869
      %v3248 = vpack.c.b16 %v2877, %v2870
      %v3249 = vpack.c.b16 %v2878, %v2871
      %v3250 = vpack.c.b16 %v2879, %v2872
      %v3251 = vpack.c.b16 %v2880, %v2873
      %v3252 = vpack.c.b16 %v2888, %v2881
      %v3253 = vpack.c.b16 %v2889, %v2882
      %v3254 = vpack.c.b16 %v2890, %v2883
      %v3255 = vpack.c.b16 %v2891, %v2884
      %v3256 = vpack.c.b16 %v2892, %v2885
      %v3257 = vpack.c.b16 %v2893, %v2886
      %v3258 = vpack.c.b16 %v2894, %v2887
      %v3259 = vpack.c.b16 %v2902, %v2895
      %v3260 = vpack.c.b16 %v2903, %v2896
      %v3261 = vpack.c.b16 %v2904, %v2897
      %v3262 = vpack.c.b16 %v2905, %v2898
      %v3263 = vpack.c.b16 %v2906, %v2899
      %v3264 = vpack.c.b16 %v2907, %v2900
      %v3265 = vpack.c.b16 %v2908, %v2901
      %v3266 = vpack.c.b16 %v2916, %v2909
      %v3267 = vpack.c.b16 %v2917, %v2910
      %v3268 = vpack.c.b16 %v2918, %v2911
      %v3269 = vpack.c.b16 %v2919, %v2912
      %v3270 = vpack.c.b16 %v2920, %v2913
      %v3271 = vpack.c.b16 %v2921, %v2914
      %v3272 = vpack.c.b16 %v2922, %v2915
      %v3273 = vpack.c.b16 %v2930, %v2923
      %v3274 = vpack.c.b16 %v2931, %v2924
      %v3275 = vpack.c.b16 %v2932, %v2925
      %v3276 = vpack.c.b16 %v2933, %v2926
      %v3277 = vpack.c.b16 %v2934, %v2927
      %v3278 = vpack.c.b16 %v2935, %v2928
      %v3279 = vpack.c.b16 %v2936, %v2929
      %v3280 = vpack.c.b16 %v2944, %v2937
      %v3281 = vpack.c.b16 %v2945, %v2938
      %v3282 = vpack.c.b16 %v2946, %v2939
      %v3283 = vpack.c.b16 %v2947, %v2940
      %v3284 = vpack.c.b16 %v2948, %v2941
      %v3285 = vpack.c.b16 %v2949, %v2942
      %v3286 = vpack.c.b16 %v2950, %v2943
      %v3287 = vpack.c.b16 %v2958, %v2951
      %v3288 = vpack.c.b16 %v2959, %v2952
      %v3289 = vpack.c.b16 %v2960, %v2953
      %v3290 = vpack.c.b16 %v2961, %v2954
      %v3291 = vpack.c.b16 %v2962, %v2955
      %v3292 = vpack.c.b16 %v2963, %v2956
      %v3293 = vpack.c.b16 %v2964, %v2957
      %v3294 = vpack.c.b16 %v2972, %v2965
      %v3295 = vpack.c.b16 %v2973, %v2966
      %v3296 = vpack.c.b16 %v2974, %v2967
      %v3297 = vpack.c.b16 %v2975, %v2968
      %v3298 = vpack.c.b16 %v2976, %v2969
      %v3299 = vpack.c.b16 %v2977, %v2970
      %v3300 = vpack.c.b16 %v2978, %v2971
      %v3301 = vpack.c.b16 %v2986, %v2979
      %v3302 = vpack.c.b16 %v2987, %v2980
      %v3303 = vpack.c.b16 %v2988, %v2981
      %v3304 = vpack.c.b16 %v2989, %v2982
      %v3305 = vpack.c.b16 %v2990, %v2983
      %v3306 = vpack.c.b16 %v2991, %v2984
      %v3307 = vpack.c.b16 %v2992, %v2985
      %v3308 = vpack.c.b16 %v3000, %v2993
      %v3309 = vpack.c.b16 %v3001, %v2994
      %v3310 = vpack.c.b16 %v3002, %v2995
      %v3311 = vpack.c.b16 %v3003, %v2996
      %v3312 = vpack.c.b16 %v3004, %v2997
      %v3313 = vpack.c.b16 %v3005, %v2998
      %v3314 = vpack.c.b16 %v3006, %v2999
      %v3315 = vpack.c.b16 %v3014, %v3007
      %v3316 = vpack.c.b16 %v3015, %v3008
      %v3317 = vpack.c.b16 %v3016, %v3009
      %v3318 = vpack.c.b16 %v3017, %v3010
      %v3319 = vpack.c.b16 %v3018, %v3011
      %v3320 = vpack.c.b16 %v3019, %v3012
      %v3321 = vpack.c.b16 %v3020, %v3013
      %v3322 = vpack.c.b16 %v3028, %v3021
      %v3323 = vpack.c.b16 %v3029, %v3022
      %v3324 = vpack.c.b16 %v3030, %v3023
      %v3325 = vpack.c.b16 %v3031, %v3024
      %v3326 = vpack.c.b16 %v3032, %v3025
      %v3327 = vpack.c.b16 %v3033, %v3026
      %v3328 = vpack.c.b16 %v3034, %v3027
      %v3329 = vpack.c.b16 %v3042, %v3035
      %v3330 = vpack.c.b16 %v3043, %v3036
      %v3331 = vpack.c.b16 %v3044, %v3037
      %v3332 = vpack.c.b16 %v3045, %v3038
      %v3333 = vpack.c.b16 %v3046, %v3039
      %v3334 = vpack.c.b16 %v3047, %v3040
      %v3335 = vpack.c.b16 %v3048, %v3041
      %v3336 = vpack.c.b16 %v3056, %v3049
      %v3337 = vpack.c.b16 %v3057, %v3050
      %v3338 = vpack.c.b16 %v3058, %v3051
      %v3339 = vpack.c.b16 %v3059, %v3052
      %v3340 = vpack.c.b16 %v3060, %v3053
      %v3341 = vpack.c.b16 %v3061, %v3054
      %v3342 = vpack.c.b16 %v3062, %v3055
      %v3343 = vpack.c.b16 %v3070, %v3063
      %v3344 = vpack.c.b16 %v3071, %v3064
      %v3345 = vpack.c.b16 %v3072, %v3065
      %v3346 = vpack.c.b16 %v3073, %v3066
      %v3347 = vpack.c.b16 %v3074, %v3067
      %v3348 = vpack.c.b16 %v3075, %v3068
      %v3349 = vpack.c.b16 %v3076, %v3069
      %v3350 = vpack.c.b16 %v3084, %v3077
      %v3351 = vpack.c.b16 %v3085, %v3078
      %v3352 = vpack.c.b16 %v3086, %v3079
      %v3353 = vpack.c.b16 %v3087, %v3080
      %v3354 = vpack.c.b16 %v3088, %v3081
      %v3355 = vpack.c.b16 %v3089, %v3082
      %v3356 = vpack.c.b16 %v3090, %v3083
      %v3357 = vpack.c.b16 %v3098, %v3091
      %v3358 = vpack.c.b16 %v3099, %v3092
      %v3359 = vpack.c.b16 %v3100, %v3093
      %v3360 = vpack.c.b16 %v3101, %v3094
      %v3361 = vpack.c.b16 %v3102, %v3095
      %v3362 = vpack.c.b16 %v3103, %v3096
      %v3363 = vpack.c.b16 %v3104, %v3097
      %v3364 = vpack.c.b16 %v3112, %v3105
      %v3365 = vpack.c.b16 %v3113, %v3106
      %v3366 = vpack.c.b16 %v3114, %v3107
      %v3367 = vpack.c.b16 %v3115, %v3108
      %v3368 = vpack.c.b16 %v3116, %v3109
      %v3369 = vpack.c.b16 %v3117, %v3110
      %v3370 = vpack.c.b16 %v3118, %v3111
      %v3371 = vpack.c.b16 %v3126, %v3119
      %v3372 = vpack.c.b16 %v3127, %v3120
      %v3373 = vpack.c.b16 %v3128, %v3121
      %v3374 = vpack.c.b16 %v3129, %v3122
      %v3375 = vpack.c.b16 %v3130, %v3123
      %v3376 = vpack.c.b16 %v3131, %v3124
      %v3377 = vpack.c.b16 %v3132, %v3125
      %v3378 = vpack.c.b16 %v3140, %v3133
      %v3379 = vpack.c.b16 %v3141, %v3134
      %v3380 = vpack.c.b16 %v3142, %v3135
      %v3381 = vpack.c.b16 %v3143, %v3136
      %v3382 = vpack.c.b16 %v3144, %v3137
      %v3383 = vpack.c.b16 %v3145, %v3138
      %v3384 = vpack.c.b16 %v3146, %v3139
      %v3385 = vpack.c.b16 %v3154, %v3147
      %v3386 = vpack.c.b16 %v3155, %v3148
      %v3387 = vpack.c.b16 %v3156, %v3149
      %v3388 = vpack.c.b16 %v3157, %v3150
      %v3389 = vpack.c.b16 %v3158, %v3151
      %v3390 = vpack.c.b16 %v3159, %v3152
      %v3391 = vpack.c.b16 %v3160, %v3153
      %v3392 = vpack.c.b16 %v3168, %v3161
      %v3393 = vpack.c.b16 %v3169, %v3162
      %v3394 = vpack.c.b16 %v3170, %v3163
      %v3395 = vpack.c.b16 %v3171, %v3164
      %v3396 = vpack.c.b16 %v3172, %v3165
      %v3397 = vpack.c.b16 %v3173, %v3166
      %v3398 = vpack.c.b16 %v3174, %v3167
      %3623 = vmatprep.subr.bf16.mxu0 %v3176
      %3624 = vmatpush1.bf16.msra.mxu0 %v3175
      %3625 = vmatprep.subr.bf16.mxu0 %v3183
      %3626 = vmatpush1.bf16.msra.mxu0 %v3182
      %3627 = vmatprep.subr.bf16.mxu0 %v3190
      %3628 = vmatpush1.bf16.msra.mxu0 %v3189
      %3629 = vmatprep.subr.bf16.mxu0 %v3197
      %3630 = vmatpush1.bf16.msra.mxu0 %v3196
      %3631 = vmatprep.subr.bf16.mxu0 %v3204
      %3632 = vmatpush1.bf16.msra.mxu0 %v3203
      %3633 = vmatprep.subr.bf16.mxu0 %v3211
      %3634 = vmatpush1.bf16.msra.mxu0 %v3210
      %3635 = vmatprep.subr.bf16.mxu0 %v3218
      %3636 = vmatpush1.bf16.msra.mxu0 %v3217
      %3637 = vmatprep.subr.bf16.mxu0 %v3225
      %3638 = vmatpush1.bf16.msra.mxu0 %v3224
      %3639 = vmatprep.subr.bf16.mxu0 %v3232
      %3640 = vmatpush1.bf16.msra.mxu0 %v3231
      %3641 = vmatprep.subr.bf16.mxu0 %v3239
      %3642 = vmatpush1.bf16.msra.mxu0 %v3238
      %3643 = vmatprep.subr.bf16.mxu0 %v3246
      %3644 = vmatpush1.bf16.msra.mxu0 %v3245
      %3645 = vmatprep.subr.bf16.mxu0 %v3253
      %3646 = vmatpush1.bf16.msra.mxu0 %v3252
      %3647 = vmatprep.subr.bf16.mxu0 %v3260
      %3648 = vmatpush1.bf16.msra.mxu0 %v3259
      %3649 = vmatprep.subr.bf16.mxu0 %v3267
      %3650 = vmatpush1.bf16.msra.mxu0 %v3266
      %3651 = vmatprep.subr.bf16.mxu0 %v3274
      %3652 = vmatpush1.bf16.msra.mxu0 %v3273
      %3653 = vmatprep.subr.bf16.mxu0 %v3281
      %3654 = vmatpush1.bf16.msra.mxu0 %v3280
      %3655 = vmatprep.mubr.bf16.mxu0 %v2115
      %3656 = vmatmul.mubr.bf16.gmra.mrb[0].mxu0 %v2114
      %v3657 = vpop.f32.mrb[0].mxu0
      %v3658 = vadd.f32 %v2439, %v3657
      %v3659 = vpop.f32.mrb[0].mxu0
      %v3660 = vadd.f32 %v2443, %v3659
      %v3661 = vpop.f32.mrb[0].mxu0
      %v3662 = vadd.f32 %v2439, %v3661
      %v3663 = vpop.f32.mrb[0].mxu0
      %v3664 = vadd.f32 %v2443, %v3663
      %3665 = vmatprep.mubr.bf16.mxu0 %v2119
      %3666 = vmatmul.mubr.bf16.gmra.mrb[0].mxu0 %v2118
      %v3667 = vpop.f32.mrb[0].mxu0
      %v3668 = vadd.f32 %v2439, %v3667
      %v3669 = vpop.f32.mrb[0].mxu0
      %v3670 = vadd.f32 %v2443, %v3669
      %v3671 = vpop.f32.mrb[0].mxu0
      %v3672 = vadd.f32 %v2439, %v3671
      %v3673 = vpop.f32.mrb[0].mxu0
      %v3674 = vadd.f32 %v2443, %v3673
      %3675 = vmatprep.mubr.bf16.mxu0 %v2123
      %3676 = vmatmul.mubr.bf16.gmra.mrb[0].mxu0 %v2122
      %v3677 = vpop.f32.mrb[0].mxu0
      %v3678 = vadd.f32 %v2439, %v3677
      %v3679 = vpop.f32.mrb[0].mxu0
      %v3680 = vadd.f32 %v2443, %v3679
      %v3681 = vpop.f32.mrb[0].mxu0
      %v3682 = vadd.f32 %v2439, %v3681
      %v3683 = vpop.f32.mrb[0].mxu0
      %v3684 = vadd.f32 %v2443, %v3683
      %3685 = vmatprep.mubr.bf16.mxu0 %v2127
      %3686 = vmatmul.mubr.bf16.gmra.mrb[0].mxu0 %v2126
      %v3687 = vpop.f32.mrb[0].mxu0
      %v3688 = vadd.f32 %v2439, %v3687
      %v3689 = vpop.f32.mrb[0].mxu0
      %v3690 = vadd.f32 %v2443, %v3689
      %v3691 = vpop.f32.mrb[0].mxu0
      %v3692 = vadd.f32 %v2439, %v3691
      %v3693 = vpop.f32.mrb[0].mxu0
      %v3694 = vadd.f32 %v2443, %v3693
      %3695 = vmatprep.mubr.bf16.mxu0 %v2131
      %3696 = vmatmul.mubr.bf16.gmra.mrb[0].mxu0 %v2130
      %v3697 = vpop.f32.mrb[0].mxu0
      %v3698 = vadd.f32 %v2439, %v3697
      %v3699 = vpop.f32.mrb[0].mxu0
      %v3700 = vadd.f32 %v2443, %v3699
      %v3701 = vpop.f32.mrb[0].mxu0
      %v3702 = vadd.f32 %v2439, %v3701
      %v3703 = vpop.f32.mrb[0].mxu0
      %v3704 = vadd.f32 %v2443, %v3703
      %3705 = vmatprep.mubr.bf16.mxu0 %v2135
      %3706 = vmatmul.mubr.bf16.gmra.mrb[0].mxu0 %v2134
      %v3707 = vpop.f32.mrb[0].mxu0
      %v3708 = vadd.f32 %v2439, %v3707
      %v3709 = vpop.f32.mrb[0].mxu0
      %v3710 = vadd.f32 %v2443, %v3709
      %v3711 = vpop.f32.mrb[0].mxu0
      %v3712 = vadd.f32 %v2439, %v3711
      %v3713 = vpop.f32.mrb[0].mxu0
      %v3714 = vadd.f32 %v2443, %v3713
      %3715 = vmatprep.mubr.bf16.mxu0 %v2139
      %3716 = vmatmul.mubr.bf16.gmra.mrb[0].mxu0 %v2138
      %v3717 = vpop.f32.mrb[0].mxu0
      %v3718 = vadd.f32 %v2439, %v3717
      %v3719 = vpop.f32.mrb[0].mxu0
      %v3720 = vadd.f32 %v2443, %v3719
      %v3721 = vpop.f32.mrb[0].mxu0
      %v3722 = vadd.f32 %v2439, %v3721
      %v3723 = vpop.f32.mrb[0].mxu0
      %v3724 = vadd.f32 %v2443, %v3723
      %3725 = vmatprep.mubr.bf16.mxu0 %v2143
      %3726 = vmatmul.mubr.bf16.gmra.mrb[0].mxu0 %v2142
      %v3727 = vpop.f32.mrb[0].mxu0
      %v3728 = vadd.f32 %v2439, %v3727
      %v3729 = vpop.f32.mrb[0].mxu0
      %v3730 = vadd.f32 %v2443, %v3729
      %v3731 = vpop.f32.mrb[0].mxu0
      %v3732 = vadd.f32 %v2439, %v3731
      %v3733 = vpop.f32.mrb[0].mxu0
      %v3734 = vadd.f32 %v2443, %v3733
      %3735 = vmatprep.mubr.bf16.mxu0 %v2147
      %3736 = vmatmul.mubr.bf16.gmra.mrb[0].mxu0 %v2146
      %v3737 = vpop.f32.mrb[0].mxu0
      %v3738 = vadd.f32 %v2439, %v3737
      %v3739 = vpop.f32.mrb[0].mxu0
      %v3740 = vadd.f32 %v2443, %v3739
      %v3741 = vpop.f32.mrb[0].mxu0
      %v3742 = vadd.f32 %v2439, %v3741
      %v3743 = vpop.f32.mrb[0].mxu0
      %v3744 = vadd.f32 %v2443, %v3743
      %3745 = vmatprep.mubr.bf16.mxu0 %v2151
      %3746 = vmatmul.mubr.bf16.gmra.mrb[0].mxu0 %v2150
      %v3747 = vpop.f32.mrb[0].mxu0
      %v3748 = vadd.f32 %v2439, %v3747
      %v3749 = vpop.f32.mrb[0].mxu0
      %v3750 = vadd.f32 %v2443, %v3749
      %v3751 = vpop.f32.mrb[0].mxu0
      %v3752 = vadd.f32 %v2439, %v3751
      %v3753 = vpop.f32.mrb[0].mxu0
      %v3754 = vadd.f32 %v2443, %v3753
      %3755 = vmatprep.mubr.bf16.mxu0 %v2155
      %3756 = vmatmul.mubr.bf16.gmra.mrb[0].mxu0 %v2154
      %v3757 = vpop.f32.mrb[0].mxu0
      %v3758 = vadd.f32 %v2439, %v3757
      %v3759 = vpop.f32.mrb[0].mxu0
      %v3760 = vadd.f32 %v2443, %v3759
      %v3761 = vpop.f32.mrb[0].mxu0
      %v3762 = vadd.f32 %v2439, %v3761
      %v3763 = vpop.f32.mrb[0].mxu0
      %v3764 = vadd.f32 %v2443, %v3763
      %3765 = vmatprep.mubr.bf16.mxu0 %v2159
      %3766 = vmatmul.mubr.bf16.gmra.mrb[0].mxu0 %v2158
      %v3767 = vpop.f32.mrb[0].mxu0
      %v3768 = vadd.f32 %v2439, %v3767
      %v3769 = vpop.f32.mrb[0].mxu0
      %v3770 = vadd.f32 %v2443, %v3769
      %v3771 = vpop.f32.mrb[0].mxu0
      %v3772 = vadd.f32 %v2439, %v3771
      %v3773 = vpop.f32.mrb[0].mxu0
      %v3774 = vadd.f32 %v2443, %v3773
      %3775 = vmatprep.mubr.bf16.mxu0 %v2163
      %3776 = vmatmul.mubr.bf16.gmra.mrb[0].mxu0 %v2162
      %v3777 = vpop.f32.mrb[0].mxu0
      %v3778 = vadd.f32 %v2439, %v3777
      %v3779 = vpop.f32.mrb[0].mxu0
      %v3780 = vadd.f32 %v2443, %v3779
      %v3781 = vpop.f32.mrb[0].mxu0
      %v3782 = vadd.f32 %v2439, %v3781
      %v3783 = vpop.f32.mrb[0].mxu0
      %v3784 = vadd.f32 %v2443, %v3783
      %3785 = vmatprep.mubr.bf16.mxu0 %v2167
      %3786 = vmatmul.mubr.bf16.gmra.mrb[0].mxu0 %v2166
      %v3787 = vpop.f32.mrb[0].mxu0
      %v3788 = vadd.f32 %v2439, %v3787
      %v3789 = vpop.f32.mrb[0].mxu0
      %v3790 = vadd.f32 %v2443, %v3789
      %v3791 = vpop.f32.mrb[0].mxu0
      %v3792 = vadd.f32 %v2439, %v3791
      %v3793 = vpop.f32.mrb[0].mxu0
      %v3794 = vadd.f32 %v2443, %v3793
      %3795 = vmatprep.mubr.bf16.mxu0 %v2171
      %3796 = vmatmul.mubr.bf16.gmra.mrb[0].mxu0 %v2170
      %v3797 = vpop.f32.mrb[0].mxu0
      %v3798 = vadd.f32 %v2439, %v3797
      %v3799 = vpop.f32.mrb[0].mxu0
      %v3800 = vadd.f32 %v2443, %v3799
      %v3801 = vpop.f32.mrb[0].mxu0
      %v3802 = vadd.f32 %v2439, %v3801
      %v3803 = vpop.f32.mrb[0].mxu0
      %v3804 = vadd.f32 %v2443, %v3803
      %3805 = vmatprep.mubr.bf16.mxu0 %v2175
      %3806 = vmatmul.mubr.bf16.gmra.mrb[0].mxu0 %v2174
      %v3807 = vpop.f32.mrb[0].mxu0
      %v3808 = vadd.f32 %v2439, %v3807
      %v3809 = vpop.f32.mrb[0].mxu0
      %v3810 = vadd.f32 %v2443, %v3809
      %v3811 = vpop.f32.mrb[0].mxu0
      %v3812 = vadd.f32 %v2439, %v3811
      %v3813 = vpop.f32.mrb[0].mxu0
      %v3814 = vadd.f32 %v2443, %v3813
      %3815 = vdwg.mxu0
      %3816 = vmatprep.subr.bf16.mxu0 %v3288
      %3817 = vmatpush1.bf16.msra.mxu0 %v3287
      %3818 = vmatprep.subr.bf16.mxu0 %v3295
      %3819 = vmatpush1.bf16.msra.mxu0 %v3294
      %3820 = vmatprep.subr.bf16.mxu0 %v3302
      %3821 = vmatpush1.bf16.msra.mxu0 %v3301
      %3822 = vmatprep.subr.bf16.mxu0 %v3309
      %3823 = vmatpush1.bf16.msra.mxu0 %v3308
      %3824 = vmatprep.subr.bf16.mxu0 %v3316
      %3825 = vmatpush1.bf16.msra.mxu0 %v3315
      %3826 = vmatprep.subr.bf16.mxu0 %v3323
      %3827 = vmatpush1.bf16.msra.mxu0 %v3322
      %3828 = vmatprep.subr.bf16.mxu0 %v3330
      %3829 = vmatpush1.bf16.msra.mxu0 %v3329
      %3830 = vmatprep.subr.bf16.mxu0 %v3337
      %3831 = vmatpush1.bf16.msra.mxu0 %v3336
      %3832 = vmatprep.subr.bf16.mxu0 %v3344
      %3833 = vmatpush1.bf16.msra.mxu0 %v3343
      %3834 = vmatprep.subr.bf16.mxu0 %v3351
      %3835 = vmatpush1.bf16.msra.mxu0 %v3350
      %3836 = vmatprep.subr.bf16.mxu0 %v3358
      %3837 = vmatpush1.bf16.msra.mxu0 %v3357
      %3838 = vmatprep.subr.bf16.mxu0 %v3365
      %3839 = vmatpush1.bf16.msra.mxu0 %v3364
      %3840 = vmatprep.subr.bf16.mxu0 %v3372
      %3841 = vmatpush1.bf16.msra.mxu0 %v3371
      %3842 = vmatprep.subr.bf16.mxu0 %v3379
      %3843 = vmatpush1.bf16.msra.mxu0 %v3378
      %3844 = vmatprep.subr.bf16.mxu0 %v3386
      %3845 = vmatpush1.bf16.msra.mxu0 %v3385
      %3846 = vmatprep.subr.bf16.mxu0 %v3393
      %3847 = vmatpush1.bf16.msra.mxu0 %v3392
      %3848 = vmatprep.mubr.bf16.mxu0 %v2117
      %3849 = vmatmul.mubr.bf16.gmra.mrb[0].mxu0 %v2116
      %v3850 = vpop.f32.mrb[0].mxu0
      %v3851 = vadd.f32 %v3658, %v3850
      %v3852 = vpop.f32.mrb[0].mxu0
      %v3853 = vadd.f32 %v3660, %v3852
      %v3854 = vpop.f32.mrb[0].mxu0
      %v3855 = vadd.f32 %v3662, %v3854
      %v3856 = vpop.f32.mrb[0].mxu0
      %v3857 = vadd.f32 %v3664, %v3856
      %3858 = vmatprep.mubr.bf16.mxu0 %v2121
      %3859 = vmatmul.mubr.bf16.gmra.mrb[0].mxu0 %v2120
      %v3860 = vpop.f32.mrb[0].mxu0
      %v3861 = vadd.f32 %v3668, %v3860
      %v3862 = vpop.f32.mrb[0].mxu0
      %v3863 = vadd.f32 %v3670, %v3862
      %v3864 = vpop.f32.mrb[0].mxu0
      %v3865 = vadd.f32 %v3672, %v3864
      %v3866 = vpop.f32.mrb[0].mxu0
      %v3867 = vadd.f32 %v3674, %v3866
      %3868 = vmatprep.mubr.bf16.mxu0 %v2125
      %3869 = vmatmul.mubr.bf16.gmra.mrb[0].mxu0 %v2124
      %v3870 = vpop.f32.mrb[0].mxu0
      %v3871 = vadd.f32 %v3678, %v3870
      %v3872 = vpop.f32.mrb[0].mxu0
      %v3873 = vadd.f32 %v3680, %v3872
      %v3874 = vpop.f32.mrb[0].mxu0
      %v3875 = vadd.f32 %v3682, %v3874
      %v3876 = vpop.f32.mrb[0].mxu0
      %v3877 = vadd.f32 %v3684, %v3876
      %3878 = vmatprep.mubr.bf16.mxu0 %v2129
      %3879 = vmatmul.mubr.bf16.gmra.mrb[0].mxu0 %v2128
      %v3880 = vpop.f32.mrb[0].mxu0
      %v3881 = vadd.f32 %v3688, %v3880
      %v3882 = vpop.f32.mrb[0].mxu0
      %v3883 = vadd.f32 %v3690, %v3882
      %v3884 = vpop.f32.mrb[0].mxu0
      %v3885 = vadd.f32 %v3692, %v3884
      %v3886 = vpop.f32.mrb[0].mxu0
      %v3887 = vadd.f32 %v3694, %v3886
      %3888 = vmatprep.mubr.bf16.mxu0 %v2133
      %3889 = vmatmul.mubr.bf16.gmra.mrb[0].mxu0 %v2132
      %v3890 = vpop.f32.mrb[0].mxu0
      %v3891 = vadd.f32 %v3698, %v3890
      %v3892 = vpop.f32.mrb[0].mxu0
      %v3893 = vadd.f32 %v3700, %v3892
      %v3894 = vpop.f32.mrb[0].mxu0
      %v3895 = vadd.f32 %v3702, %v3894
      %v3896 = vpop.f32.mrb[0].mxu0
      %v3897 = vadd.f32 %v3704, %v3896
      %3898 = vmatprep.mubr.bf16.mxu0 %v2137
      %3899 = vmatmul.mubr.bf16.gmra.mrb[0].mxu0 %v2136
      %v3900 = vpop.f32.mrb[0].mxu0
      %v3901 = vadd.f32 %v3708, %v3900
      %v3902 = vpop.f32.mrb[0].mxu0
      %v3903 = vadd.f32 %v3710, %v3902
      %v3904 = vpop.f32.mrb[0].mxu0
      %v3905 = vadd.f32 %v3712, %v3904
      %v3906 = vpop.f32.mrb[0].mxu0
      %v3907 = vadd.f32 %v3714, %v3906
      %3908 = vmatprep.mubr.bf16.mxu0 %v2141
      %3909 = vmatmul.mubr.bf16.gmra.mrb[0].mxu0 %v2140
      %v3910 = vpop.f32.mrb[0].mxu0
      %v3911 = vadd.f32 %v3718, %v3910
      %v3912 = vpop.f32.mrb[0].mxu0
      %v3913 = vadd.f32 %v3720, %v3912
      %v3914 = vpop.f32.mrb[0].mxu0
      %v3915 = vadd.f32 %v3722, %v3914
      %v3916 = vpop.f32.mrb[0].mxu0
      %v3917 = vadd.f32 %v3724, %v3916
      %3918 = vmatprep.mubr.bf16.mxu0 %v2145
      %3919 = vmatmul.mubr.bf16.gmra.mrb[0].mxu0 %v2144
      %v3920 = vpop.f32.mrb[0].mxu0
      %v3921 = vadd.f32 %v3728, %v3920
      %v3922 = vpop.f32.mrb[0].mxu0
      %v3923 = vadd.f32 %v3730, %v3922
      %v3924 = vpop.f32.mrb[0].mxu0
      %v3925 = vadd.f32 %v3732, %v3924
      %v3926 = vpop.f32.mrb[0].mxu0
      %v3927 = vadd.f32 %v3734, %v3926
      %3928 = vmatprep.mubr.bf16.mxu0 %v2149
      %3929 = vmatmul.mubr.bf16.gmra.mrb[0].mxu0 %v2148
      %v3930 = vpop.f32.mrb[0].mxu0
      %v3931 = vadd.f32 %v3738, %v3930
      %v3932 = vpop.f32.mrb[0].mxu0
      %v3933 = vadd.f32 %v3740, %v3932
      %v3934 = vpop.f32.mrb[0].mxu0
      %v3935 = vadd.f32 %v3742, %v3934
      %v3936 = vpop.f32.mrb[0].mxu0
      %v3937 = vadd.f32 %v3744, %v3936
      %3938 = vmatprep.mubr.bf16.mxu0 %v2153
      %3939 = vmatmul.mubr.bf16.gmra.mrb[0].mxu0 %v2152
      %v3940 = vpop.f32.mrb[0].mxu0
      %v3941 = vadd.f32 %v3748, %v3940
      %v3942 = vpop.f32.mrb[0].mxu0
      %v3943 = vadd.f32 %v3750, %v3942
      %v3944 = vpop.f32.mrb[0].mxu0
      %v3945 = vadd.f32 %v3752, %v3944
      %v3946 = vpop.f32.mrb[0].mxu0
      %v3947 = vadd.f32 %v3754, %v3946
      %3948 = vmatprep.mubr.bf16.mxu0 %v2157
      %3949 = vmatmul.mubr.bf16.gmra.mrb[0].mxu0 %v2156
      %v3950 = vpop.f32.mrb[0].mxu0
      %v3951 = vadd.f32 %v3758, %v3950
      %v3952 = vpop.f32.mrb[0].mxu0
      %v3953 = vadd.f32 %v3760, %v3952
      %v3954 = vpop.f32.mrb[0].mxu0
      %v3955 = vadd.f32 %v3762, %v3954
      %v3956 = vpop.f32.mrb[0].mxu0
      %v3957 = vadd.f32 %v3764, %v3956
      %3958 = vmatprep.mubr.bf16.mxu0 %v2161
      %3959 = vmatmul.mubr.bf16.gmra.mrb[0].mxu0 %v2160
      %v3960 = vpop.f32.mrb[0].mxu0
      %v3961 = vadd.f32 %v3768, %v3960
      %v3962 = vpop.f32.mrb[0].mxu0
      %v3963 = vadd.f32 %v3770, %v3962
      %v3964 = vpop.f32.mrb[0].mxu0
      %v3965 = vadd.f32 %v3772, %v3964
      %v3966 = vpop.f32.mrb[0].mxu0
      %v3967 = vadd.f32 %v3774, %v3966
      %3968 = vmatprep.mubr.bf16.mxu0 %v2165
      %3969 = vmatmul.mubr.bf16.gmra.mrb[0].mxu0 %v2164
      %v3970 = vpop.f32.mrb[0].mxu0
      %v3971 = vadd.f32 %v3778, %v3970
      %v3972 = vpop.f32.mrb[0].mxu0
      %v3973 = vadd.f32 %v3780, %v3972
      %v3974 = vpop.f32.mrb[0].mxu0
      %v3975 = vadd.f32 %v3782, %v3974
      %v3976 = vpop.f32.mrb[0].mxu0
      %v3977 = vadd.f32 %v3784, %v3976
      %3978 = vmatprep.mubr.bf16.mxu0 %v2169
      %3979 = vmatmul.mubr.bf16.gmra.mrb[0].mxu0 %v2168
      %v3980 = vpop.f32.mrb[0].mxu0
      %v3981 = vadd.f32 %v3788, %v3980
      %v3982 = vpop.f32.mrb[0].mxu0
      %v3983 = vadd.f32 %v3790, %v3982
      %v3984 = vpop.f32.mrb[0].mxu0
      %v3985 = vadd.f32 %v3792, %v3984
      %v3986 = vpop.f32.mrb[0].mxu0
      %v3987 = vadd.f32 %v3794, %v3986
      %3988 = vmatprep.mubr.bf16.mxu0 %v2173
      %3989 = vmatmul.mubr.bf16.gmra.mrb[0].mxu0 %v2172
      %v3990 = vpop.f32.mrb[0].mxu0
      %v3991 = vadd.f32 %v3798, %v3990
      %v3992 = vpop.f32.mrb[0].mxu0
      %v3993 = vadd.f32 %v3800, %v3992
      %v3994 = vpop.f32.mrb[0].mxu0
      %v3995 = vadd.f32 %v3802, %v3994
      %v3996 = vpop.f32.mrb[0].mxu0
      %v3997 = vadd.f32 %v3804, %v3996
      %3998 = vmatprep.mubr.bf16.mxu0 %v2177
      %3999 = vmatmul.mubr.bf16.gmra.mrb[0].mxu0 %v2176
      %v4000 = vpop.f32.mrb[0].mxu0
      %v4001 = vadd.f32 %v3808, %v4000
      %v4002 = vpop.f32.mrb[0].mxu0
      %v4003 = vadd.f32 %v3810, %v4002
      %v4004 = vpop.f32.mrb[0].mxu0
      %v4005 = vadd.f32 %v3812, %v4004
      %v4006 = vpop.f32.mrb[0].mxu0
      %v4007 = vadd.f32 %v3814, %v4006
      %4008 = vdwg.mxu0
      %4009 = vmatprep.subr.bf16.mxu0 %v3178
      %4010 = vmatpush1.bf16.msra.mxu0 %v3177
      %4011 = vmatprep.subr.bf16.mxu0 %v3185
      %4012 = vmatpush1.bf16.msra.mxu0 %v3184
      %4013 = vmatprep.subr.bf16.mxu0 %v3192
      %4014 = vmatpush1.bf16.msra.mxu0 %v3191
      %4015 = vmatprep.subr.bf16.mxu0 %v3199
      %4016 = vmatpush1.bf16.msra.mxu0 %v3198
      %4017 = vmatprep.subr.bf16.mxu0 %v3206
      %4018 = vmatpush1.bf16.msra.mxu0 %v3205
      %4019 = vmatprep.subr.bf16.mxu0 %v3213
      %4020 = vmatpush1.bf16.msra.mxu0 %v3212
      %4021 = vmatprep.subr.bf16.mxu0 %v3220
      %4022 = vmatpush1.bf16.msra.mxu0 %v3219
      %4023 = vmatprep.subr.bf16.mxu0 %v3227
      %4024 = vmatpush1.bf16.msra.mxu0 %v3226
      %4025 = vmatprep.subr.bf16.mxu0 %v3234
      %4026 = vmatpush1.bf16.msra.mxu0 %v3233
      %4027 = vmatprep.subr.bf16.mxu0 %v3241
      %4028 = vmatpush1.bf16.msra.mxu0 %v3240
      %4029 = vmatprep.subr.bf16.mxu0 %v3248
      %4030 = vmatpush1.bf16.msra.mxu0 %v3247
      %4031 = vmatprep.subr.bf16.mxu0 %v3255
      %4032 = vmatpush1.bf16.msra.mxu0 %v3254
      %4033 = vmatprep.subr.bf16.mxu0 %v3262
      %4034 = vmatpush1.bf16.msra.mxu0 %v3261
      %4035 = vmatprep.subr.bf16.mxu0 %v3269
      %4036 = vmatpush1.bf16.msra.mxu0 %v3268
      %4037 = vmatprep.subr.bf16.mxu0 %v3276
      %4038 = vmatpush1.bf16.msra.mxu0 %v3275
      %4039 = vmatprep.subr.bf16.mxu0 %v3283
      %4040 = vmatpush1.bf16.msra.mxu0 %v3282
      %4041 = vmatprep.mubr.bf16.mxu0 %v2115
      %4042 = vmatmul.mubr.bf16.gmra.mrb[0].mxu0 %v2114
      %v4043 = vpop.f32.mrb[0].mxu0
      %v4044 = vadd.f32 %v2447, %v4043
      %v4045 = vpop.f32.mrb[0].mxu0
      %v4046 = vadd.f32 %v2451, %v4045
      %v4047 = vpop.f32.mrb[0].mxu0
      %v4048 = vadd.f32 %v2447, %v4047
      %v4049 = vpop.f32.mrb[0].mxu0
      %v4050 = vadd.f32 %v2451, %v4049
      %4051 = vmatprep.mubr.bf16.mxu0 %v2119
      %4052 = vmatmul.mubr.bf16.gmra.mrb[0].mxu0 %v2118
      %v4053 = vpop.f32.mrb[0].mxu0
      %v4054 = vadd.f32 %v2447, %v4053
      %v4055 = vpop.f32.mrb[0].mxu0
      %v4056 = vadd.f32 %v2451, %v4055
      %v4057 = vpop.f32.mrb[0].mxu0
      %v4058 = vadd.f32 %v2447, %v4057
      %v4059 = vpop.f32.mrb[0].mxu0
      %v4060 = vadd.f32 %v2451, %v4059
      %4061 = vmatprep.mubr.bf16.mxu0 %v2123
      %4062 = vmatmul.mubr.bf16.gmra.mrb[0].mxu0 %v2122
      %v4063 = vpop.f32.mrb[0].mxu0
      %v4064 = vadd.f32 %v2447, %v4063
      %v4065 = vpop.f32.mrb[0].mxu0
      %v4066 = vadd.f32 %v2451, %v4065
      %v4067 = vpop.f32.mrb[0].mxu0
      %v4068 = vadd.f32 %v2447, %v4067
      %v4069 = vpop.f32.mrb[0].mxu0
      %v4070 = vadd.f32 %v2451, %v4069
      %4071 = vmatprep.mubr.bf16.mxu0 %v2127
      %4072 = vmatmul.mubr.bf16.gmra.mrb[0].mxu0 %v2126
      %v4073 = vpop.f32.mrb[0].mxu0
      %v4074 = vadd.f32 %v2447, %v4073
      %v4075 = vpop.f32.mrb[0].mxu0
      %v4076 = vadd.f32 %v2451, %v4075
      %v4077 = vpop.f32.mrb[0].mxu0
      %v4078 = vadd.f32 %v2447, %v4077
      %v4079 = vpop.f32.mrb[0].mxu0
      %v4080 = vadd.f32 %v2451, %v4079
      %4081 = vmatprep.mubr.bf16.mxu0 %v2131
      %4082 = vmatmul.mubr.bf16.gmra.mrb[0].mxu0 %v2130
      %v4083 = vpop.f32.mrb[0].mxu0
      %v4084 = vadd.f32 %v2447, %v4083
      %v4085 = vpop.f32.mrb[0].mxu0
      %v4086 = vadd.f32 %v2451, %v4085
      %v4087 = vpop.f32.mrb[0].mxu0
      %v4088 = vadd.f32 %v2447, %v4087
      %v4089 = vpop.f32.mrb[0].mxu0
      %v4090 = vadd.f32 %v2451, %v4089
      %4091 = vmatprep.mubr.bf16.mxu0 %v2135
      %4092 = vmatmul.mubr.bf16.gmra.mrb[0].mxu0 %v2134
      %v4093 = vpop.f32.mrb[0].mxu0
      %v4094 = vadd.f32 %v2447, %v4093
      %v4095 = vpop.f32.mrb[0].mxu0
      %v4096 = vadd.f32 %v2451, %v4095
      %v4097 = vpop.f32.mrb[0].mxu0
      %v4098 = vadd.f32 %v2447, %v4097
      %v4099 = vpop.f32.mrb[0].mxu0
      %v4100 = vadd.f32 %v2451, %v4099
      %4101 = vmatprep.mubr.bf16.mxu0 %v2139
      %4102 = vmatmul.mubr.bf16.gmra.mrb[0].mxu0 %v2138
      %v4103 = vpop.f32.mrb[0].mxu0
      %v4104 = vadd.f32 %v2447, %v4103
      %v4105 = vpop.f32.mrb[0].mxu0
      %v4106 = vadd.f32 %v2451, %v4105
      %v4107 = vpop.f32.mrb[0].mxu0
      %v4108 = vadd.f32 %v2447, %v4107
      %v4109 = vpop.f32.mrb[0].mxu0
      %v4110 = vadd.f32 %v2451, %v4109
      %4111 = vmatprep.mubr.bf16.mxu0 %v2143
      %4112 = vmatmul.mubr.bf16.gmra.mrb[0].mxu0 %v2142
      %v4113 = vpop.f32.mrb[0].mxu0
      %v4114 = vadd.f32 %v2447, %v4113
      %v4115 = vpop.f32.mrb[0].mxu0
      %v4116 = vadd.f32 %v2451, %v4115
      %v4117 = vpop.f32.mrb[0].mxu0
      %v4118 = vadd.f32 %v2447, %v4117
      %v4119 = vpop.f32.mrb[0].mxu0
      %v4120 = vadd.f32 %v2451, %v4119
      %4121 = vmatprep.mubr.bf16.mxu0 %v2147
      %4122 = vmatmul.mubr.bf16.gmra.mrb[0].mxu0 %v2146
      %v4123 = vpop.f32.mrb[0].mxu0
      %v4124 = vadd.f32 %v2447, %v4123
      %v4125 = vpop.f32.mrb[0].mxu0
      %v4126 = vadd.f32 %v2451, %v4125
      %v4127 = vpop.f32.mrb[0].mxu0
      %v4128 = vadd.f32 %v2447, %v4127
      %v4129 = vpop.f32.mrb[0].mxu0
      %v4130 = vadd.f32 %v2451, %v4129
      %4131 = vmatprep.mubr.bf16.mxu0 %v2151
      %4132 = vmatmul.mubr.bf16.gmra.mrb[0].mxu0 %v2150
      %v4133 = vpop.f32.mrb[0].mxu0
      %v4134 = vadd.f32 %v2447, %v4133
      %v4135 = vpop.f32.mrb[0].mxu0
      %v4136 = vadd.f32 %v2451, %v4135
      %v4137 = vpop.f32.mrb[0].mxu0
      %v4138 = vadd.f32 %v2447, %v4137
      %v4139 = vpop.f32.mrb[0].mxu0
      %v4140 = vadd.f32 %v2451, %v4139
      %4141 = vmatprep.mubr.bf16.mxu0 %v2155
      %4142 = vmatmul.mubr.bf16.gmra.mrb[0].mxu0 %v2154
      %v4143 = vpop.f32.mrb[0].mxu0
      %v4144 = vadd.f32 %v2447, %v4143
      %v4145 = vpop.f32.mrb[0].mxu0
      %v4146 = vadd.f32 %v2451, %v4145
      %v4147 = vpop.f32.mrb[0].mxu0
      %v4148 = vadd.f32 %v2447, %v4147
      %v4149 = vpop.f32.mrb[0].mxu0
      %v4150 = vadd.f32 %v2451, %v4149
      %4151 = vmatprep.mubr.bf16.mxu0 %v2159
      %4152 = vmatmul.mubr.bf16.gmra.mrb[0].mxu0 %v2158
      %v4153 = vpop.f32.mrb[0].mxu0
      %v4154 = vadd.f32 %v2447, %v4153
      %v4155 = vpop.f32.mrb[0].mxu0
      %v4156 = vadd.f32 %v2451, %v4155
      %v4157 = vpop.f32.mrb[0].mxu0
      %v4158 = vadd.f32 %v2447, %v4157
      %v4159 = vpop.f32.mrb[0].mxu0
      %v4160 = vadd.f32 %v2451, %v4159
      %4161 = vmatprep.mubr.bf16.mxu0 %v2163
      %4162 = vmatmul.mubr.bf16.gmra.mrb[0].mxu0 %v2162
      %v4163 = vpop.f32.mrb[0].mxu0
      %v4164 = vadd.f32 %v2447, %v4163
      %v4165 = vpop.f32.mrb[0].mxu0
      %v4166 = vadd.f32 %v2451, %v4165
      %v4167 = vpop.f32.mrb[0].mxu0
      %v4168 = vadd.f32 %v2447, %v4167
      %v4169 = vpop.f32.mrb[0].mxu0
      %v4170 = vadd.f32 %v2451, %v4169
      %4171 = vmatprep.mubr.bf16.mxu0 %v2167
      %4172 = vmatmul.mubr.bf16.gmra.mrb[0].mxu0 %v2166
      %v4173 = vpop.f32.mrb[0].mxu0
      %v4174 = vadd.f32 %v2447, %v4173
      %v4175 = vpop.f32.mrb[0].mxu0
      %v4176 = vadd.f32 %v2451, %v4175
      %v4177 = vpop.f32.mrb[0].mxu0
      %v4178 = vadd.f32 %v2447, %v4177
      %v4179 = vpop.f32.mrb[0].mxu0
      %v4180 = vadd.f32 %v2451, %v4179
      %4181 = vmatprep.mubr.bf16.mxu0 %v2171
      %4182 = vmatmul.mubr.bf16.gmra.mrb[0].mxu0 %v2170
      %v4183 = vpop.f32.mrb[0].mxu0
      %v4184 = vadd.f32 %v2447, %v4183
      %v4185 = vpop.f32.mrb[0].mxu0
      %v4186 = vadd.f32 %v2451, %v4185
      %v4187 = vpop.f32.mrb[0].mxu0
      %v4188 = vadd.f32 %v2447, %v4187
      %v4189 = vpop.f32.mrb[0].mxu0
      %v4190 = vadd.f32 %v2451, %v4189
      %4191 = vmatprep.mubr.bf16.mxu0 %v2175
      %4192 = vmatmul.mubr.bf16.gmra.mrb[0].mxu0 %v2174
      %v4193 = vpop.f32.mrb[0].mxu0
      %v4194 = vadd.f32 %v2447, %v4193
      %v4195 = vpop.f32.mrb[0].mxu0
      %v4196 = vadd.f32 %v2451, %v4195
      %v4197 = vpop.f32.mrb[0].mxu0
      %v4198 = vadd.f32 %v2447, %v4197
      %v4199 = vpop.f32.mrb[0].mxu0
      %v4200 = vadd.f32 %v2451, %v4199
      %4201 = vdwg.mxu0
      %4202 = vmatprep.subr.bf16.mxu0 %v3290
      %4203 = vmatpush1.bf16.msra.mxu0 %v3289
      %4204 = vmatprep.subr.bf16.mxu0 %v3297
      %4205 = vmatpush1.bf16.msra.mxu0 %v3296
      %4206 = vmatprep.subr.bf16.mxu0 %v3304
      %4207 = vmatpush1.bf16.msra.mxu0 %v3303
      %4208 = vmatprep.subr.bf16.mxu0 %v3311
      %4209 = vmatpush1.bf16.msra.mxu0 %v3310
      %4210 = vmatprep.subr.bf16.mxu0 %v3318
      %4211 = vmatpush1.bf16.msra.mxu0 %v3317
      %4212 = vmatprep.subr.bf16.mxu0 %v3325
      %4213 = vmatpush1.bf16.msra.mxu0 %v3324
      %4214 = vmatprep.subr.bf16.mxu0 %v3332
      %4215 = vmatpush1.bf16.msra.mxu0 %v3331
      %4216 = vmatprep.subr.bf16.mxu0 %v3339
      %4217 = vmatpush1.bf16.msra.mxu0 %v3338
      %4218 = vmatprep.subr.bf16.mxu0 %v3346
      %4219 = vmatpush1.bf16.msra.mxu0 %v3345
      %4220 = vmatprep.subr.bf16.mxu0 %v3353
      %4221 = vmatpush1.bf16.msra.mxu0 %v3352
      %4222 = vmatprep.subr.bf16.mxu0 %v3360
      %4223 = vmatpush1.bf16.msra.mxu0 %v3359
      %4224 = vmatprep.subr.bf16.mxu0 %v3367
      %4225 = vmatpush1.bf16.msra.mxu0 %v3366
      %4226 = vmatprep.subr.bf16.mxu0 %v3374
      %4227 = vmatpush1.bf16.msra.mxu0 %v3373
      %4228 = vmatprep.subr.bf16.mxu0 %v3381
      %4229 = vmatpush1.bf16.msra.mxu0 %v3380
      %4230 = vmatprep.subr.bf16.mxu0 %v3388
      %4231 = vmatpush1.bf16.msra.mxu0 %v3387
      %4232 = vmatprep.subr.bf16.mxu0 %v3395
      %4233 = vmatpush1.bf16.msra.mxu0 %v3394
      %4234 = vmatprep.mubr.bf16.mxu0 %v2117
      %4235 = vmatmul.mubr.bf16.gmra.mrb[0].mxu0 %v2116
      %v4236 = vpop.f32.mrb[0].mxu0
      %v4237 = vadd.f32 %v4044, %v4236
      %v4238 = vpop.f32.mrb[0].mxu0
      %v4239 = vadd.f32 %v4046, %v4238
      %v4240 = vpop.f32.mrb[0].mxu0
      %v4241 = vadd.f32 %v4048, %v4240
      %v4242 = vpop.f32.mrb[0].mxu0
      %v4243 = vadd.f32 %v4050, %v4242
      %4244 = vmatprep.mubr.bf16.mxu0 %v2121
      %4245 = vmatmul.mubr.bf16.gmra.mrb[0].mxu0 %v2120
      %v4246 = vpop.f32.mrb[0].mxu0
      %v4247 = vadd.f32 %v4054, %v4246
      %v4248 = vpop.f32.mrb[0].mxu0
      %v4249 = vadd.f32 %v4056, %v4248
      %v4250 = vpop.f32.mrb[0].mxu0
      %v4251 = vadd.f32 %v4058, %v4250
      %v4252 = vpop.f32.mrb[0].mxu0
      %v4253 = vadd.f32 %v4060, %v4252
      %4254 = vmatprep.mubr.bf16.mxu0 %v2125
      %4255 = vmatmul.mubr.bf16.gmra.mrb[0].mxu0 %v2124
      %v4256 = vpop.f32.mrb[0].mxu0
      %v4257 = vadd.f32 %v4064, %v4256
      %v4258 = vpop.f32.mrb[0].mxu0
      %v4259 = vadd.f32 %v4066, %v4258
      %v4260 = vpop.f32.mrb[0].mxu0
      %v4261 = vadd.f32 %v4068, %v4260
      %v4262 = vpop.f32.mrb[0].mxu0
      %v4263 = vadd.f32 %v4070, %v4262
      %4264 = vmatprep.mubr.bf16.mxu0 %v2129
      %4265 = vmatmul.mubr.bf16.gmra.mrb[0].mxu0 %v2128
      %v4266 = vpop.f32.mrb[0].mxu0
      %v4267 = vadd.f32 %v4074, %v4266
      %v4268 = vpop.f32.mrb[0].mxu0
      %v4269 = vadd.f32 %v4076, %v4268
      %v4270 = vpop.f32.mrb[0].mxu0
      %v4271 = vadd.f32 %v4078, %v4270
      %v4272 = vpop.f32.mrb[0].mxu0
      %v4273 = vadd.f32 %v4080, %v4272
      %4274 = vmatprep.mubr.bf16.mxu0 %v2133
      %4275 = vmatmul.mubr.bf16.gmra.mrb[0].mxu0 %v2132
      %v4276 = vpop.f32.mrb[0].mxu0
      %v4277 = vadd.f32 %v4084, %v4276
      %v4278 = vpop.f32.mrb[0].mxu0
      %v4279 = vadd.f32 %v4086, %v4278
      %v4280 = vpop.f32.mrb[0].mxu0
      %v4281 = vadd.f32 %v4088, %v4280
      %v4282 = vpop.f32.mrb[0].mxu0
      %v4283 = vadd.f32 %v4090, %v4282
      %4284 = vmatprep.mubr.bf16.mxu0 %v2137
      %4285 = vmatmul.mubr.bf16.gmra.mrb[0].mxu0 %v2136
      %v4286 = vpop.f32.mrb[0].mxu0
      %v4287 = vadd.f32 %v4094, %v4286
      %v4288 = vpop.f32.mrb[0].mxu0
      %v4289 = vadd.f32 %v4096, %v4288
      %v4290 = vpop.f32.mrb[0].mxu0
      %v4291 = vadd.f32 %v4098, %v4290
      %v4292 = vpop.f32.mrb[0].mxu0
      %v4293 = vadd.f32 %v4100, %v4292
      %4294 = vmatprep.mubr.bf16.mxu0 %v2141
      %4295 = vmatmul.mubr.bf16.gmra.mrb[0].mxu0 %v2140
      %v4296 = vpop.f32.mrb[0].mxu0
      %v4297 = vadd.f32 %v4104, %v4296
      %v4298 = vpop.f32.mrb[0].mxu0
      %v4299 = vadd.f32 %v4106, %v4298
      %v4300 = vpop.f32.mrb[0].mxu0
      %v4301 = vadd.f32 %v4108, %v4300
      %v4302 = vpop.f32.mrb[0].mxu0
      %v4303 = vadd.f32 %v4110, %v4302
      %4304 = vmatprep.mubr.bf16.mxu0 %v2145
      %4305 = vmatmul.mubr.bf16.gmra.mrb[0].mxu0 %v2144
      %v4306 = vpop.f32.mrb[0].mxu0
      %v4307 = vadd.f32 %v4114, %v4306
      %v4308 = vpop.f32.mrb[0].mxu0
      %v4309 = vadd.f32 %v4116, %v4308
      %v4310 = vpop.f32.mrb[0].mxu0
      %v4311 = vadd.f32 %v4118, %v4310
      %v4312 = vpop.f32.mrb[0].mxu0
      %v4313 = vadd.f32 %v4120, %v4312
      %4314 = vmatprep.mubr.bf16.mxu0 %v2149
      %4315 = vmatmul.mubr.bf16.gmra.mrb[0].mxu0 %v2148
      %v4316 = vpop.f32.mrb[0].mxu0
      %v4317 = vadd.f32 %v4124, %v4316
      %v4318 = vpop.f32.mrb[0].mxu0
      %v4319 = vadd.f32 %v4126, %v4318
      %v4320 = vpop.f32.mrb[0].mxu0
      %v4321 = vadd.f32 %v4128, %v4320
      %v4322 = vpop.f32.mrb[0].mxu0
      %v4323 = vadd.f32 %v4130, %v4322
      %4324 = vmatprep.mubr.bf16.mxu0 %v2153
      %4325 = vmatmul.mubr.bf16.gmra.mrb[0].mxu0 %v2152
      %v4326 = vpop.f32.mrb[0].mxu0
      %v4327 = vadd.f32 %v4134, %v4326
      %v4328 = vpop.f32.mrb[0].mxu0
      %v4329 = vadd.f32 %v4136, %v4328
      %v4330 = vpop.f32.mrb[0].mxu0
      %v4331 = vadd.f32 %v4138, %v4330
      %v4332 = vpop.f32.mrb[0].mxu0
      %v4333 = vadd.f32 %v4140, %v4332
      %4334 = vmatprep.mubr.bf16.mxu0 %v2157
      %4335 = vmatmul.mubr.bf16.gmra.mrb[0].mxu0 %v2156
      %v4336 = vpop.f32.mrb[0].mxu0
      %v4337 = vadd.f32 %v4144, %v4336
      %v4338 = vpop.f32.mrb[0].mxu0
      %v4339 = vadd.f32 %v4146, %v4338
      %v4340 = vpop.f32.mrb[0].mxu0
      %v4341 = vadd.f32 %v4148, %v4340
      %v4342 = vpop.f32.mrb[0].mxu0
      %v4343 = vadd.f32 %v4150, %v4342
      %4344 = vmatprep.mubr.bf16.mxu0 %v2161
      %4345 = vmatmul.mubr.bf16.gmra.mrb[0].mxu0 %v2160
      %v4346 = vpop.f32.mrb[0].mxu0
      %v4347 = vadd.f32 %v4154, %v4346
      %v4348 = vpop.f32.mrb[0].mxu0
      %v4349 = vadd.f32 %v4156, %v4348
      %v4350 = vpop.f32.mrb[0].mxu0
      %v4351 = vadd.f32 %v4158, %v4350
      %v4352 = vpop.f32.mrb[0].mxu0
      %v4353 = vadd.f32 %v4160, %v4352
      %4354 = vmatprep.mubr.bf16.mxu0 %v2165
      %4355 = vmatmul.mubr.bf16.gmra.mrb[0].mxu0 %v2164
      %v4356 = vpop.f32.mrb[0].mxu0
      %v4357 = vadd.f32 %v4164, %v4356
      %v4358 = vpop.f32.mrb[0].mxu0
      %v4359 = vadd.f32 %v4166, %v4358
      %v4360 = vpop.f32.mrb[0].mxu0
      %v4361 = vadd.f32 %v4168, %v4360
      %v4362 = vpop.f32.mrb[0].mxu0
      %v4363 = vadd.f32 %v4170, %v4362
      %4364 = vmatprep.mubr.bf16.mxu0 %v2169
      %4365 = vmatmul.mubr.bf16.gmra.mrb[0].mxu0 %v2168
      %v4366 = vpop.f32.mrb[0].mxu0
      %v4367 = vadd.f32 %v4174, %v4366
      %v4368 = vpop.f32.mrb[0].mxu0
      %v4369 = vadd.f32 %v4176, %v4368
      %v4370 = vpop.f32.mrb[0].mxu0
      %v4371 = vadd.f32 %v4178, %v4370
      %v4372 = vpop.f32.mrb[0].mxu0
      %v4373 = vadd.f32 %v4180, %v4372
      %4374 = vmatprep.mubr.bf16.mxu0 %v2173
      %4375 = vmatmul.mubr.bf16.gmra.mrb[0].mxu0 %v2172
      %v4376 = vpop.f32.mrb[0].mxu0
      %v4377 = vadd.f32 %v4184, %v4376
      %v4378 = vpop.f32.mrb[0].mxu0
      %v4379 = vadd.f32 %v4186, %v4378
      %v4380 = vpop.f32.mrb[0].mxu0
      %v4381 = vadd.f32 %v4188, %v4380
      %v4382 = vpop.f32.mrb[0].mxu0
      %v4383 = vadd.f32 %v4190, %v4382
      %4384 = vmatprep.mubr.bf16.mxu0 %v2177
      %4385 = vmatmul.mubr.bf16.gmra.mrb[0].mxu0 %v2176
      %v4386 = vpop.f32.mrb[0].mxu0
      %v4387 = vadd.f32 %v4194, %v4386
      %v4388 = vpop.f32.mrb[0].mxu0
      %v4389 = vadd.f32 %v4196, %v4388
      %v4390 = vpop.f32.mrb[0].mxu0
      %v4391 = vadd.f32 %v4198, %v4390
      %v4392 = vpop.f32.mrb[0].mxu0
      %v4393 = vadd.f32 %v4200, %v4392
      %4394 = vdwg.mxu0
      %4395 = vmatprep.subr.bf16.mxu0 %v3180
      %4396 = vmatpush1.bf16.msra.mxu0 %v3179
      %4397 = vmatprep.subr.bf16.mxu0 %v3187
      %4398 = vmatpush1.bf16.msra.mxu0 %v3186
      %4399 = vmatprep.subr.bf16.mxu0 %v3194
      %4400 = vmatpush1.bf16.msra.mxu0 %v3193
      %4401 = vmatprep.subr.bf16.mxu0 %v3201
      %4402 = vmatpush1.bf16.msra.mxu0 %v3200
      %4403 = vmatprep.subr.bf16.mxu0 %v3208
      %4404 = vmatpush1.bf16.msra.mxu0 %v3207
      %4405 = vmatprep.subr.bf16.mxu0 %v3215
      %4406 = vmatpush1.bf16.msra.mxu0 %v3214
      %4407 = vmatprep.subr.bf16.mxu0 %v3222
      %4408 = vmatpush1.bf16.msra.mxu0 %v3221
      %4409 = vmatprep.subr.bf16.mxu0 %v3229
      %4410 = vmatpush1.bf16.msra.mxu0 %v3228
      %4411 = vmatprep.subr.bf16.mxu0 %v3236
      %4412 = vmatpush1.bf16.msra.mxu0 %v3235
      %4413 = vmatprep.subr.bf16.mxu0 %v3243
      %4414 = vmatpush1.bf16.msra.mxu0 %v3242
      %4415 = vmatprep.subr.bf16.mxu0 %v3250
      %4416 = vmatpush1.bf16.msra.mxu0 %v3249
      %4417 = vmatprep.subr.bf16.mxu0 %v3257
      %4418 = vmatpush1.bf16.msra.mxu0 %v3256
      %4419 = vmatprep.subr.bf16.mxu0 %v3264
      %4420 = vmatpush1.bf16.msra.mxu0 %v3263
      %4421 = vmatprep.subr.bf16.mxu0 %v3271
      %4422 = vmatpush1.bf16.msra.mxu0 %v3270
      %4423 = vmatprep.subr.bf16.mxu0 %v3278
      %4424 = vmatpush1.bf16.msra.mxu0 %v3277
      %4425 = vmatprep.subr.bf16.mxu0 %v3285
      %4426 = vmatpush1.bf16.msra.mxu0 %v3284
      %4427 = vmatprep.mubr.bf16.mxu0 %v2115
      %4428 = vmatmul.mubr.bf16.gmra.mrb[0].mxu0 %v2114
      %v4429 = vpop.f32.mrb[0].mxu0
      %v4430 = vadd.f32 %v2455, %v4429
      %v4431 = vpop.f32.mrb[0].mxu0
      %v4432 = vadd.f32 %v2459, %v4431
      %v4433 = vpop.f32.mrb[0].mxu0
      %v4434 = vadd.f32 %v2455, %v4433
      %v4435 = vpop.f32.mrb[0].mxu0
      %v4436 = vadd.f32 %v2459, %v4435
      %4437 = vmatprep.mubr.bf16.mxu0 %v2119
      %4438 = vmatmul.mubr.bf16.gmra.mrb[0].mxu0 %v2118
      %v4439 = vpop.f32.mrb[0].mxu0
      %v4440 = vadd.f32 %v2455, %v4439
      %v4441 = vpop.f32.mrb[0].mxu0
      %v4442 = vadd.f32 %v2459, %v4441
      %v4443 = vpop.f32.mrb[0].mxu0
      %v4444 = vadd.f32 %v2455, %v4443
      %v4445 = vpop.f32.mrb[0].mxu0
      %v4446 = vadd.f32 %v2459, %v4445
      %4447 = vmatprep.mubr.bf16.mxu0 %v2123
      %4448 = vmatmul.mubr.bf16.gmra.mrb[0].mxu0 %v2122
      %v4449 = vpop.f32.mrb[0].mxu0
      %v4450 = vadd.f32 %v2455, %v4449
      %v4451 = vpop.f32.mrb[0].mxu0
      %v4452 = vadd.f32 %v2459, %v4451
      %v4453 = vpop.f32.mrb[0].mxu0
      %v4454 = vadd.f32 %v2455, %v4453
      %v4455 = vpop.f32.mrb[0].mxu0
      %v4456 = vadd.f32 %v2459, %v4455
      %4457 = vmatprep.mubr.bf16.mxu0 %v2127
      %4458 = vmatmul.mubr.bf16.gmra.mrb[0].mxu0 %v2126
      %v4459 = vpop.f32.mrb[0].mxu0
      %v4460 = vadd.f32 %v2455, %v4459
      %v4461 = vpop.f32.mrb[0].mxu0
      %v4462 = vadd.f32 %v2459, %v4461
      %v4463 = vpop.f32.mrb[0].mxu0
      %v4464 = vadd.f32 %v2455, %v4463
      %v4465 = vpop.f32.mrb[0].mxu0
      %v4466 = vadd.f32 %v2459, %v4465
      %4467 = vmatprep.mubr.bf16.mxu0 %v2131
      %4468 = vmatmul.mubr.bf16.gmra.mrb[0].mxu0 %v2130
      %v4469 = vpop.f32.mrb[0].mxu0
      %v4470 = vadd.f32 %v2455, %v4469
      %v4471 = vpop.f32.mrb[0].mxu0
      %v4472 = vadd.f32 %v2459, %v4471
      %v4473 = vpop.f32.mrb[0].mxu0
      %v4474 = vadd.f32 %v2455, %v4473
      %v4475 = vpop.f32.mrb[0].mxu0
      %v4476 = vadd.f32 %v2459, %v4475
      %4477 = vmatprep.mubr.bf16.mxu0 %v2135
      %4478 = vmatmul.mubr.bf16.gmra.mrb[0].mxu0 %v2134
      %v4479 = vpop.f32.mrb[0].mxu0
      %v4480 = vadd.f32 %v2455, %v4479
      %v4481 = vpop.f32.mrb[0].mxu0
      %v4482 = vadd.f32 %v2459, %v4481
      %v4483 = vpop.f32.mrb[0].mxu0
      %v4484 = vadd.f32 %v2455, %v4483
      %v4485 = vpop.f32.mrb[0].mxu0
      %v4486 = vadd.f32 %v2459, %v4485
      %4487 = vmatprep.mubr.bf16.mxu0 %v2139
      %4488 = vmatmul.mubr.bf16.gmra.mrb[0].mxu0 %v2138
      %v4489 = vpop.f32.mrb[0].mxu0
      %v4490 = vadd.f32 %v2455, %v4489
      %v4491 = vpop.f32.mrb[0].mxu0
      %v4492 = vadd.f32 %v2459, %v4491
      %v4493 = vpop.f32.mrb[0].mxu0
      %v4494 = vadd.f32 %v2455, %v4493
      %v4495 = vpop.f32.mrb[0].mxu0
      %v4496 = vadd.f32 %v2459, %v4495
      %4497 = vmatprep.mubr.bf16.mxu0 %v2143
      %4498 = vmatmul.mubr.bf16.gmra.mrb[0].mxu0 %v2142
      %v4499 = vpop.f32.mrb[0].mxu0
      %v4500 = vadd.f32 %v2455, %v4499
      %v4501 = vpop.f32.mrb[0].mxu0
      %v4502 = vadd.f32 %v2459, %v4501
      %v4503 = vpop.f32.mrb[0].mxu0
      %v4504 = vadd.f32 %v2455, %v4503
      %v4505 = vpop.f32.mrb[0].mxu0
      %v4506 = vadd.f32 %v2459, %v4505
      %4507 = vmatprep.mubr.bf16.mxu0 %v2147
      %4508 = vmatmul.mubr.bf16.gmra.mrb[0].mxu0 %v2146
      %v4509 = vpop.f32.mrb[0].mxu0
      %v4510 = vadd.f32 %v2455, %v4509
      %v4511 = vpop.f32.mrb[0].mxu0
      %v4512 = vadd.f32 %v2459, %v4511
      %v4513 = vpop.f32.mrb[0].mxu0
      %v4514 = vadd.f32 %v2455, %v4513
      %v4515 = vpop.f32.mrb[0].mxu0
      %v4516 = vadd.f32 %v2459, %v4515
      %4517 = vmatprep.mubr.bf16.mxu0 %v2151
      %4518 = vmatmul.mubr.bf16.gmra.mrb[0].mxu0 %v2150
      %v4519 = vpop.f32.mrb[0].mxu0
      %v4520 = vadd.f32 %v2455, %v4519
      %v4521 = vpop.f32.mrb[0].mxu0
      %v4522 = vadd.f32 %v2459, %v4521
      %v4523 = vpop.f32.mrb[0].mxu0
      %v4524 = vadd.f32 %v2455, %v4523
      %v4525 = vpop.f32.mrb[0].mxu0
      %v4526 = vadd.f32 %v2459, %v4525
      %4527 = vmatprep.mubr.bf16.mxu0 %v2155
      %4528 = vmatmul.mubr.bf16.gmra.mrb[0].mxu0 %v2154
      %v4529 = vpop.f32.mrb[0].mxu0
      %v4530 = vadd.f32 %v2455, %v4529
      %v4531 = vpop.f32.mrb[0].mxu0
      %v4532 = vadd.f32 %v2459, %v4531
      %v4533 = vpop.f32.mrb[0].mxu0
      %v4534 = vadd.f32 %v2455, %v4533
      %v4535 = vpop.f32.mrb[0].mxu0
      %v4536 = vadd.f32 %v2459, %v4535
      %4537 = vmatprep.mubr.bf16.mxu0 %v2159
      %4538 = vmatmul.mubr.bf16.gmra.mrb[0].mxu0 %v2158
      %v4539 = vpop.f32.mrb[0].mxu0
      %v4540 = vadd.f32 %v2455, %v4539
      %v4541 = vpop.f32.mrb[0].mxu0
      %v4542 = vadd.f32 %v2459, %v4541
      %v4543 = vpop.f32.mrb[0].mxu0
      %v4544 = vadd.f32 %v2455, %v4543
      %v4545 = vpop.f32.mrb[0].mxu0
      %v4546 = vadd.f32 %v2459, %v4545
      %4547 = vmatprep.mubr.bf16.mxu0 %v2163
      %4548 = vmatmul.mubr.bf16.gmra.mrb[0].mxu0 %v2162
      %v4549 = vpop.f32.mrb[0].mxu0
      %v4550 = vadd.f32 %v2455, %v4549
      %v4551 = vpop.f32.mrb[0].mxu0
      %v4552 = vadd.f32 %v2459, %v4551
      %v4553 = vpop.f32.mrb[0].mxu0
      %v4554 = vadd.f32 %v2455, %v4553
      %v4555 = vpop.f32.mrb[0].mxu0
      %v4556 = vadd.f32 %v2459, %v4555
      %4557 = vmatprep.mubr.bf16.mxu0 %v2167
      %4558 = vmatmul.mubr.bf16.gmra.mrb[0].mxu0 %v2166
      %v4559 = vpop.f32.mrb[0].mxu0
      %v4560 = vadd.f32 %v2455, %v4559
      %v4561 = vpop.f32.mrb[0].mxu0
      %v4562 = vadd.f32 %v2459, %v4561
      %v4563 = vpop.f32.mrb[0].mxu0
      %v4564 = vadd.f32 %v2455, %v4563
      %v4565 = vpop.f32.mrb[0].mxu0
      %v4566 = vadd.f32 %v2459, %v4565
      %4567 = vmatprep.mubr.bf16.mxu0 %v2171
      %4568 = vmatmul.mubr.bf16.gmra.mrb[0].mxu0 %v2170
      %v4569 = vpop.f32.mrb[0].mxu0
      %v4570 = vadd.f32 %v2455, %v4569
      %v4571 = vpop.f32.mrb[0].mxu0
      %v4572 = vadd.f32 %v2459, %v4571
      %v4573 = vpop.f32.mrb[0].mxu0
      %v4574 = vadd.f32 %v2455, %v4573
      %v4575 = vpop.f32.mrb[0].mxu0
      %v4576 = vadd.f32 %v2459, %v4575
      %4577 = vmatprep.mubr.bf16.mxu0 %v2175
      %4578 = vmatmul.mubr.bf16.gmra.mrb[0].mxu0 %v2174
      %v4579 = vpop.f32.mrb[0].mxu0
      %v4580 = vadd.f32 %v2455, %v4579
      %v4581 = vpop.f32.mrb[0].mxu0
      %v4582 = vadd.f32 %v2459, %v4581
      %v4583 = vpop.f32.mrb[0].mxu0
      %v4584 = vadd.f32 %v2455, %v4583
      %v4585 = vpop.f32.mrb[0].mxu0
      %v4586 = vadd.f32 %v2459, %v4585
      %4587 = vdwg.mxu0
      %4588 = vmatprep.subr.bf16.mxu0 %v3292
      %4589 = vmatpush1.bf16.msra.mxu0 %v3291
      %4590 = vmatprep.subr.bf16.mxu0 %v3299
      %4591 = vmatpush1.bf16.msra.mxu0 %v3298
      %4592 = vmatprep.subr.bf16.mxu0 %v3306
      %4593 = vmatpush1.bf16.msra.mxu0 %v3305
      %4594 = vmatprep.subr.bf16.mxu0 %v3313
      %4595 = vmatpush1.bf16.msra.mxu0 %v3312
      %4596 = vmatprep.subr.bf16.mxu0 %v3320
      %4597 = vmatpush1.bf16.msra.mxu0 %v3319
      %4598 = vmatprep.subr.bf16.mxu0 %v3327
      %4599 = vmatpush1.bf16.msra.mxu0 %v3326
      %4600 = vmatprep.subr.bf16.mxu0 %v3334
      %4601 = vmatpush1.bf16.msra.mxu0 %v3333
      %4602 = vmatprep.subr.bf16.mxu0 %v3341
      %4603 = vmatpush1.bf16.msra.mxu0 %v3340
      %4604 = vmatprep.subr.bf16.mxu0 %v3348
      %4605 = vmatpush1.bf16.msra.mxu0 %v3347
      %4606 = vmatprep.subr.bf16.mxu0 %v3355
      %4607 = vmatpush1.bf16.msra.mxu0 %v3354
      %4608 = vmatprep.subr.bf16.mxu0 %v3362
      %4609 = vmatpush1.bf16.msra.mxu0 %v3361
      %4610 = vmatprep.subr.bf16.mxu0 %v3369
      %4611 = vmatpush1.bf16.msra.mxu0 %v3368
      %4612 = vmatprep.subr.bf16.mxu0 %v3376
      %4613 = vmatpush1.bf16.msra.mxu0 %v3375
      %4614 = vmatprep.subr.bf16.mxu0 %v3383
      %4615 = vmatpush1.bf16.msra.mxu0 %v3382
      %4616 = vmatprep.subr.bf16.mxu0 %v3390
      %4617 = vmatpush1.bf16.msra.mxu0 %v3389
      %4618 = vmatprep.subr.bf16.mxu0 %v3397
      %4619 = vmatpush1.bf16.msra.mxu0 %v3396
      %4620 = vmatprep.mubr.bf16.mxu0 %v2117
      %4621 = vmatmul.mubr.bf16.gmra.mrb[0].mxu0 %v2116
      %v4622 = vpop.f32.mrb[0].mxu0
      %v4623 = vadd.f32 %v4430, %v4622
      %v4624 = vpop.f32.mrb[0].mxu0
      %v4625 = vadd.f32 %v4432, %v4624
      %v4626 = vpop.f32.mrb[0].mxu0
      %v4627 = vadd.f32 %v4434, %v4626
      %v4628 = vpop.f32.mrb[0].mxu0
      %v4629 = vadd.f32 %v4436, %v4628
      %4630 = vmatprep.mubr.bf16.mxu0 %v2121
      %4631 = vmatmul.mubr.bf16.gmra.mrb[0].mxu0 %v2120
      %v4632 = vpop.f32.mrb[0].mxu0
      %v4633 = vadd.f32 %v4440, %v4632
      %v4634 = vpop.f32.mrb[0].mxu0
      %v4635 = vadd.f32 %v4442, %v4634
      %v4636 = vpop.f32.mrb[0].mxu0
      %v4637 = vadd.f32 %v4444, %v4636
      %v4638 = vpop.f32.mrb[0].mxu0
      %v4639 = vadd.f32 %v4446, %v4638
      %4640 = vmatprep.mubr.bf16.mxu0 %v2125
      %4641 = vmatmul.mubr.bf16.gmra.mrb[0].mxu0 %v2124
      %v4642 = vpop.f32.mrb[0].mxu0
      %v4643 = vadd.f32 %v4450, %v4642
      %v4644 = vpop.f32.mrb[0].mxu0
      %v4645 = vadd.f32 %v4452, %v4644
      %v4646 = vpop.f32.mrb[0].mxu0
      %v4647 = vadd.f32 %v4454, %v4646
      %v4648 = vpop.f32.mrb[0].mxu0
      %v4649 = vadd.f32 %v4456, %v4648
      %4650 = vmatprep.mubr.bf16.mxu0 %v2129
      %4651 = vmatmul.mubr.bf16.gmra.mrb[0].mxu0 %v2128
      %v4652 = vpop.f32.mrb[0].mxu0
      %v4653 = vadd.f32 %v4460, %v4652
      %v4654 = vpop.f32.mrb[0].mxu0
      %v4655 = vadd.f32 %v4462, %v4654
      %v4656 = vpop.f32.mrb[0].mxu0
      %v4657 = vadd.f32 %v4464, %v4656
      %v4658 = vpop.f32.mrb[0].mxu0
      %v4659 = vadd.f32 %v4466, %v4658
      %4660 = vmatprep.mubr.bf16.mxu0 %v2133
      %4661 = vmatmul.mubr.bf16.gmra.mrb[0].mxu0 %v2132
      %v4662 = vpop.f32.mrb[0].mxu0
      %v4663 = vadd.f32 %v4470, %v4662
      %v4664 = vpop.f32.mrb[0].mxu0
      %v4665 = vadd.f32 %v4472, %v4664
      %v4666 = vpop.f32.mrb[0].mxu0
      %v4667 = vadd.f32 %v4474, %v4666
      %v4668 = vpop.f32.mrb[0].mxu0
      %v4669 = vadd.f32 %v4476, %v4668
      %4670 = vmatprep.mubr.bf16.mxu0 %v2137
      %4671 = vmatmul.mubr.bf16.gmra.mrb[0].mxu0 %v2136
      %v4672 = vpop.f32.mrb[0].mxu0
      %v4673 = vadd.f32 %v4480, %v4672
      %v4674 = vpop.f32.mrb[0].mxu0
      %v4675 = vadd.f32 %v4482, %v4674
      %v4676 = vpop.f32.mrb[0].mxu0
      %v4677 = vadd.f32 %v4484, %v4676
      %v4678 = vpop.f32.mrb[0].mxu0
      %v4679 = vadd.f32 %v4486, %v4678
      %4680 = vmatprep.mubr.bf16.mxu0 %v2141
      %4681 = vmatmul.mubr.bf16.gmra.mrb[0].mxu0 %v2140
      %v4682 = vpop.f32.mrb[0].mxu0
      %v4683 = vadd.f32 %v4490, %v4682
      %v4684 = vpop.f32.mrb[0].mxu0
      %v4685 = vadd.f32 %v4492, %v4684
      %v4686 = vpop.f32.mrb[0].mxu0
      %v4687 = vadd.f32 %v4494, %v4686
      %v4688 = vpop.f32.mrb[0].mxu0
      %v4689 = vadd.f32 %v4496, %v4688
      %4690 = vmatprep.mubr.bf16.mxu0 %v2145
      %4691 = vmatmul.mubr.bf16.gmra.mrb[0].mxu0 %v2144
      %v4692 = vpop.f32.mrb[0].mxu0
      %v4693 = vadd.f32 %v4500, %v4692
      %v4694 = vpop.f32.mrb[0].mxu0
      %v4695 = vadd.f32 %v4502, %v4694
      %v4696 = vpop.f32.mrb[0].mxu0
      %v4697 = vadd.f32 %v4504, %v4696
      %v4698 = vpop.f32.mrb[0].mxu0
      %v4699 = vadd.f32 %v4506, %v4698
      %4700 = vmatprep.mubr.bf16.mxu0 %v2149
      %4701 = vmatmul.mubr.bf16.gmra.mrb[0].mxu0 %v2148
      %v4702 = vpop.f32.mrb[0].mxu0
      %v4703 = vadd.f32 %v4510, %v4702
      %v4704 = vpop.f32.mrb[0].mxu0
      %v4705 = vadd.f32 %v4512, %v4704
      %v4706 = vpop.f32.mrb[0].mxu0
      %v4707 = vadd.f32 %v4514, %v4706
      %v4708 = vpop.f32.mrb[0].mxu0
      %v4709 = vadd.f32 %v4516, %v4708
      %4710 = vmatprep.mubr.bf16.mxu0 %v2153
      %4711 = vmatmul.mubr.bf16.gmra.mrb[0].mxu0 %v2152
      %v4712 = vpop.f32.mrb[0].mxu0
      %v4713 = vadd.f32 %v4520, %v4712
      %v4714 = vpop.f32.mrb[0].mxu0
      %v4715 = vadd.f32 %v4522, %v4714
      %v4716 = vpop.f32.mrb[0].mxu0
      %v4717 = vadd.f32 %v4524, %v4716
      %v4718 = vpop.f32.mrb[0].mxu0
      %v4719 = vadd.f32 %v4526, %v4718
      %4720 = vmatprep.mubr.bf16.mxu0 %v2157
      %4721 = vmatmul.mubr.bf16.gmra.mrb[0].mxu0 %v2156
      %v4722 = vpop.f32.mrb[0].mxu0
      %v4723 = vadd.f32 %v4530, %v4722
      %v4724 = vpop.f32.mrb[0].mxu0
      %v4725 = vadd.f32 %v4532, %v4724
      %v4726 = vpop.f32.mrb[0].mxu0
      %v4727 = vadd.f32 %v4534, %v4726
      %v4728 = vpop.f32.mrb[0].mxu0
      %v4729 = vadd.f32 %v4536, %v4728
      %4730 = vmatprep.mubr.bf16.mxu0 %v2161
      %4731 = vmatmul.mubr.bf16.gmra.mrb[0].mxu0 %v2160
      %v4732 = vpop.f32.mrb[0].mxu0
      %v4733 = vadd.f32 %v4540, %v4732
      %v4734 = vpop.f32.mrb[0].mxu0
      %v4735 = vadd.f32 %v4542, %v4734
      %v4736 = vpop.f32.mrb[0].mxu0
      %v4737 = vadd.f32 %v4544, %v4736
      %v4738 = vpop.f32.mrb[0].mxu0
      %v4739 = vadd.f32 %v4546, %v4738
      %4740 = vmatprep.mubr.bf16.mxu0 %v2165
      %4741 = vmatmul.mubr.bf16.gmra.mrb[0].mxu0 %v2164
      %v4742 = vpop.f32.mrb[0].mxu0
      %v4743 = vadd.f32 %v4550, %v4742
      %v4744 = vpop.f32.mrb[0].mxu0
      %v4745 = vadd.f32 %v4552, %v4744
      %v4746 = vpop.f32.mrb[0].mxu0
      %v4747 = vadd.f32 %v4554, %v4746
      %v4748 = vpop.f32.mrb[0].mxu0
      %v4749 = vadd.f32 %v4556, %v4748
      %4750 = vmatprep.mubr.bf16.mxu0 %v2169
      %4751 = vmatmul.mubr.bf16.gmra.mrb[0].mxu0 %v2168
      %v4752 = vpop.f32.mrb[0].mxu0
      %v4753 = vadd.f32 %v4560, %v4752
      %v4754 = vpop.f32.mrb[0].mxu0
      %v4755 = vadd.f32 %v4562, %v4754
      %v4756 = vpop.f32.mrb[0].mxu0
      %v4757 = vadd.f32 %v4564, %v4756
      %v4758 = vpop.f32.mrb[0].mxu0
      %v4759 = vadd.f32 %v4566, %v4758
      %4760 = vmatprep.mubr.bf16.mxu0 %v2173
      %4761 = vmatmul.mubr.bf16.gmra.mrb[0].mxu0 %v2172
      %v4762 = vpop.f32.mrb[0].mxu0
      %v4763 = vadd.f32 %v4570, %v4762
      %v4764 = vpop.f32.mrb[0].mxu0
      %v4765 = vadd.f32 %v4572, %v4764
      %v4766 = vpop.f32.mrb[0].mxu0
      %v4767 = vadd.f32 %v4574, %v4766
      %v4768 = vpop.f32.mrb[0].mxu0
      %v4769 = vadd.f32 %v4576, %v4768
      %4770 = vmatprep.mubr.bf16.mxu0 %v2177
      %4771 = vmatmul.mubr.bf16.gmra.mrb[0].mxu0 %v2176
      %v4772 = vpop.f32.mrb[0].mxu0
      %v4773 = vadd.f32 %v4580, %v4772
      %v4774 = vpop.f32.mrb[0].mxu0
      %v4775 = vadd.f32 %v4582, %v4774
      %v4776 = vpop.f32.mrb[0].mxu0
      %v4777 = vadd.f32 %v4584, %v4776
      %v4778 = vpop.f32.mrb[0].mxu0
      %v4779 = vadd.f32 %v4586, %v4778
      %4780 = vdwg.mxu0
      %4781 = vmatprep.subr.bf16.mxu0 0
      %4782 = vmatpush1.bf16.msra.mxu0 %v3181
      %4783 = vmatprep.subr.bf16.mxu0 0
      %4784 = vmatpush1.bf16.msra.mxu0 %v3188
      %4785 = vmatprep.subr.bf16.mxu0 0
      %4786 = vmatpush1.bf16.msra.mxu0 %v3195
      %4787 = vmatprep.subr.bf16.mxu0 0
      %4788 = vmatpush1.bf16.msra.mxu0 %v3202
      %4789 = vmatprep.subr.bf16.mxu0 0
      %4790 = vmatpush1.bf16.msra.mxu0 %v3209
      %4791 = vmatprep.subr.bf16.mxu0 0
      %4792 = vmatpush1.bf16.msra.mxu0 %v3216
      %4793 = vmatprep.subr.bf16.mxu0 0
      %4794 = vmatpush1.bf16.msra.mxu0 %v3223
      %4795 = vmatprep.subr.bf16.mxu0 0
      %4796 = vmatpush1.bf16.msra.mxu0 %v3230
      %4797 = vmatprep.subr.bf16.mxu0 0
      %4798 = vmatpush1.bf16.msra.mxu0 %v3237
      %4799 = vmatprep.subr.bf16.mxu0 0
      %4800 = vmatpush1.bf16.msra.mxu0 %v3244
      %4801 = vmatprep.subr.bf16.mxu0 0
      %4802 = vmatpush1.bf16.msra.mxu0 %v3251
      %4803 = vmatprep.subr.bf16.mxu0 0
      %4804 = vmatpush1.bf16.msra.mxu0 %v3258
      %4805 = vmatprep.subr.bf16.mxu0 0
      %4806 = vmatpush1.bf16.msra.mxu0 %v3265
      %4807 = vmatprep.subr.bf16.mxu0 0
      %4808 = vmatpush1.bf16.msra.mxu0 %v3272
      %4809 = vmatprep.subr.bf16.mxu0 0
      %4810 = vmatpush1.bf16.msra.mxu0 %v3279
      %4811 = vmatprep.subr.bf16.mxu0 0
      %4812 = vmatpush1.bf16.msra.mxu0 %v3286
      %4813 = vmatprep.mubr.bf16.mxu0 %v2115
      %4814 = vmatmul.mubr.bf16.gmra.mrb[0].mxu0 %v2114
      %v4815 = vpop.f32.mrb[0].mxu0
      %v4816 = vadd.f32 %v2463, %v4815
      %v4817 = vpop.f32.mrb[0].mxu0
      %v4818 = vpop.f32.mrb[0].mxu0
      %v4819 = vadd.f32 %v2463, %v4818
      %v4820 = vpop.f32.mrb[0].mxu0
      %4821 = vmatprep.mubr.bf16.mxu0 %v2119
      %4822 = vmatmul.mubr.bf16.gmra.mrb[0].mxu0 %v2118
      %v4823 = vpop.f32.mrb[0].mxu0
      %v4824 = vadd.f32 %v2463, %v4823
      %v4825 = vpop.f32.mrb[0].mxu0
      %v4826 = vpop.f32.mrb[0].mxu0
      %v4827 = vadd.f32 %v2463, %v4826
      %v4828 = vpop.f32.mrb[0].mxu0
      %4829 = vmatprep.mubr.bf16.mxu0 %v2123
      %4830 = vmatmul.mubr.bf16.gmra.mrb[0].mxu0 %v2122
      %v4831 = vpop.f32.mrb[0].mxu0
      %v4832 = vadd.f32 %v2463, %v4831
      %v4833 = vpop.f32.mrb[0].mxu0
      %v4834 = vpop.f32.mrb[0].mxu0
      %v4835 = vadd.f32 %v2463, %v4834
      %v4836 = vpop.f32.mrb[0].mxu0
      %4837 = vmatprep.mubr.bf16.mxu0 %v2127
      %4838 = vmatmul.mubr.bf16.gmra.mrb[0].mxu0 %v2126
      %v4839 = vpop.f32.mrb[0].mxu0
      %v4840 = vadd.f32 %v2463, %v4839
      %v4841 = vpop.f32.mrb[0].mxu0
      %v4842 = vpop.f32.mrb[0].mxu0
      %v4843 = vadd.f32 %v2463, %v4842
      %v4844 = vpop.f32.mrb[0].mxu0
      %4845 = vmatprep.mubr.bf16.mxu0 %v2131
      %4846 = vmatmul.mubr.bf16.gmra.mrb[0].mxu0 %v2130
      %v4847 = vpop.f32.mrb[0].mxu0
      %v4848 = vadd.f32 %v2463, %v4847
      %v4849 = vpop.f32.mrb[0].mxu0
      %v4850 = vpop.f32.mrb[0].mxu0
      %v4851 = vadd.f32 %v2463, %v4850
      %v4852 = vpop.f32.mrb[0].mxu0
      %4853 = vmatprep.mubr.bf16.mxu0 %v2135
      %4854 = vmatmul.mubr.bf16.gmra.mrb[0].mxu0 %v2134
      %v4855 = vpop.f32.mrb[0].mxu0
      %v4856 = vadd.f32 %v2463, %v4855
      %v4857 = vpop.f32.mrb[0].mxu0
      %v4858 = vpop.f32.mrb[0].mxu0
      %v4859 = vadd.f32 %v2463, %v4858
      %v4860 = vpop.f32.mrb[0].mxu0
      %4861 = vmatprep.mubr.bf16.mxu0 %v2139
      %4862 = vmatmul.mubr.bf16.gmra.mrb[0].mxu0 %v2138
      %v4863 = vpop.f32.mrb[0].mxu0
      %v4864 = vadd.f32 %v2463, %v4863
      %v4865 = vpop.f32.mrb[0].mxu0
      %v4866 = vpop.f32.mrb[0].mxu0
      %v4867 = vadd.f32 %v2463, %v4866
      %v4868 = vpop.f32.mrb[0].mxu0
      %4869 = vmatprep.mubr.bf16.mxu0 %v2143
      %4870 = vmatmul.mubr.bf16.gmra.mrb[0].mxu0 %v2142
      %v4871 = vpop.f32.mrb[0].mxu0
      %v4872 = vadd.f32 %v2463, %v4871
      %v4873 = vpop.f32.mrb[0].mxu0
      %v4874 = vpop.f32.mrb[0].mxu0
      %v4875 = vadd.f32 %v2463, %v4874
      %v4876 = vpop.f32.mrb[0].mxu0
      %4877 = vmatprep.mubr.bf16.mxu0 %v2147
      %4878 = vmatmul.mubr.bf16.gmra.mrb[0].mxu0 %v2146
      %v4879 = vpop.f32.mrb[0].mxu0
      %v4880 = vadd.f32 %v2463, %v4879
      %v4881 = vpop.f32.mrb[0].mxu0
      %v4882 = vpop.f32.mrb[0].mxu0
      %v4883 = vadd.f32 %v2463, %v4882
      %v4884 = vpop.f32.mrb[0].mxu0
      %4885 = vmatprep.mubr.bf16.mxu0 %v2151
      %4886 = vmatmul.mubr.bf16.gmra.mrb[0].mxu0 %v2150
      %v4887 = vpop.f32.mrb[0].mxu0
      %v4888 = vadd.f32 %v2463, %v4887
      %v4889 = vpop.f32.mrb[0].mxu0
      %v4890 = vpop.f32.mrb[0].mxu0
      %v4891 = vadd.f32 %v2463, %v4890
      %v4892 = vpop.f32.mrb[0].mxu0
      %4893 = vmatprep.mubr.bf16.mxu0 %v2155
      %4894 = vmatmul.mubr.bf16.gmra.mrb[0].mxu0 %v2154
      %v4895 = vpop.f32.mrb[0].mxu0
      %v4896 = vadd.f32 %v2463, %v4895
      %v4897 = vpop.f32.mrb[0].mxu0
      %v4898 = vpop.f32.mrb[0].mxu0
      %v4899 = vadd.f32 %v2463, %v4898
      %v4900 = vpop.f32.mrb[0].mxu0
      %4901 = vmatprep.mubr.bf16.mxu0 %v2159
      %4902 = vmatmul.mubr.bf16.gmra.mrb[0].mxu0 %v2158
      %v4903 = vpop.f32.mrb[0].mxu0
      %v4904 = vadd.f32 %v2463, %v4903
      %v4905 = vpop.f32.mrb[0].mxu0
      %v4906 = vpop.f32.mrb[0].mxu0
      %v4907 = vadd.f32 %v2463, %v4906
      %v4908 = vpop.f32.mrb[0].mxu0
      %4909 = vmatprep.mubr.bf16.mxu0 %v2163
      %4910 = vmatmul.mubr.bf16.gmra.mrb[0].mxu0 %v2162
      %v4911 = vpop.f32.mrb[0].mxu0
      %v4912 = vadd.f32 %v2463, %v4911
      %v4913 = vpop.f32.mrb[0].mxu0
      %v4914 = vpop.f32.mrb[0].mxu0
      %v4915 = vadd.f32 %v2463, %v4914
      %v4916 = vpop.f32.mrb[0].mxu0
      %4917 = vmatprep.mubr.bf16.mxu0 %v2167
      %4918 = vmatmul.mubr.bf16.gmra.mrb[0].mxu0 %v2166
      %v4919 = vpop.f32.mrb[0].mxu0
      %v4920 = vadd.f32 %v2463, %v4919
      %v4921 = vpop.f32.mrb[0].mxu0
      %v4922 = vpop.f32.mrb[0].mxu0
      %v4923 = vadd.f32 %v2463, %v4922
      %v4924 = vpop.f32.mrb[0].mxu0
      %4925 = vmatprep.mubr.bf16.mxu0 %v2171
      %4926 = vmatmul.mubr.bf16.gmra.mrb[0].mxu0 %v2170
      %v4927 = vpop.f32.mrb[0].mxu0
      %v4928 = vadd.f32 %v2463, %v4927
      %v4929 = vpop.f32.mrb[0].mxu0
      %v4930 = vpop.f32.mrb[0].mxu0
      %v4931 = vadd.f32 %v2463, %v4930
      %v4932 = vpop.f32.mrb[0].mxu0
      %4933 = vmatprep.mubr.bf16.mxu0 %v2175
      %4934 = vmatmul.mubr.bf16.gmra.mrb[0].mxu0 %v2174
      %v4935 = vpop.f32.mrb[0].mxu0
      %v4936 = vadd.f32 %v2463, %v4935
      %v4937 = vpop.f32.mrb[0].mxu0
      %v4938 = vpop.f32.mrb[0].mxu0
      %v4939 = vadd.f32 %v2463, %v4938
      %v4940 = vpop.f32.mrb[0].mxu0
      %4941 = vdwg.mxu0
      %4942 = vmatprep.subr.bf16.mxu0 0
      %4943 = vmatpush1.bf16.msra.mxu0 %v3293
      %4944 = vmatprep.subr.bf16.mxu0 0
      %4945 = vmatpush1.bf16.msra.mxu0 %v3300
      %4946 = vmatprep.subr.bf16.mxu0 0
      %4947 = vmatpush1.bf16.msra.mxu0 %v3307
      %4948 = vmatprep.subr.bf16.mxu0 0
      %4949 = vmatpush1.bf16.msra.mxu0 %v3314
      %4950 = vmatprep.subr.bf16.mxu0 0
      %4951 = vmatpush1.bf16.msra.mxu0 %v3321
      %4952 = vmatprep.subr.bf16.mxu0 0
      %4953 = vmatpush1.bf16.msra.mxu0 %v3328
      %4954 = vmatprep.subr.bf16.mxu0 0
      %4955 = vmatpush1.bf16.msra.mxu0 %v3335
      %4956 = vmatprep.subr.bf16.mxu0 0
      %4957 = vmatpush1.bf16.msra.mxu0 %v3342
      %4958 = vmatprep.subr.bf16.mxu0 0
      %4959 = vmatpush1.bf16.msra.mxu0 %v3349
      %4960 = vmatprep.subr.bf16.mxu0 0
      %4961 = vmatpush1.bf16.msra.mxu0 %v3356
      %4962 = vmatprep.subr.bf16.mxu0 0
      %4963 = vmatpush1.bf16.msra.mxu0 %v3363
      %4964 = vmatprep.subr.bf16.mxu0 0
      %4965 = vmatpush1.bf16.msra.mxu0 %v3370
      %4966 = vmatprep.subr.bf16.mxu0 0
      %4967 = vmatpush1.bf16.msra.mxu0 %v3377
      %4968 = vmatprep.subr.bf16.mxu0 0
      %4969 = vmatpush1.bf16.msra.mxu0 %v3384
      %4970 = vmatprep.subr.bf16.mxu0 0
      %4971 = vmatpush1.bf16.msra.mxu0 %v3391
      %4972 = vmatprep.subr.bf16.mxu0 0
      %4973 = vmatpush1.bf16.msra.mxu0 %v3398
      %4974 = vmatprep.mubr.bf16.mxu0 %v2117
      %4975 = vmatmul.mubr.bf16.gmra.mrb[0].mxu0 %v2116
      %v4976 = vpop.f32.mrb[0].mxu0
      %v4977 = vadd.f32 %v4816, %v4976
      %v4978 = vpop.f32.mrb[0].mxu0
      %v4979 = vpop.f32.mrb[0].mxu0
      %v4980 = vadd.f32 %v4819, %v4979
      %v4981 = vpop.f32.mrb[0].mxu0
      %4982 = vmatprep.mubr.bf16.mxu0 %v2121
      %4983 = vmatmul.mubr.bf16.gmra.mrb[0].mxu0 %v2120
      %v4984 = vpop.f32.mrb[0].mxu0
      %v4985 = vadd.f32 %v4824, %v4984
      %v4986 = vpop.f32.mrb[0].mxu0
      %v4987 = vpop.f32.mrb[0].mxu0
      %v4988 = vadd.f32 %v4827, %v4987
      %v4989 = vpop.f32.mrb[0].mxu0
      %4990 = vmatprep.mubr.bf16.mxu0 %v2125
      %4991 = vmatmul.mubr.bf16.gmra.mrb[0].mxu0 %v2124
      %v4992 = vpop.f32.mrb[0].mxu0
      %v4993 = vadd.f32 %v4832, %v4992
      %v4994 = vpop.f32.mrb[0].mxu0
      %v4995 = vpop.f32.mrb[0].mxu0
      %v4996 = vadd.f32 %v4835, %v4995
      %v4997 = vpop.f32.mrb[0].mxu0
      %4998 = vmatprep.mubr.bf16.mxu0 %v2129
      %4999 = vmatmul.mubr.bf16.gmra.mrb[0].mxu0 %v2128
      %v5000 = vpop.f32.mrb[0].mxu0
      %v5001 = vadd.f32 %v4840, %v5000
      %v5002 = vpop.f32.mrb[0].mxu0
      %v5003 = vpop.f32.mrb[0].mxu0
      %v5004 = vadd.f32 %v4843, %v5003
      %v5005 = vpop.f32.mrb[0].mxu0
      %5006 = vmatprep.mubr.bf16.mxu0 %v2133
      %5007 = vmatmul.mubr.bf16.gmra.mrb[0].mxu0 %v2132
      %v5008 = vpop.f32.mrb[0].mxu0
      %v5009 = vadd.f32 %v4848, %v5008
      %v5010 = vpop.f32.mrb[0].mxu0
      %v5011 = vpop.f32.mrb[0].mxu0
      %v5012 = vadd.f32 %v4851, %v5011
      %v5013 = vpop.f32.mrb[0].mxu0
      %5014 = vmatprep.mubr.bf16.mxu0 %v2137
      %5015 = vmatmul.mubr.bf16.gmra.mrb[0].mxu0 %v2136
      %v5016 = vpop.f32.mrb[0].mxu0
      %v5017 = vadd.f32 %v4856, %v5016
      %v5018 = vpop.f32.mrb[0].mxu0
      %v5019 = vpop.f32.mrb[0].mxu0
      %v5020 = vadd.f32 %v4859, %v5019
      %v5021 = vpop.f32.mrb[0].mxu0
      %5022 = vmatprep.mubr.bf16.mxu0 %v2141
      %5023 = vmatmul.mubr.bf16.gmra.mrb[0].mxu0 %v2140
      %v5024 = vpop.f32.mrb[0].mxu0
      %v5025 = vadd.f32 %v4864, %v5024
      %v5026 = vpop.f32.mrb[0].mxu0
      %v5027 = vpop.f32.mrb[0].mxu0
      %v5028 = vadd.f32 %v4867, %v5027
      %v5029 = vpop.f32.mrb[0].mxu0
      %5030 = vmatprep.mubr.bf16.mxu0 %v2145
      %5031 = vmatmul.mubr.bf16.gmra.mrb[0].mxu0 %v2144
      %v5032 = vpop.f32.mrb[0].mxu0
      %v5033 = vadd.f32 %v4872, %v5032
      %v5034 = vpop.f32.mrb[0].mxu0
      %v5035 = vpop.f32.mrb[0].mxu0
      %v5036 = vadd.f32 %v4875, %v5035
      %v5037 = vpop.f32.mrb[0].mxu0
      %5038 = vmatprep.mubr.bf16.mxu0 %v2149
      %5039 = vmatmul.mubr.bf16.gmra.mrb[0].mxu0 %v2148
      %v5040 = vpop.f32.mrb[0].mxu0
      %v5041 = vadd.f32 %v4880, %v5040
      %v5042 = vpop.f32.mrb[0].mxu0
      %v5043 = vpop.f32.mrb[0].mxu0
      %v5044 = vadd.f32 %v4883, %v5043
      %v5045 = vpop.f32.mrb[0].mxu0
      %5046 = vmatprep.mubr.bf16.mxu0 %v2153
      %5047 = vmatmul.mubr.bf16.gmra.mrb[0].mxu0 %v2152
      %v5048 = vpop.f32.mrb[0].mxu0
      %v5049 = vadd.f32 %v4888, %v5048
      %v5050 = vpop.f32.mrb[0].mxu0
      %v5051 = vpop.f32.mrb[0].mxu0
      %v5052 = vadd.f32 %v4891, %v5051
      %v5053 = vpop.f32.mrb[0].mxu0
      %5054 = vmatprep.mubr.bf16.mxu0 %v2157
      %5055 = vmatmul.mubr.bf16.gmra.mrb[0].mxu0 %v2156
      %v5056 = vpop.f32.mrb[0].mxu0
      %v5057 = vadd.f32 %v4896, %v5056
      %v5058 = vpop.f32.mrb[0].mxu0
      %v5059 = vpop.f32.mrb[0].mxu0
      %v5060 = vadd.f32 %v4899, %v5059
      %v5061 = vpop.f32.mrb[0].mxu0
      %5062 = vmatprep.mubr.bf16.mxu0 %v2161
      %5063 = vmatmul.mubr.bf16.gmra.mrb[0].mxu0 %v2160
      %v5064 = vpop.f32.mrb[0].mxu0
      %v5065 = vadd.f32 %v4904, %v5064
      %v5066 = vpop.f32.mrb[0].mxu0
      %v5067 = vpop.f32.mrb[0].mxu0
      %v5068 = vadd.f32 %v4907, %v5067
      %v5069 = vpop.f32.mrb[0].mxu0
      %5070 = vmatprep.mubr.bf16.mxu0 %v2165
      %5071 = vmatmul.mubr.bf16.gmra.mrb[0].mxu0 %v2164
      %v5072 = vpop.f32.mrb[0].mxu0
      %v5073 = vadd.f32 %v4912, %v5072
      %v5074 = vpop.f32.mrb[0].mxu0
      %v5075 = vpop.f32.mrb[0].mxu0
      %v5076 = vadd.f32 %v4915, %v5075
      %v5077 = vpop.f32.mrb[0].mxu0
      %5078 = vmatprep.mubr.bf16.mxu0 %v2169
      %5079 = vmatmul.mubr.bf16.gmra.mrb[0].mxu0 %v2168
      %v5080 = vpop.f32.mrb[0].mxu0
      %v5081 = vadd.f32 %v4920, %v5080
      %v5082 = vpop.f32.mrb[0].mxu0
      %v5083 = vpop.f32.mrb[0].mxu0
      %v5084 = vadd.f32 %v4923, %v5083
      %v5085 = vpop.f32.mrb[0].mxu0
      %5086 = vmatprep.mubr.bf16.mxu0 %v2173
      %5087 = vmatmul.mubr.bf16.gmra.mrb[0].mxu0 %v2172
      %v5088 = vpop.f32.mrb[0].mxu0
      %v5089 = vadd.f32 %v4928, %v5088
      %v5090 = vpop.f32.mrb[0].mxu0
      %v5091 = vpop.f32.mrb[0].mxu0
      %v5092 = vadd.f32 %v4931, %v5091
      %v5093 = vpop.f32.mrb[0].mxu0
      %5094 = vmatprep.mubr.bf16.mxu0 %v2177
      %5095 = vmatmul.mubr.bf16.gmra.mrb[0].mxu0 %v2176
      %v5096 = vpop.f32.mrb[0].mxu0
      %v5097 = vadd.f32 %v4936, %v5096
      %v5098 = vpop.f32.mrb[0].mxu0
      %v5099 = vpop.f32.mrb[0].mxu0
      %v5100 = vadd.f32 %v4939, %v5099
      %v5101 = vpop.f32.mrb[0].mxu0
      %5102 = vdwg.mxu0
      %v5103 = vtanh.pop %v3851
      %v5104 = vtanh.pop %v3853
      %v5105 = vtanh.pop %v4237
      %v5106 = vtanh.pop %v4239
      %v5107 = vtanh.pop %v4623
      %v5108 = vtanh.pop %v4625
      %v5109 = vtanh.pop %v4977
      %v5110 = vtanh.pop %v3855
      %v5111 = vtanh.pop %v3857
      %v5112 = vtanh.pop %v4241
      %v5113 = vtanh.pop %v4243
      %v5114 = vtanh.pop %v4627
      %v5115 = vtanh.pop %v4629
      %v5116 = vtanh.pop %v4980
      %v5117 = vtanh.pop %v3861
      %v5118 = vtanh.pop %v3863
      %v5119 = vtanh.pop %v4247
      %v5120 = vtanh.pop %v4249
      %v5121 = vtanh.pop %v4633
      %v5122 = vtanh.pop %v4635
      %v5123 = vtanh.pop %v4985
      %v5124 = vtanh.pop %v3865
      %v5125 = vtanh.pop %v3867
      %v5126 = vtanh.pop %v4251
      %v5127 = vtanh.pop %v4253
      %v5128 = vtanh.pop %v4637
      %v5129 = vtanh.pop %v4639
      %v5130 = vtanh.pop %v4988
      %v5131 = vtanh.pop %v3871
      %v5132 = vtanh.pop %v3873
      %v5133 = vtanh.pop %v4257
      %v5134 = vtanh.pop %v4259
      %v5135 = vtanh.pop %v4643
      %v5136 = vtanh.pop %v4645
      %v5137 = vtanh.pop %v4993
      %v5138 = vtanh.pop %v3875
      %v5139 = vtanh.pop %v3877
      %v5140 = vtanh.pop %v4261
      %v5141 = vtanh.pop %v4263
      %v5142 = vtanh.pop %v4647
      %v5143 = vtanh.pop %v4649
      %v5144 = vtanh.pop %v4996
      %v5145 = vtanh.pop %v3881
      %v5146 = vtanh.pop %v3883
      %v5147 = vtanh.pop %v4267
      %v5148 = vtanh.pop %v4269
      %v5149 = vtanh.pop %v4653
      %v5150 = vtanh.pop %v4655
      %v5151 = vtanh.pop %v5001
      %v5152 = vtanh.pop %v3885
      %v5153 = vtanh.pop %v3887
      %v5154 = vtanh.pop %v4271
      %v5155 = vtanh.pop %v4273
      %v5156 = vtanh.pop %v4657
      %v5157 = vtanh.pop %v4659
      %v5158 = vtanh.pop %v5004
      %v5159 = vtanh.pop %v3891
      %v5160 = vtanh.pop %v3893
      %v5161 = vtanh.pop %v4277
      %v5162 = vtanh.pop %v4279
      %v5163 = vtanh.pop %v4663
      %v5164 = vtanh.pop %v4665
      %v5165 = vtanh.pop %v5009
      %v5166 = vtanh.pop %v3895
      %v5167 = vtanh.pop %v3897
      %v5168 = vtanh.pop %v4281
      %v5169 = vtanh.pop %v4283
      %v5170 = vtanh.pop %v4667
      %v5171 = vtanh.pop %v4669
      %v5172 = vtanh.pop %v5012
      %v5173 = vtanh.pop %v3901
      %v5174 = vtanh.pop %v3903
      %v5175 = vtanh.pop %v4287
      %v5176 = vtanh.pop %v4289
      %v5177 = vtanh.pop %v4673
      %v5178 = vtanh.pop %v4675
      %v5179 = vtanh.pop %v5017
      %v5180 = vtanh.pop %v3905
      %v5181 = vtanh.pop %v3907
      %v5182 = vtanh.pop %v4291
      %v5183 = vtanh.pop %v4293
      %v5184 = vtanh.pop %v4677
      %v5185 = vtanh.pop %v4679
      %v5186 = vtanh.pop %v5020
      %v5187 = vtanh.pop %v3911
      %v5188 = vtanh.pop %v3913
      %v5189 = vtanh.pop %v4297
      %v5190 = vtanh.pop %v4299
      %v5191 = vtanh.pop %v4683
      %v5192 = vtanh.pop %v4685
      %v5193 = vtanh.pop %v5025
      %v5194 = vtanh.pop %v3915
      %v5195 = vtanh.pop %v3917
      %v5196 = vtanh.pop %v4301
      %v5197 = vtanh.pop %v4303
      %v5198 = vtanh.pop %v4687
      %v5199 = vtanh.pop %v4689
      %v5200 = vtanh.pop %v5028
      %v5201 = vtanh.pop %v3921
      %v5202 = vtanh.pop %v3923
      %v5203 = vtanh.pop %v4307
      %v5204 = vtanh.pop %v4309
      %v5205 = vtanh.pop %v4693
      %v5206 = vtanh.pop %v4695
      %v5207 = vtanh.pop %v5033
      %v5208 = vtanh.pop %v3925
      %v5209 = vtanh.pop %v3927
      %v5210 = vtanh.pop %v4311
      %v5211 = vtanh.pop %v4313
      %v5212 = vtanh.pop %v4697
      %v5213 = vtanh.pop %v4699
      %v5214 = vtanh.pop %v5036
      %v5215 = vtanh.pop %v3931
      %v5216 = vtanh.pop %v3933
      %v5217 = vtanh.pop %v4317
      %v5218 = vtanh.pop %v4319
      %v5219 = vtanh.pop %v4703
      %v5220 = vtanh.pop %v4705
      %v5221 = vtanh.pop %v5041
      %v5222 = vtanh.pop %v3935
      %v5223 = vtanh.pop %v3937
      %v5224 = vtanh.pop %v4321
      %v5225 = vtanh.pop %v4323
      %v5226 = vtanh.pop %v4707
      %v5227 = vtanh.pop %v4709
      %v5228 = vtanh.pop %v5044
      %v5229 = vtanh.pop %v3941
      %v5230 = vtanh.pop %v3943
      %v5231 = vtanh.pop %v4327
      %v5232 = vtanh.pop %v4329
      %v5233 = vtanh.pop %v4713
      %v5234 = vtanh.pop %v4715
      %v5235 = vtanh.pop %v5049
      %v5236 = vtanh.pop %v3945
      %v5237 = vtanh.pop %v3947
      %v5238 = vtanh.pop %v4331
      %v5239 = vtanh.pop %v4333
      %v5240 = vtanh.pop %v4717
      %v5241 = vtanh.pop %v4719
      %v5242 = vtanh.pop %v5052
      %v5243 = vtanh.pop %v3951
      %v5244 = vtanh.pop %v3953
      %v5245 = vtanh.pop %v4337
      %v5246 = vtanh.pop %v4339
      %v5247 = vtanh.pop %v4723
      %v5248 = vtanh.pop %v4725
      %v5249 = vtanh.pop %v5057
      %v5250 = vtanh.pop %v3955
      %v5251 = vtanh.pop %v3957
      %v5252 = vtanh.pop %v4341
      %v5253 = vtanh.pop %v4343
      %v5254 = vtanh.pop %v4727
      %v5255 = vtanh.pop %v4729
      %v5256 = vtanh.pop %v5060
      %v5257 = vtanh.pop %v3961
      %v5258 = vtanh.pop %v3963
      %v5259 = vtanh.pop %v4347
      %v5260 = vtanh.pop %v4349
      %v5261 = vtanh.pop %v4733
      %v5262 = vtanh.pop %v4735
      %v5263 = vtanh.pop %v5065
      %v5264 = vtanh.pop %v3965
      %v5265 = vtanh.pop %v3967
      %v5266 = vtanh.pop %v4351
      %v5267 = vtanh.pop %v4353
      %v5268 = vtanh.pop %v4737
      %v5269 = vtanh.pop %v4739
      %v5270 = vtanh.pop %v5068
      %v5271 = vtanh.pop %v3971
      %v5272 = vtanh.pop %v3973
      %v5273 = vtanh.pop %v4357
      %v5274 = vtanh.pop %v4359
      %v5275 = vtanh.pop %v4743
      %v5276 = vtanh.pop %v4745
      %v5277 = vtanh.pop %v5073
      %v5278 = vtanh.pop %v3975
      %v5279 = vtanh.pop %v3977
      %v5280 = vtanh.pop %v4361
      %v5281 = vtanh.pop %v4363
      %v5282 = vtanh.pop %v4747
      %v5283 = vtanh.pop %v4749
      %v5284 = vtanh.pop %v5076
      %v5285 = vtanh.pop %v3981
      %v5286 = vtanh.pop %v3983
      %v5287 = vtanh.pop %v4367
      %v5288 = vtanh.pop %v4369
      %v5289 = vtanh.pop %v4753
      %v5290 = vtanh.pop %v4755
      %v5291 = vtanh.pop %v5081
      %v5292 = vtanh.pop %v3985
      %v5293 = vtanh.pop %v3987
      %v5294 = vtanh.pop %v4371
      %v5295 = vtanh.pop %v4373
      %v5296 = vtanh.pop %v4757
      %v5297 = vtanh.pop %v4759
      %v5298 = vtanh.pop %v5084
      %v5299 = vtanh.pop %v3991
      %v5300 = vtanh.pop %v3993
      %v5301 = vtanh.pop %v4377
      %v5302 = vtanh.pop %v4379
      %v5303 = vtanh.pop %v4763
      %v5304 = vtanh.pop %v4765
      %v5305 = vtanh.pop %v5089
      %v5306 = vtanh.pop %v3995
      %v5307 = vtanh.pop %v3997
      %v5308 = vtanh.pop %v4381
      %v5309 = vtanh.pop %v4383
      %v5310 = vtanh.pop %v4767
      %v5311 = vtanh.pop %v4769
      %v5312 = vtanh.pop %v5092
      %v5313 = vtanh.pop %v4001
      %v5314 = vtanh.pop %v4003
      %v5315 = vtanh.pop %v4387
      %v5316 = vtanh.pop %v4389
      %v5317 = vtanh.pop %v4773
      %v5318 = vtanh.pop %v4775
      %v5319 = vtanh.pop %v5097
      %v5320 = vtanh.pop %v4005
      %v5321 = vtanh.pop %v4007
      %v5322 = vtanh.pop %v4391
      %v5323 = vtanh.pop %v4393
      %v5324 = vtanh.pop %v4777
      %v5325 = vtanh.pop %v4779
      %v5326 = vtanh.pop %v5100
      %5327 = vst [vmem:[%s282] sm:$0xff] %v5103
      %5328 = vst [vmem:[%s282 + $0x8] sm:$0xff] %v5104
      %5329 = vst [vmem:[%s282 + $0x10] sm:$0xff] %v5105
      %5330 = vst [vmem:[%s282 + $0x18] sm:$0xff] %v5106
      %5331 = vst [vmem:[%s282 + $0x20] sm:$0xff] %v5107
      %5332 = vst [vmem:[%s282 + $0x28] sm:$0xff] %v5108
      %5333 = vst [vmem:[%s282 + $0x30] sm:$0xff] %v5109
      %5334 = vst [vmem:[%s282 + $0x38] sm:$0xff] %v5110
      %5335 = vst [vmem:[%s282 + $0x40] sm:$0xff] %v5111
      %5336 = vst [vmem:[%s282 + $0x48] sm:$0xff] %v5112
      %5337 = vst [vmem:[%s282 + $0x50] sm:$0xff] %v5113
      %5338 = vst [vmem:[%s282 + $0x58] sm:$0xff] %v5114
      %5339 = vst [vmem:[%s282 + $0x60] sm:$0xff] %v5115
      %5340 = vst [vmem:[%s282 + $0x68] sm:$0xff] %v5116
      %5341 = vst [vmem:[%s282 + $0x70] sm:$0xff] %v5117
      %5342 = vst [vmem:[%s282 + $0x78] sm:$0xff] %v5118
      %5343 = vst [vmem:[%s282 + $0x80] sm:$0xff] %v5119
      %5344 = vst [vmem:[%s282 + $0x88] sm:$0xff] %v5120
      %5345 = vst [vmem:[%s282 + $0x90] sm:$0xff] %v5121
      %5346 = vst [vmem:[%s282 + $0x98] sm:$0xff] %v5122
      %5347 = vst [vmem:[%s282 + $0xa0] sm:$0xff] %v5123
      %5348 = vst [vmem:[%s282 + $0xa8] sm:$0xff] %v5124
      %5349 = vst [vmem:[%s282 + $0xb0] sm:$0xff] %v5125
      %5350 = vst [vmem:[%s282 + $0xb8] sm:$0xff] %v5126
      %5351 = vst [vmem:[%s282 + $0xc0] sm:$0xff] %v5127
      %5352 = vst [vmem:[%s282 + $0xc8] sm:$0xff] %v5128
      %5353 = vst [vmem:[%s282 + $0xd0] sm:$0xff] %v5129
      %5354 = vst [vmem:[%s282 + $0xd8] sm:$0xff] %v5130
      %5355 = vst [vmem:[%s282 + $0xe0] sm:$0xff] %v5131
      %5356 = vst [vmem:[%s282 + $0xe8] sm:$0xff] %v5132
      %5357 = vst [vmem:[%s282 + $0xf0] sm:$0xff] %v5133
      %5358 = vst [vmem:[%s282 + $0xf8] sm:$0xff] %v5134
      %5359 = vst [vmem:[%s282 + $0x100] sm:$0xff] %v5135
      %5360 = vst [vmem:[%s282 + $0x108] sm:$0xff] %v5136
      %5361 = vst [vmem:[%s282 + $0x110] sm:$0xff] %v5137
      %5362 = vst [vmem:[%s282 + $0x118] sm:$0xff] %v5138
      %5363 = vst [vmem:[%s282 + $0x120] sm:$0xff] %v5139
      %5364 = vst [vmem:[%s282 + $0x128] sm:$0xff] %v5140
      %5365 = vst [vmem:[%s282 + $0x130] sm:$0xff] %v5141
      %5366 = vst [vmem:[%s282 + $0x138] sm:$0xff] %v5142
      %5367 = vst [vmem:[%s282 + $0x140] sm:$0xff] %v5143
      %5368 = vst [vmem:[%s282 + $0x148] sm:$0xff] %v5144
      %5369 = vst [vmem:[%s282 + $0x150] sm:$0xff] %v5145
      %5370 = vst [vmem:[%s282 + $0x158] sm:$0xff] %v5146
      %5371 = vst [vmem:[%s282 + $0x160] sm:$0xff] %v5147
      %5372 = vst [vmem:[%s282 + $0x168] sm:$0xff] %v5148
      %5373 = vst [vmem:[%s282 + $0x170] sm:$0xff] %v5149
      %5374 = vst [vmem:[%s282 + $0x178] sm:$0xff] %v5150
      %5375 = vst [vmem:[%s282 + $0x180] sm:$0xff] %v5151
      %5376 = vst [vmem:[%s282 + $0x188] sm:$0xff] %v5152
      %5377 = vst [vmem:[%s282 + $0x190] sm:$0xff] %v5153
      %5378 = vst [vmem:[%s282 + $0x198] sm:$0xff] %v5154
      %5379 = vst [vmem:[%s282 + $0x1a0] sm:$0xff] %v5155
      %5380 = vst [vmem:[%s282 + $0x1a8] sm:$0xff] %v5156
      %5381 = vst [vmem:[%s282 + $0x1b0] sm:$0xff] %v5157
      %5382 = vst [vmem:[%s282 + $0x1b8] sm:$0xff] %v5158
      %5383 = vst [vmem:[%s282 + $0x1c0] sm:$0xff] %v5159
      %5384 = vst [vmem:[%s282 + $0x1c8] sm:$0xff] %v5160
      %5385 = vst [vmem:[%s282 + $0x1d0] sm:$0xff] %v5161
      %5386 = vst [vmem:[%s282 + $0x1d8] sm:$0xff] %v5162
      %5387 = vst [vmem:[%s282 + $0x1e0] sm:$0xff] %v5163
      %5388 = vst [vmem:[%s282 + $0x1e8] sm:$0xff] %v5164
      %5389 = vst [vmem:[%s282 + $0x1f0] sm:$0xff] %v5165
      %5390 = vst [vmem:[%s282 + $0x1f8] sm:$0xff] %v5166
      %5391 = vst [vmem:[%s282 + $0x200] sm:$0xff] %v5167
      %5392 = vst [vmem:[%s282 + $0x208] sm:$0xff] %v5168
      %5393 = vst [vmem:[%s282 + $0x210] sm:$0xff] %v5169
      %5394 = vst [vmem:[%s282 + $0x218] sm:$0xff] %v5170
      %5395 = vst [vmem:[%s282 + $0x220] sm:$0xff] %v5171
      %5396 = vst [vmem:[%s282 + $0x228] sm:$0xff] %v5172
      %5397 = vst [vmem:[%s282 + $0x230] sm:$0xff] %v5173
      %5398 = vst [vmem:[%s282 + $0x238] sm:$0xff] %v5174
      %5399 = vst [vmem:[%s282 + $0x240] sm:$0xff] %v5175
      %5400 = vst [vmem:[%s282 + $0x248] sm:$0xff] %v5176
      %5401 = vst [vmem:[%s282 + $0x250] sm:$0xff] %v5177
      %5402 = vst [vmem:[%s282 + $0x258] sm:$0xff] %v5178
      %5403 = vst [vmem:[%s282 + $0x260] sm:$0xff] %v5179
      %5404 = vst [vmem:[%s282 + $0x268] sm:$0xff] %v5180
      %5405 = vst [vmem:[%s282 + $0x270] sm:$0xff] %v5181
      %5406 = vst [vmem:[%s282 + $0x278] sm:$0xff] %v5182
      %5407 = vst [vmem:[%s282 + $0x280] sm:$0xff] %v5183
      %5408 = vst [vmem:[%s282 + $0x288] sm:$0xff] %v5184
      %5409 = vst [vmem:[%s282 + $0x290] sm:$0xff] %v5185
      %5410 = vst [vmem:[%s282 + $0x298] sm:$0xff] %v5186
      %5411 = vst [vmem:[%s282 + $0x2a0] sm:$0xff] %v5187
      %5412 = vst [vmem:[%s282 + $0x2a8] sm:$0xff] %v5188
      %5413 = vst [vmem:[%s282 + $0x2b0] sm:$0xff] %v5189
      %5414 = vst [vmem:[%s282 + $0x2b8] sm:$0xff] %v5190
      %5415 = vst [vmem:[%s282 + $0x2c0] sm:$0xff] %v5191
      %5416 = vst [vmem:[%s282 + $0x2c8] sm:$0xff] %v5192
      %5417 = vst [vmem:[%s282 + $0x2d0] sm:$0xff] %v5193
      %5418 = vst [vmem:[%s282 + $0x2d8] sm:$0xff] %v5194
      %5419 = vst [vmem:[%s282 + $0x2e0] sm:$0xff] %v5195
      %5420 = vst [vmem:[%s282 + $0x2e8] sm:$0xff] %v5196
      %5421 = vst [vmem:[%s282 + $0x2f0] sm:$0xff] %v5197
      %5422 = vst [vmem:[%s282 + $0x2f8] sm:$0xff] %v5198
      %5423 = vst [vmem:[%s282 + $0x300] sm:$0xff] %v5199
      %5424 = vst [vmem:[%s282 + $0x308] sm:$0xff] %v5200
      %5425 = vst [vmem:[%s282 + $0x310] sm:$0xff] %v5201
      %5426 = vst [vmem:[%s282 + $0x318] sm:$0xff] %v5202
      %5427 = vst [vmem:[%s282 + $0x320] sm:$0xff] %v5203
      %5428 = vst [vmem:[%s282 + $0x328] sm:$0xff] %v5204
      %5429 = vst [vmem:[%s282 + $0x330] sm:$0xff] %v5205
      %5430 = vst [vmem:[%s282 + $0x338] sm:$0xff] %v5206
      %5431 = vst [vmem:[%s282 + $0x340] sm:$0xff] %v5207
      %5432 = vst [vmem:[%s282 + $0x348] sm:$0xff] %v5208
      %5433 = vst [vmem:[%s282 + $0x350] sm:$0xff] %v5209
      %5434 = vst [vmem:[%s282 + $0x358] sm:$0xff] %v5210
      %5435 = vst [vmem:[%s282 + $0x360] sm:$0xff] %v5211
      %5436 = vst [vmem:[%s282 + $0x368] sm:$0xff] %v5212
      %5437 = vst [vmem:[%s282 + $0x370] sm:$0xff] %v5213
      %5438 = vst [vmem:[%s282 + $0x378] sm:$0xff] %v5214
      %5439 = vst [vmem:[%s282 + $0x380] sm:$0xff] %v5215
      %5440 = vst [vmem:[%s282 + $0x388] sm:$0xff] %v5216
      %5441 = vst [vmem:[%s282 + $0x390] sm:$0xff] %v5217
      %5442 = vst [vmem:[%s282 + $0x398] sm:$0xff] %v5218
      %5443 = vst [vmem:[%s282 + $0x3a0] sm:$0xff] %v5219
      %5444 = vst [vmem:[%s282 + $0x3a8] sm:$0xff] %v5220
      %5445 = vst [vmem:[%s282 + $0x3b0] sm:$0xff] %v5221
      %5446 = vst [vmem:[%s282 + $0x3b8] sm:$0xff] %v5222
      %5447 = vst [vmem:[%s282 + $0x3c0] sm:$0xff] %v5223
      %5448 = vst [vmem:[%s282 + $0x3c8] sm:$0xff] %v5224
      %5449 = vst [vmem:[%s282 + $0x3d0] sm:$0xff] %v5225
      %5450 = vst [vmem:[%s282 + $0x3d8] sm:$0xff] %v5226
      %5451 = vst [vmem:[%s282 + $0x3e0] sm:$0xff] %v5227
      %5452 = vst [vmem:[%s282 + $0x3e8] sm:$0xff] %v5228
      %5453 = vst [vmem:[%s282 + $0x3f0] sm:$0xff] %v5229
      %5454 = vst [vmem:[%s282 + $0x3f8] sm:$0xff] %v5230
      %5455 = vst [vmem:[%s282 + $0x400] sm:$0xff] %v5231
      %5456 = vst [vmem:[%s282 + $0x408] sm:$0xff] %v5232
      %5457 = vst [vmem:[%s282 + $0x410] sm:$0xff] %v5233
      %5458 = vst [vmem:[%s282 + $0x418] sm:$0xff] %v5234
      %5459 = vst [vmem:[%s282 + $0x420] sm:$0xff] %v5235
      %5460 = vst [vmem:[%s282 + $0x428] sm:$0xff] %v5236
      %5461 = vst [vmem:[%s282 + $0x430] sm:$0xff] %v5237
      %5462 = vst [vmem:[%s282 + $0x438] sm:$0xff] %v5238
      %5463 = vst [vmem:[%s282 + $0x440] sm:$0xff] %v5239
      %5464 = vst [vmem:[%s282 + $0x448] sm:$0xff] %v5240
      %5465 = vst [vmem:[%s282 + $0x450] sm:$0xff] %v5241
      %5466 = vst [vmem:[%s282 + $0x458] sm:$0xff] %v5242
      %5467 = vst [vmem:[%s282 + $0x460] sm:$0xff] %v5243
      %5468 = vst [vmem:[%s282 + $0x468] sm:$0xff] %v5244
      %5469 = vst [vmem:[%s282 + $0x470] sm:$0xff] %v5245
      %5470 = vst [vmem:[%s282 + $0x478] sm:$0xff] %v5246
      %5471 = vst [vmem:[%s282 + $0x480] sm:$0xff] %v5247
      %5472 = vst [vmem:[%s282 + $0x488] sm:$0xff] %v5248
      %5473 = vst [vmem:[%s282 + $0x490] sm:$0xff] %v5249
      %5474 = vst [vmem:[%s282 + $0x498] sm:$0xff] %v5250
      %5475 = vst [vmem:[%s282 + $0x4a0] sm:$0xff] %v5251
      %5476 = vst [vmem:[%s282 + $0x4a8] sm:$0xff] %v5252
      %5477 = vst [vmem:[%s282 + $0x4b0] sm:$0xff] %v5253
      %5478 = vst [vmem:[%s282 + $0x4b8] sm:$0xff] %v5254
      %5479 = vst [vmem:[%s282 + $0x4c0] sm:$0xff] %v5255
      %5480 = vst [vmem:[%s282 + $0x4c8] sm:$0xff] %v5256
      %5481 = vst [vmem:[%s282 + $0x4d0] sm:$0xff] %v5257
      %5482 = vst [vmem:[%s282 + $0x4d8] sm:$0xff] %v5258
      %5483 = vst [vmem:[%s282 + $0x4e0] sm:$0xff] %v5259
      %5484 = vst [vmem:[%s282 + $0x4e8] sm:$0xff] %v5260
      %5485 = vst [vmem:[%s282 + $0x4f0] sm:$0xff] %v5261
      %5486 = vst [vmem:[%s282 + $0x4f8] sm:$0xff] %v5262
      %5487 = vst [vmem:[%s282 + $0x500] sm:$0xff] %v5263
      %5488 = vst [vmem:[%s282 + $0x508] sm:$0xff] %v5264
      %5489 = vst [vmem:[%s282 + $0x510] sm:$0xff] %v5265
      %5490 = vst [vmem:[%s282 + $0x518] sm:$0xff] %v5266
      %5491 = vst [vmem:[%s282 + $0x520] sm:$0xff] %v5267
      %5492 = vst [vmem:[%s282 + $0x528] sm:$0xff] %v5268
      %5493 = vst [vmem:[%s282 + $0x530] sm:$0xff] %v5269
      %5494 = vst [vmem:[%s282 + $0x538] sm:$0xff] %v5270
      %5495 = vst [vmem:[%s282 + $0x540] sm:$0xff] %v5271
      %5496 = vst [vmem:[%s282 + $0x548] sm:$0xff] %v5272
      %5497 = vst [vmem:[%s282 + $0x550] sm:$0xff] %v5273
      %5498 = vst [vmem:[%s282 + $0x558] sm:$0xff] %v5274
      %5499 = vst [vmem:[%s282 + $0x560] sm:$0xff] %v5275
      %5500 = vst [vmem:[%s282 + $0x568] sm:$0xff] %v5276
      %5501 = vst [vmem:[%s282 + $0x570] sm:$0xff] %v5277
      %5502 = vst [vmem:[%s282 + $0x578] sm:$0xff] %v5278
      %5503 = vst [vmem:[%s282 + $0x580] sm:$0xff] %v5279
      %5504 = vst [vmem:[%s282 + $0x588] sm:$0xff] %v5280
      %5505 = vst [vmem:[%s282 + $0x590] sm:$0xff] %v5281
      %5506 = vst [vmem:[%s282 + $0x598] sm:$0xff] %v5282
      %5507 = vst [vmem:[%s282 + $0x5a0] sm:$0xff] %v5283
      %5508 = vst [vmem:[%s282 + $0x5a8] sm:$0xff] %v5284
      %5509 = vst [vmem:[%s282 + $0x5b0] sm:$0xff] %v5285
      %5510 = vst [vmem:[%s282 + $0x5b8] sm:$0xff] %v5286
      %5511 = vst [vmem:[%s282 + $0x5c0] sm:$0xff] %v5287
      %5512 = vst [vmem:[%s282 + $0x5c8] sm:$0xff] %v5288
      %5513 = vst [vmem:[%s282 + $0x5d0] sm:$0xff] %v5289
      %5514 = vst [vmem:[%s282 + $0x5d8] sm:$0xff] %v5290
      %5515 = vst [vmem:[%s282 + $0x5e0] sm:$0xff] %v5291
      %5516 = vst [vmem:[%s282 + $0x5e8] sm:$0xff] %v5292
      %5517 = vst [vmem:[%s282 + $0x5f0] sm:$0xff] %v5293
      %5518 = vst [vmem:[%s282 + $0x5f8] sm:$0xff] %v5294
      %5519 = vst [vmem:[%s282 + $0x600] sm:$0xff] %v5295
      %5520 = vst [vmem:[%s282 + $0x608] sm:$0xff] %v5296
      %5521 = vst [vmem:[%s282 + $0x610] sm:$0xff] %v5297
      %5522 = vst [vmem:[%s282 + $0x618] sm:$0xff] %v5298
      %5523 = vst [vmem:[%s282 + $0x620] sm:$0xff] %v5299
      %5524 = vst [vmem:[%s282 + $0x628] sm:$0xff] %v5300
      %5525 = vst [vmem:[%s282 + $0x630] sm:$0xff] %v5301
      %5526 = vst [vmem:[%s282 + $0x638] sm:$0xff] %v5302
      %5527 = vst [vmem:[%s282 + $0x640] sm:$0xff] %v5303
      %5528 = vst [vmem:[%s282 + $0x648] sm:$0xff] %v5304
      %5529 = vst [vmem:[%s282 + $0x650] sm:$0xff] %v5305
      %5530 = vst [vmem:[%s282 + $0x658] sm:$0xff] %v5306
      %5531 = vst [vmem:[%s282 + $0x660] sm:$0xff] %v5307
      %5532 = vst [vmem:[%s282 + $0x668] sm:$0xff] %v5308
      %5533 = vst [vmem:[%s282 + $0x670] sm:$0xff] %v5309
      %5534 = vst [vmem:[%s282 + $0x678] sm:$0xff] %v5310
      %5535 = vst [vmem:[%s282 + $0x680] sm:$0xff] %v5311
      %5536 = vst [vmem:[%s282 + $0x688] sm:$0xff] %v5312
      %5537 = vst [vmem:[%s282 + $0x690] sm:$0xff] %v5313
      %5538 = vst [vmem:[%s282 + $0x698] sm:$0xff] %v5314
      %5539 = vst [vmem:[%s282 + $0x6a0] sm:$0xff] %v5315
      %5540 = vst [vmem:[%s282 + $0x6a8] sm:$0xff] %v5316
      %5541 = vst [vmem:[%s282 + $0x6b0] sm:$0xff] %v5317
      %5542 = vst [vmem:[%s282 + $0x6b8] sm:$0xff] %v5318
      %5543 = vst [vmem:[%s282 + $0x6c0] sm:$0xff] %v5319
      %5544 = vst [vmem:[%s282 + $0x6c8] sm:$0xff] %v5320
      %5545 = vst [vmem:[%s282 + $0x6d0] sm:$0xff] %v5321
      %5546 = vst [vmem:[%s282 + $0x6d8] sm:$0xff] %v5322
      %5547 = vst [vmem:[%s282 + $0x6e0] sm:$0xff] %v5323
      %5548 = vst [vmem:[%s282 + $0x6e8] sm:$0xff] %v5324
      %5549 = vst [vmem:[%s282 + $0x6f0] sm:$0xff] %v5325
      %5550 = vst [vmem:[%s282 + $0x6f8] sm:$0xff] %v5326
      %s5551 = smul.u32 32, %s18
      %p5552 = scmp.lt.s32.totalorder %s5551, 63
      %s5553 = scalar_select %p5552, %s5551, 63
      %s5554 = smul.addr %s5553, 7
      %s5555 = smul.addr %s5554, 8
      %s5556 = scalar_lea.vmem %s7, %s5555
      // Predicated region
      $region49: #{generator_forward.1} parent=47 // pred_check
        %p5557 = pneg %p188
      $region50: #{generator_forward.1} parent=47 // pred_check_branch
        %5559 = sbr.rel (%p5557) target = $region52
      $region51: #{generator_forward.1} parent=47 // pred_region
        %s5560 = smul.u32 32, %s18
      $region52: #{generator_forward.1} parent=47 // pred_fallthru
        _
    $region48: #{generator_forward.1} parent=5 // pred_fallthru
      _
    %p5561 = scmp.le.s32.totalorder 2, %s13
    // Predicated region
    $region53: #{generator_forward.1} parent=5 // pred_check
      %p5562 = pneg %p5561
    $region54: #{generator_forward.1} parent=5 // pred_check_branch
      %5564 = sbr.rel (%p5562) target = $region56
    $region55: #{generator_forward.1} parent=5 // pred_region
      %s5565 = ssub.s32 %s13, 2
      // Predicated region
      $region57: #{generator_forward.1} parent=55 // pred_check
        %p5566 = pneg %p194
      $region58: #{generator_forward.1} parent=55 // pred_check_branch
        %5568 = sbr.rel (%p5566) target = $region60
      $region59: #{generator_forward.1} parent=55 // pred_region
        %s5569 = smul.u32 32, %s19
        %p5570 = scmp.lt.s32.totalorder %s5569, 63
        %s5571 = scalar_select %p5570, %s5569, 63
        %s5572 = smul.addr %s5571, 7
        %s5573 = smul.addr %s5572, 8
        %s5574 = scalar_lea.vmem %s7, %s5573
      $region60: #{generator_forward.1} parent=55 // pred_fallthru
        _
    $region56: #{generator_forward.1} parent=5 // pred_fallthru
      _
  $region6: #{generator_forward.1} parent=0 // loop_footer
    %s17 = sadd.s32 1, %s13
  $region7: #{generator_forward.1} parent=0 // loop_footer_branch
    %12 = sbr.rel target = $region3
  $region8: #{generator_forward.1} parent=0 // loop_exit
    _

</llo_original>
